<compile_context>
chip_gen: v5e
topology: v5e:2x2
jax: 0.10.0
libtpu: 0.0.40
codegen_flags: <defaults>
</compile_context>

<pallas_src>
import functools

import jax
import jax.numpy as jnp
from jax import lax
from jax.experimental import pallas as pl
from jax.experimental.pallas import tpu as pltpu

UPSCALE = 4


def _fsrcnn_kernel(x_ref, mask_ref,
                   wf_ref, bf_ref, af_ref,
                   ws_ref, bs_ref, as_ref,
                   wm_ref, bm_ref, am_ref,
                   we_ref, be_ref, ae_ref,
                   wd_ref, bd_ref,
                   o_ref,
                   c12_ref, c56_ref,
                   *, H, W):
    """Fused FSRCNN forward for one batch element.

    Activation layout ("canvas"): channels on sublanes, flattened padded
    spatial (row-major, padded width Wc = W + 4, 3 guard/pad rows top and
    bottom) on lanes.  Every conv is a single (Cout, k*k*Cin) @ (k*k*Cin, Nc)
    MXU matmul over a tap-concatenated im2col slab built from contiguous
    lane-shifted slices of the canvas.
    """
    Wc = W + 4
    Lc = (H + 6) * Wc
    Nc = H * Wc              # compute columns: all padded columns of all image rows
    c0 = 3 * Wc              # flat index of the first image row

    mask = mask_ref[...]     # (1, Nc) f32: 1 on real pixels, 0 on pad columns

    # Zero only the halo rows (guard + vertical pad) of the internal canvases.
    # Interior rows are fully overwritten each layer; horizontal pad columns
    # are re-zeroed via `mask` at every canvas write.
    c12_ref[:, 0:c0] = jnp.zeros((12, c0), jnp.bfloat16)
    c12_ref[:, Lc - c0:Lc] = jnp.zeros((12, c0), jnp.bfloat16)
    c56_ref[:, 0:c0] = jnp.zeros((56, c0), jnp.bfloat16)
    c56_ref[:, Lc - c0:Lc] = jnp.zeros((56, c0), jnp.bfloat16)

    def im2col(src_ref, k, pad):
        # (k*k*Cin, Nc) slab; rows ordered tap-major / channel-minor to match
        # the packed weights.  Each piece is a contiguous lane-slice of the
        # flat canvas (pure lane shifts, no strided gathers / relayouts).
        pieces = []
        for p in range(k):
            for q in range(k):
                off = c0 + (p - pad) * Wc + (q - pad)
                pieces.append(src_ref[:, off:off + Nc])
        return jnp.concatenate(pieces, axis=0)

    def prelu(v, b, a):
        v = v + b
        return jnp.where(v > 0, v, a * v)

    # ---- feature_extraction: Conv 3->56, 5x5, pad 2 + PReLU(56) --------------
    feat = prelu(jnp.dot(wf_ref[...], im2col(x_ref, 5, 2),
                         preferred_element_type=jnp.float32),
                 bf_ref[...], af_ref[...])

    # ---- shrink: Conv 56->12, 1x1 + PReLU(12); masked, parked bf16 -----------
    shr = prelu(jnp.dot(ws_ref[...], feat.astype(jnp.bfloat16),
                        preferred_element_type=jnp.float32),
                bs_ref[...], as_ref[...])
    c12_ref[:, c0:c0 + Nc] = (shr * mask).astype(jnp.bfloat16)

    # ---- map: 4 x (Conv 12->12, 3x3, pad 1 + PReLU(12)) ----------------------
    m = None
    for i in range(4):
        m = prelu(jnp.dot(wm_ref[i], im2col(c12_ref, 3, 1),
                          preferred_element_type=jnp.float32),
                  bm_ref[i], am_ref[i])
        if i < 3:
            c12_ref[:, c0:c0 + Nc] = (m * mask).astype(jnp.bfloat16)

    # ---- expand: Conv 12->56, 1x1 + PReLU(56); masked, parked bf16 -----------
    exp_ = prelu(jnp.dot(we_ref[...], m.astype(jnp.bfloat16),
                         preferred_element_type=jnp.float32),
                 be_ref[...], ae_ref[...])
    c56_ref[:, c0:c0 + Nc] = (exp_ * mask).astype(jnp.bfloat16)

    # ---- deconv: ConvTranspose2d(56->3, 9x9, s=4, p=4, op=3) -----------------
    # 16 sub-pixel phases == 3x3 taps over the pad-1 expand output, packed as
    # one fused (48, 504) @ (504, Nc) matmul.
    # TODO(synk): ~44% of the packed deconv weights are structurally zero;
    # split phases by tap count only if this layer becomes the MXU hot spot.
    o_ref[...] = (jnp.dot(wd_ref[...], im2col(c56_ref, 3, 1),
                          preferred_element_type=jnp.float32)
                  + bd_ref[...])


# ----------------------------- weight packing --------------------------------

def _pack_conv(w):
    """(Cout, Cin, k, k) PyTorch conv weight -> (Cout, k*k*Cin) bf16 (tap-major)."""
    co, ci, k, _ = w.shape
    return w.transpose(0, 2, 3, 1).reshape(co, k * k * ci).astype(jnp.bfloat16)


def _pack_deconv(w_pt):
    """ConvTranspose2d(56,3,9,9; s=4,p=4,op=3) weight -> (48, 9*56) phase form.

    Row r = (ry*4 + rx)*3 + co, column (p*3 + q)*56 + ci holds
    w_pt[ci, co, ry + 8 - 4p, rx + 8 - 4q] (zero when the index exceeds 8)."""
    s = UPSCALE
    wd = jnp.zeros((3 * s * s, 9 * 56), jnp.float32)
    for p in range(3):
        for q in range(3):
            for ry in range(s):
                ky = ry + 8 - s * p
                if not (0 <= ky <= 8):
                    continue
                for rx in range(s):
                    kx = rx + 8 - s * q
                    if not (0 <= kx <= 8):
                        continue
                    r0 = (ry * s + rx) * 3
                    col0 = (p * 3 + q) * 56
                    wd = wd.at[r0:r0 + 3, col0:col0 + 56].set(w_pt[:, :, ky, kx].T)
    return wd.astype(jnp.bfloat16)


def init_params(key):
    """Synthetic parameters matching FSRCNN._initialize_weights statistics
    (raw PyTorch layouts; used by the pure-JAX reference)."""
    ks = jax.random.split(key, 8)

    def conv_w(k, cout, cin, kk):
        std = (2.0 / (cout * kk * kk)) ** 0.5
        return std * jax.random.normal(k, (cout, cin, kk, kk), jnp.float32)

    return {
        'w_feat': conv_w(ks[0], 56, 3, 5),
        'b_feat': jnp.zeros((56,), jnp.float32),
        'a_feat': jnp.full((56,), 0.25, jnp.float32),
        'w_shrink': conv_w(ks[1], 12, 56, 1),
        'b_shrink': jnp.zeros((12,), jnp.float32),
        'a_shrink': jnp.full((12,), 0.25, jnp.float32),
        'w_map': jnp.stack([conv_w(ks[2 + i], 12, 12, 3) for i in range(4)]),
        'b_map': jnp.zeros((4, 12), jnp.float32),
        'a_map': jnp.full((4, 12), 0.25, jnp.float32),
        'w_expand': conv_w(ks[6], 56, 12, 1),
        'b_expand': jnp.zeros((56,), jnp.float32),
        'a_expand': jnp.full((56,), 0.25, jnp.float32),
        'w_deconv': 0.001 * jax.random.normal(ks[7], (56, 3, 9, 9), jnp.float32),
        'b_deconv': jnp.zeros((3,), jnp.float32),
    }


def prepare_params(p):
    """Pack raw PyTorch-layout weights into the kernel layouts (bf16 matmul
    operands, f32 biases / PReLU slopes shaped (Cout, 1))."""
    kp = {}
    kp['w_feat'] = _pack_conv(p['w_feat'])                         # (56, 75)
    kp['b_feat'] = p['b_feat'].reshape(56, 1)
    kp['a_feat'] = p['a_feat'].reshape(56, 1)
    kp['w_shrink'] = _pack_conv(p['w_shrink'])                     # (12, 56)
    kp['b_shrink'] = p['b_shrink'].reshape(12, 1)
    kp['a_shrink'] = p['a_shrink'].reshape(12, 1)
    kp['w_map'] = jnp.stack([_pack_conv(p['w_map'][i]) for i in range(4)])  # (4,12,108)
    kp['b_map'] = p['b_map'].reshape(4, 12, 1)
    kp['a_map'] = p['a_map'].reshape(4, 12, 1)
    kp['w_expand'] = _pack_conv(p['w_expand'])                     # (56, 12)
    kp['b_expand'] = p['b_expand'].reshape(56, 1)
    kp['a_expand'] = p['a_expand'].reshape(56, 1)
    kp['w_deconv'] = _pack_deconv(p['w_deconv'])                   # (48, 504)
    kp['b_deconv'] = jnp.tile(p['b_deconv'], UPSCALE * UPSCALE).reshape(48, 1)
    return kp


# ------------------------------- forward pass --------------------------------

def fsrcnn_forward(x_nchw, p):
    N, Cin, H, W = x_nchw.shape
    assert Cin == 3
    Wc = W + 4
    Lc = (H + 6) * Wc
    Nc = H * Wc

    # Flat "canvas" layout for the input: 1 guard + 2 pad rows top/bottom,
    # 2 pad columns left/right, flattened row-major (lane dim = H*Wc slabs).
    xc = jnp.pad(x_nchw.astype(jnp.float32), ((0, 0), (0, 0), (3, 3), (2, 2)))
    xc = xc.reshape(N, Cin, Lc).astype(jnp.bfloat16)

    # Column-validity mask over the compute region (1 on real pixels).
    col = jnp.arange(Nc, dtype=jnp.int32) % Wc
    mask = ((col >= 2) & (col < 2 + W)).astype(jnp.float32).reshape(1, Nc)

    weights = (p['w_feat'], p['b_feat'], p['a_feat'],
               p['w_shrink'], p['b_shrink'], p['a_shrink'],
               p['w_map'], p['b_map'], p['a_map'],
               p['w_expand'], p['b_expand'], p['a_expand'],
               p['w_deconv'], p['b_deconv'])

    def full(arr):
        nd = arr.ndim
        return pl.BlockSpec(arr.shape, lambda n, _nd=nd: (0,) * _nd)

    flops = 2 * N * Nc * (75 * 56 + 56 * 12 + 4 * 108 * 12 + 12 * 56 + 504 * 48)
    bytes_accessed = int(xc.size * 2 + mask.size * 4 + N * 48 * Nc * 4
                         + sum(int(w.size) * w.dtype.itemsize for w in weights))

    out48 = pl.pallas_call(
        functools.partial(_fsrcnn_kernel, H=H, W=W),
        out_shape=jax.ShapeDtypeStruct((N, 48, Nc), jnp.float32),
        grid=(N,),
        in_specs=[pl.BlockSpec((None, Cin, Lc), lambda n: (n, 0, 0)),
                  full(mask)] + [full(w) for w in weights],
        out_specs=pl.BlockSpec((None, 48, Nc), lambda n: (n, 0, 0)),
        scratch_shapes=[
            pltpu.VMEM((12, Lc), jnp.bfloat16),    # shrink/map canvas
            pltpu.VMEM((56, Lc), jnp.bfloat16),    # expand canvas
        ],
        compiler_params=pltpu.CompilerParams(
            dimension_semantics=("parallel",),
            vmem_limit_bytes=48 * 1024 * 1024),
        cost_estimate=pl.CostEstimate(flops=flops, transcendentals=0,
                                      bytes_accessed=bytes_accessed),
    )(xc, mask, *weights)

    # Depth-to-space: row (ry*4+rx)*3+co, column y*Wc+x' -> pixel (co, 4y+ry, 4x+rx).
    y = out48.reshape(N, UPSCALE, UPSCALE, 3, H, Wc)[:, :, :, :, :, 2:2 + W]
    y = jnp.transpose(y, (0, 3, 4, 1, 5, 2))        # (N, co, H, ry, W, rx)
    return y.reshape(N, 3, UPSCALE * H, UPSCALE * W)


# ------------------------------ pure-JAX reference ----------------------------

def _ref_forward(x, p):
    """XLA reference with matching bf16 matmul operands / f32 accumulation."""
    dn = ('NCHW', 'OIHW', 'NCHW')

    def conv(v, w, b, a, pad):
        out = lax.conv_general_dilated(
            v.astype(jnp.bfloat16), w.astype(jnp.bfloat16), (1, 1),
            ((pad, pad), (pad, pad)), dimension_numbers=dn,
            preferred_element_type=jnp.float32)
        out = out + b.reshape(1, -1, 1, 1)
        return jnp.where(out > 0, out, a.reshape(1, -1, 1, 1) * out)

    out = conv(x, p['w_feat'], p['b_feat'], p['a_feat'], 2)
    out = conv(out, p['w_shrink'], p['b_shrink'], p['a_shrink'], 0)
    for i in range(4):
        out = conv(out, p['w_map'][i], p['b_map'][i], p['a_map'][i], 1)
    out = conv(out, p['w_expand'], p['b_expand'], p['a_expand'], 0)

    # ConvTranspose2d(56,3,9, s=4, p=4, op=3) == conv on the 4x-dilated input
    # with flipped/transposed weights and (4, 7) edge pads.
    w_t = jnp.flip(p['w_deconv'], (2, 3)).transpose(1, 0, 2, 3)   # (3, 56, 9, 9)
    y = lax.conv_general_dilated(
        out.astype(jnp.bfloat16), w_t.astype(jnp.bfloat16), (1, 1),
        ((4, 7), (4, 7)), lhs_dilation=(UPSCALE, UPSCALE),
        dimension_numbers=dn, preferred_element_type=jnp.float32)
    return y + p['b_deconv'].reshape(1, 3, 1, 1)


if __name__ == "__main__":
    key = jax.random.PRNGKey(0)
    kparam, kx = jax.random.split(key)
    raw_params = init_params(kparam)
    params = prepare_params(raw_params)
    x = jax.random.normal(kx, (2, 3, 16, 16), jnp.float32)   # NCHW, like PyTorch

    y = jax.jit(fsrcnn_forward)(x, params)
    jax.block_until_ready(y)
    assert y.shape == (2, 3, 16 * UPSCALE, 16 * UPSCALE), y.shape

    # Numerical check against the bf16-matched pure-JAX reference.
    y_ref = jax.jit(_ref_forward)(x, raw_params)
    err = float(jnp.max(jnp.abs(y - y_ref)))
    scale = float(jnp.max(jnp.abs(y_ref)))
    assert err <= 2e-2 * scale + 1e-6, (err, scale)

    print("KERNEL_OK")
</pallas_src>

<mosaic_0001>
module attributes {stable_mosaic.version = 11 : i64} {
  func.func @_fsrcnn_kernel(%arg0: i32, %arg1: memref<1x3x440xbf16, #tpu.memory_space<vmem>>, %arg2: memref<1x320xf32, #tpu.memory_space<vmem>>, %arg3: memref<56x75xbf16, #tpu.memory_space<vmem>>, %arg4: memref<56x1xf32, #tpu.memory_space<vmem>>, %arg5: memref<56x1xf32, #tpu.memory_space<vmem>>, %arg6: memref<12x56xbf16, #tpu.memory_space<vmem>>, %arg7: memref<12x1xf32, #tpu.memory_space<vmem>>, %arg8: memref<12x1xf32, #tpu.memory_space<vmem>>, %arg9: memref<4x12x108xbf16, #tpu.memory_space<vmem>>, %arg10: memref<4x12x1xf32, #tpu.memory_space<vmem>>, %arg11: memref<4x12x1xf32, #tpu.memory_space<vmem>>, %arg12: memref<56x12xbf16, #tpu.memory_space<vmem>>, %arg13: memref<56x1xf32, #tpu.memory_space<vmem>>, %arg14: memref<56x1xf32, #tpu.memory_space<vmem>>, %arg15: memref<48x504xbf16, #tpu.memory_space<vmem>>, %arg16: memref<48x1xf32, #tpu.memory_space<vmem>>, %arg17: memref<1x48x320xf32, #tpu.memory_space<vmem>>, %arg18: memref<12x440xbf16, #tpu.memory_space<vmem>>, %arg19: memref<56x440xbf16, #tpu.memory_space<vmem>>) attributes {dimension_semantics = [#tpu.dimension_semantics<parallel>], iteration_bounds = array<i64: 2>, scalar_prefetch = 0 : i64, scratch_operands = 2 : i64, tpu.core_type = #tpu.core_type<tc>, window_params = [{transform_indices = @transform_0, window_bounds = array<i64: 1, 3, 440>}, {pipeline_mode = #tpu.pipeline_mode<synchronous>, transform_indices = @transform_1, window_bounds = array<i64: 1, 320>}, {pipeline_mode = #tpu.pipeline_mode<synchronous>, transform_indices = @transform_2, window_bounds = array<i64: 56, 75>}, {pipeline_mode = #tpu.pipeline_mode<synchronous>, transform_indices = @transform_3, window_bounds = array<i64: 56, 1>}, {pipeline_mode = #tpu.pipeline_mode<synchronous>, transform_indices = @transform_4, window_bounds = array<i64: 56, 1>}, {pipeline_mode = #tpu.pipeline_mode<synchronous>, transform_indices = @transform_5, window_bounds = array<i64: 12, 56>}, {pipeline_mode = #tpu.pipeline_mode<synchronous>, transform_indices = @transform_6, window_bounds = array<i64: 12, 1>}, {pipeline_mode = #tpu.pipeline_mode<synchronous>, transform_indices = @transform_7, window_bounds = array<i64: 12, 1>}, {pipeline_mode = #tpu.pipeline_mode<synchronous>, transform_indices = @transform_8, window_bounds = array<i64: 4, 12, 108>}, {pipeline_mode = #tpu.pipeline_mode<synchronous>, transform_indices = @transform_9, window_bounds = array<i64: 4, 12, 1>}, {pipeline_mode = #tpu.pipeline_mode<synchronous>, transform_indices = @transform_10, window_bounds = array<i64: 4, 12, 1>}, {pipeline_mode = #tpu.pipeline_mode<synchronous>, transform_indices = @transform_11, window_bounds = array<i64: 56, 12>}, {pipeline_mode = #tpu.pipeline_mode<synchronous>, transform_indices = @transform_12, window_bounds = array<i64: 56, 1>}, {pipeline_mode = #tpu.pipeline_mode<synchronous>, transform_indices = @transform_13, window_bounds = array<i64: 56, 1>}, {pipeline_mode = #tpu.pipeline_mode<synchronous>, transform_indices = @transform_14, window_bounds = array<i64: 48, 504>}, {pipeline_mode = #tpu.pipeline_mode<synchronous>, transform_indices = @transform_15, window_bounds = array<i64: 48, 1>}, {transform_indices = @transform_16, window_bounds = array<i64: 1, 48, 320>}]} {
    %c0 = arith.constant 0 : index
    %c0_0 = arith.constant 0 : index
    %0 = vector.load %arg2[%c0, %c0_0] : memref<1x320xf32, #tpu.memory_space<vmem>>, vector<1x320xf32>
    %cst = arith.constant 0.000000e+00 : bf16
    %1 = vector.broadcast %cst : bf16 to vector<12x60xbf16>
    %c0_1 = arith.constant 0 : index
    %c0_2 = arith.constant 0 : index
    %2 = vector.load %arg18[%c0_1, %c0_2] : memref<12x440xbf16, #tpu.memory_space<vmem>>, vector<12x60xbf16>
    tpu.vector_store %arg18[%c0_1, %c0_2], %1 {strides = array<i32>} : memref<12x440xbf16, #tpu.memory_space<vmem>>, vector<12x60xbf16>,
    %cst_3 = arith.constant 0.000000e+00 : bf16
    %3 = vector.broadcast %cst_3 : bf16 to vector<12x60xbf16>
    %c0_4 = arith.constant 0 : index
    %c380 = arith.constant 380 : index
    %4 = vector.load %arg18[%c0_4, %c380] : memref<12x440xbf16, #tpu.memory_space<vmem>>, vector<12x60xbf16>
    tpu.vector_store %arg18[%c0_4, %c380], %3 {strides = array<i32>} : memref<12x440xbf16, #tpu.memory_space<vmem>>, vector<12x60xbf16>,
    %cst_5 = arith.constant 0.000000e+00 : bf16
    %5 = vector.broadcast %cst_5 : bf16 to vector<56x60xbf16>
    %c0_6 = arith.constant 0 : index
    %c0_7 = arith.constant 0 : index
    %6 = vector.load %arg19[%c0_6, %c0_7] : memref<56x440xbf16, #tpu.memory_space<vmem>>, vector<56x60xbf16>
    tpu.vector_store %arg19[%c0_6, %c0_7], %5 {strides = array<i32>} : memref<56x440xbf16, #tpu.memory_space<vmem>>, vector<56x60xbf16>,
    %cst_8 = arith.constant 0.000000e+00 : bf16
    %7 = vector.broadcast %cst_8 : bf16 to vector<56x60xbf16>
    %c0_9 = arith.constant 0 : index
    %c380_10 = arith.constant 380 : index
    %8 = vector.load %arg19[%c0_9, %c380_10] : memref<56x440xbf16, #tpu.memory_space<vmem>>, vector<56x60xbf16>
    tpu.vector_store %arg19[%c0_9, %c380_10], %7 {strides = array<i32>} : memref<56x440xbf16, #tpu.memory_space<vmem>>, vector<56x60xbf16>,
    %c0_11 = arith.constant 0 : index
    %c0_12 = arith.constant 0 : index
    %9 = vector.load %arg3[%c0_11, %c0_12] : memref<56x75xbf16, #tpu.memory_space<vmem>>, vector<56x75xbf16>
    %c0_13 = arith.constant 0 : index
    %c0_14 = arith.constant 0 : index
    %c18 = arith.constant 18 : index
    %10 = vector.load %arg1[%c0_13, %c0_14, %c18] : memref<1x3x440xbf16, #tpu.memory_space<vmem>>, vector<1x3x320xbf16>
    %11 = vector.shape_cast %10 : vector<1x3x320xbf16> to vector<3x320xbf16>
    %c0_15 = arith.constant 0 : index
    %c0_16 = arith.constant 0 : index
    %c19 = arith.constant 19 : index
    %12 = vector.load %arg1[%c0_15, %c0_16, %c19] : memref<1x3x440xbf16, #tpu.memory_space<vmem>>, vector<1x3x320xbf16>
    %13 = vector.shape_cast %12 : vector<1x3x320xbf16> to vector<3x320xbf16>
    %c0_17 = arith.constant 0 : index
    %c0_18 = arith.constant 0 : index
    %c20 = arith.constant 20 : index
    %14 = vector.load %arg1[%c0_17, %c0_18, %c20] : memref<1x3x440xbf16, #tpu.memory_space<vmem>>, vector<1x3x320xbf16>
    %15 = vector.shape_cast %14 : vector<1x3x320xbf16> to vector<3x320xbf16>
    %c0_19 = arith.constant 0 : index
    %c0_20 = arith.constant 0 : index
    %c21 = arith.constant 21 : index
    %16 = vector.load %arg1[%c0_19, %c0_20, %c21] : memref<1x3x440xbf16, #tpu.memory_space<vmem>>, vector<1x3x320xbf16>
    %17 = vector.shape_cast %16 : vector<1x3x320xbf16> to vector<3x320xbf16>
    %c0_21 = arith.constant 0 : index
    %c0_22 = arith.constant 0 : index
    %c22 = arith.constant 22 : index
    %18 = vector.load %arg1[%c0_21, %c0_22, %c22] : memref<1x3x440xbf16, #tpu.memory_space<vmem>>, vector<1x3x320xbf16>
    %19 = vector.shape_cast %18 : vector<1x3x320xbf16> to vector<3x320xbf16>
    %c0_23 = arith.constant 0 : index
    %c0_24 = arith.constant 0 : index
    %c38 = arith.constant 38 : index
    %20 = vector.load %arg1[%c0_23, %c0_24, %c38] : memref<1x3x440xbf16, #tpu.memory_space<vmem>>, vector<1x3x320xbf16>
    %21 = vector.shape_cast %20 : vector<1x3x320xbf16> to vector<3x320xbf16>
    %c0_25 = arith.constant 0 : index
    %c0_26 = arith.constant 0 : index
    %c39 = arith.constant 39 : index
    %22 = vector.load %arg1[%c0_25, %c0_26, %c39] : memref<1x3x440xbf16, #tpu.memory_space<vmem>>, vector<1x3x320xbf16>
    %23 = vector.shape_cast %22 : vector<1x3x320xbf16> to vector<3x320xbf16>
    %c0_27 = arith.constant 0 : index
    %c0_28 = arith.constant 0 : index
    %c40 = arith.constant 40 : index
    %24 = vector.load %arg1[%c0_27, %c0_28, %c40] : memref<1x3x440xbf16, #tpu.memory_space<vmem>>, vector<1x3x320xbf16>
    %25 = vector.shape_cast %24 : vector<1x3x320xbf16> to vector<3x320xbf16>
    %c0_29 = arith.constant 0 : index
    %c0_30 = arith.constant 0 : index
    %c41 = arith.constant 41 : index
    %26 = vector.load %arg1[%c0_29, %c0_30, %c41] : memref<1x3x440xbf16, #tpu.memory_space<vmem>>, vector<1x3x320xbf16>
    %27 = vector.shape_cast %26 : vector<1x3x320xbf16> to vector<3x320xbf16>
    %c0_31 = arith.constant 0 : index
    %c0_32 = arith.constant 0 : index
    %c42 = arith.constant 42 : index
    %28 = vector.load %arg1[%c0_31, %c0_32, %c42] : memref<1x3x440xbf16, #tpu.memory_space<vmem>>, vector<1x3x320xbf16>
    %29 = vector.shape_cast %28 : vector<1x3x320xbf16> to vector<3x320xbf16>
    %c0_33 = arith.constant 0 : index
    %c0_34 = arith.constant 0 : index
    %c58 = arith.constant 58 : index
    %30 = vector.load %arg1[%c0_33, %c0_34, %c58] : memref<1x3x440xbf16, #tpu.memory_space<vmem>>, vector<1x3x320xbf16>
    %31 = vector.shape_cast %30 : vector<1x3x320xbf16> to vector<3x320xbf16>
    %c0_35 = arith.constant 0 : index
    %c0_36 = arith.constant 0 : index
    %c59 = arith.constant 59 : index
    %32 = vector.load %arg1[%c0_35, %c0_36, %c59] : memref<1x3x440xbf16, #tpu.memory_space<vmem>>, vector<1x3x320xbf16>
    %33 = vector.shape_cast %32 : vector<1x3x320xbf16> to vector<3x320xbf16>
    %c0_37 = arith.constant 0 : index
    %c0_38 = arith.constant 0 : index
    %c60 = arith.constant 60 : index
    %34 = vector.load %arg1[%c0_37, %c0_38, %c60] : memref<1x3x440xbf16, #tpu.memory_space<vmem>>, vector<1x3x320xbf16>
    %35 = vector.shape_cast %34 : vector<1x3x320xbf16> to vector<3x320xbf16>
    %c0_39 = arith.constant 0 : index
    %c0_40 = arith.constant 0 : index
    %c61 = arith.constant 61 : index
    %36 = vector.load %arg1[%c0_39, %c0_40, %c61] : memref<1x3x440xbf16, #tpu.memory_space<vmem>>, vector<1x3x320xbf16>
    %37 = vector.shape_cast %36 : vector<1x3x320xbf16> to vector<3x320xbf16>
    %c0_41 = arith.constant 0 : index
    %c0_42 = arith.constant 0 : index
    %c62 = arith.constant 62 : index
    %38 = vector.load %arg1[%c0_41, %c0_42, %c62] : memref<1x3x440xbf16, #tpu.memory_space<vmem>>, vector<1x3x320xbf16>
    %39 = vector.shape_cast %38 : vector<1x3x320xbf16> to vector<3x320xbf16>
    %c0_43 = arith.constant 0 : index
    %c0_44 = arith.constant 0 : index
    %c78 = arith.constant 78 : index
    %40 = vector.load %arg1[%c0_43, %c0_44, %c78] : memref<1x3x440xbf16, #tpu.memory_space<vmem>>, vector<1x3x320xbf16>
    %41 = vector.shape_cast %40 : vector<1x3x320xbf16> to vector<3x320xbf16>
    %c0_45 = arith.constant 0 : index
    %c0_46 = arith.constant 0 : index
    %c79 = arith.constant 79 : index
    %42 = vector.load %arg1[%c0_45, %c0_46, %c79] : memref<1x3x440xbf16, #tpu.memory_space<vmem>>, vector<1x3x320xbf16>
    %43 = vector.shape_cast %42 : vector<1x3x320xbf16> to vector<3x320xbf16>
    %c0_47 = arith.constant 0 : index
    %c0_48 = arith.constant 0 : index
    %c80 = arith.constant 80 : index
    %44 = vector.load %arg1[%c0_47, %c0_48, %c80] : memref<1x3x440xbf16, #tpu.memory_space<vmem>>, vector<1x3x320xbf16>
    %45 = vector.shape_cast %44 : vector<1x3x320xbf16> to vector<3x320xbf16>
    %c0_49 = arith.constant 0 : index
    %c0_50 = arith.constant 0 : index
    %c81 = arith.constant 81 : index
    %46 = vector.load %arg1[%c0_49, %c0_50, %c81] : memref<1x3x440xbf16, #tpu.memory_space<vmem>>, vector<1x3x320xbf16>
    %47 = vector.shape_cast %46 : vector<1x3x320xbf16> to vector<3x320xbf16>
    %c0_51 = arith.constant 0 : index
    %c0_52 = arith.constant 0 : index
    %c82 = arith.constant 82 : index
    %48 = vector.load %arg1[%c0_51, %c0_52, %c82] : memref<1x3x440xbf16, #tpu.memory_space<vmem>>, vector<1x3x320xbf16>
    %49 = vector.shape_cast %48 : vector<1x3x320xbf16> to vector<3x320xbf16>
    %c0_53 = arith.constant 0 : index
    %c0_54 = arith.constant 0 : index
    %c98 = arith.constant 98 : index
    %50 = vector.load %arg1[%c0_53, %c0_54, %c98] : memref<1x3x440xbf16, #tpu.memory_space<vmem>>, vector<1x3x320xbf16>
    %51 = vector.shape_cast %50 : vector<1x3x320xbf16> to vector<3x320xbf16>
    %c0_55 = arith.constant 0 : index
    %c0_56 = arith.constant 0 : index
    %c99 = arith.constant 99 : index
    %52 = vector.load %arg1[%c0_55, %c0_56, %c99] : memref<1x3x440xbf16, #tpu.memory_space<vmem>>, vector<1x3x320xbf16>
    %53 = vector.shape_cast %52 : vector<1x3x320xbf16> to vector<3x320xbf16>
    %c0_57 = arith.constant 0 : index
    %c0_58 = arith.constant 0 : index
    %c100 = arith.constant 100 : index
    %54 = vector.load %arg1[%c0_57, %c0_58, %c100] : memref<1x3x440xbf16, #tpu.memory_space<vmem>>, vector<1x3x320xbf16>
    %55 = vector.shape_cast %54 : vector<1x3x320xbf16> to vector<3x320xbf16>
    %c0_59 = arith.constant 0 : index
    %c0_60 = arith.constant 0 : index
    %c101 = arith.constant 101 : index
    %56 = vector.load %arg1[%c0_59, %c0_60, %c101] : memref<1x3x440xbf16, #tpu.memory_space<vmem>>, vector<1x3x320xbf16>
    %57 = vector.shape_cast %56 : vector<1x3x320xbf16> to vector<3x320xbf16>
    %c0_61 = arith.constant 0 : index
    %c0_62 = arith.constant 0 : index
    %c102 = arith.constant 102 : index
    %58 = vector.load %arg1[%c0_61, %c0_62, %c102] : memref<1x3x440xbf16, #tpu.memory_space<vmem>>, vector<1x3x320xbf16>
    %59 = vector.shape_cast %58 : vector<1x3x320xbf16> to vector<3x320xbf16>
    %60 = tpu.concatenate %11, %13, %15, %17, %19, %21, %23, %25, %27, %29, %31, %33, %35, %37, %39, %41 in 0 : vector<3x320xbf16>, vector<3x320xbf16>, vector<3x320xbf16>, vector<3x320xbf16>, vector<3x320xbf16>, vector<3x320xbf16>, vector<3x320xbf16>, vector<3x320xbf16>, vector<3x320xbf16>, vector<3x320xbf16>, vector<3x320xbf16>, vector<3x320xbf16>, vector<3x320xbf16>, vector<3x320xbf16>, vector<3x320xbf16>, vector<3x320xbf16> -> vector<48x320xbf16>
    %61 = tpu.concatenate %43, %45, %47, %49, %51, %53, %55, %57, %59 in 0 : vector<3x320xbf16>, vector<3x320xbf16>, vector<3x320xbf16>, vector<3x320xbf16>, vector<3x320xbf16>, vector<3x320xbf16>, vector<3x320xbf16>, vector<3x320xbf16>, vector<3x320xbf16> -> vector<27x320xbf16>
    %62 = tpu.concatenate %60, %61 in 0 : vector<48x320xbf16>, vector<27x320xbf16> -> vector<75x320xbf16>
    %cst_63 = arith.constant dense<0.000000e+00> : vector<56x320xf32>
    %63 = tpu.matmul %9, %62, %cst_63 {dimension_numbers = #tpu.dot_dimension_numbers<[1], [0], [0], [1], [0, 0, 1, 1], [], []>} : vector<56x75xbf16>, vector<75x320xbf16>, vector<56x320xf32> -> vector<56x320xf32>
    %c0_64 = arith.constant 0 : index
    %c0_65 = arith.constant 0 : index
    %64 = vector.load %arg4[%c0_64, %c0_65] : memref<56x1xf32, #tpu.memory_space<vmem>>, vector<56x1xf32>
    %c0_66 = arith.constant 0 : index
    %c0_67 = arith.constant 0 : index
    %65 = vector.load %arg5[%c0_66, %c0_67] : memref<56x1xf32, #tpu.memory_space<vmem>>, vector<56x1xf32>
    %66 = vector.broadcast %64 : vector<56x1xf32> to vector<56x320xf32>
    %67 = arith.addf %63, %66 : vector<56x320xf32>
    %cst_68 = arith.constant 0.000000e+00 : f32
    %68 = vector.broadcast %cst_68 : f32 to vector<56x320xf32>
    %69 = arith.cmpf ogt, %67, %68 : vector<56x320xf32>
    %70 = vector.broadcast %65 : vector<56x1xf32> to vector<56x320xf32>
    %71 = arith.mulf %70, %67 : vector<56x320xf32>
    %72 = arith.select %69, %67, %71 : vector<56x320xi1>, vector<56x320xf32>
    %c0_69 = arith.constant 0 : index
    %c0_70 = arith.constant 0 : index
    %73 = vector.load %arg6[%c0_69, %c0_70] : memref<12x56xbf16, #tpu.memory_space<vmem>>, vector<12x56xbf16>
    %74 = arith.truncf %72 : vector<56x320xf32> to vector<56x320xbf16>
    %cst_71 = arith.constant dense<0.000000e+00> : vector<12x320xf32>
    %75 = tpu.matmul %73, %74, %cst_71 {dimension_numbers = #tpu.dot_dimension_numbers<[1], [0], [0], [1], [0, 0, 1, 1], [], []>} : vector<12x56xbf16>, vector<56x320xbf16>, vector<12x320xf32> -> vector<12x320xf32>
    %c0_72 = arith.constant 0 : index
    %c0_73 = arith.constant 0 : index
    %76 = vector.load %arg7[%c0_72, %c0_73] : memref<12x1xf32, #tpu.memory_space<vmem>>, vector<12x1xf32>
    %c0_74 = arith.constant 0 : index
    %c0_75 = arith.constant 0 : index
    %77 = vector.load %arg8[%c0_74, %c0_75] : memref<12x1xf32, #tpu.memory_space<vmem>>, vector<12x1xf32>
    %78 = vector.broadcast %76 : vector<12x1xf32> to vector<12x320xf32>
    %79 = arith.addf %75, %78 : vector<12x320xf32>
    %cst_76 = arith.constant 0.000000e+00 : f32
    %80 = vector.broadcast %cst_76 : f32 to vector<12x320xf32>
    %81 = arith.cmpf ogt, %79, %80 : vector<12x320xf32>
    %82 = vector.broadcast %77 : vector<12x1xf32> to vector<12x320xf32>
    %83 = arith.mulf %82, %79 : vector<12x320xf32>
    %84 = arith.select %81, %79, %83 : vector<12x320xi1>, vector<12x320xf32>
    %85 = vector.broadcast %0 : vector<1x320xf32> to vector<12x320xf32>
    %86 = arith.mulf %84, %85 : vector<12x320xf32>
    %87 = arith.truncf %86 : vector<12x320xf32> to vector<12x320xbf16>
    %c0_77 = arith.constant 0 : index
    %c60_78 = arith.constant 60 : index
    %88 = vector.load %arg18[%c0_77, %c60_78] : memref<12x440xbf16, #tpu.memory_space<vmem>>, vector<12x320xbf16>
    tpu.vector_store %arg18[%c0_77, %c60_78], %87 {strides = array<i32>} : memref<12x440xbf16, #tpu.memory_space<vmem>>, vector<12x320xbf16>,
    %c0_79 = arith.constant 0 : index
    %c0_80 = arith.constant 0 : index
    %c0_81 = arith.constant 0 : index
    %89 = vector.load %arg9[%c0_79, %c0_80, %c0_81] : memref<4x12x108xbf16, #tpu.memory_space<vmem>>, vector<1x12x108xbf16>
    %90 = vector.shape_cast %89 : vector<1x12x108xbf16> to vector<12x108xbf16>
    %c0_82 = arith.constant 0 : index
    %c39_83 = arith.constant 39 : index
    %91 = vector.load %arg18[%c0_82, %c39_83] : memref<12x440xbf16, #tpu.memory_space<vmem>>, vector<12x320xbf16>
    %c0_84 = arith.constant 0 : index
    %c40_85 = arith.constant 40 : index
    %92 = vector.load %arg18[%c0_84, %c40_85] : memref<12x440xbf16, #tpu.memory_space<vmem>>, vector<12x320xbf16>
    %c0_86 = arith.constant 0 : index
    %c41_87 = arith.constant 41 : index
    %93 = vector.load %arg18[%c0_86, %c41_87] : memref<12x440xbf16, #tpu.memory_space<vmem>>, vector<12x320xbf16>
    %c0_88 = arith.constant 0 : index
    %c59_89 = arith.constant 59 : index
    %94 = vector.load %arg18[%c0_88, %c59_89] : memref<12x440xbf16, #tpu.memory_space<vmem>>, vector<12x320xbf16>
    %c0_90 = arith.constant 0 : index
    %c60_91 = arith.constant 60 : index
    %95 = vector.load %arg18[%c0_90, %c60_91] : memref<12x440xbf16, #tpu.memory_space<vmem>>, vector<12x320xbf16>
    %c0_92 = arith.constant 0 : index
    %c61_93 = arith.constant 61 : index
    %96 = vector.load %arg18[%c0_92, %c61_93] : memref<12x440xbf16, #tpu.memory_space<vmem>>, vector<12x320xbf16>
    %c0_94 = arith.constant 0 : index
    %c79_95 = arith.constant 79 : index
    %97 = vector.load %arg18[%c0_94, %c79_95] : memref<12x440xbf16, #tpu.memory_space<vmem>>, vector<12x320xbf16>
    %c0_96 = arith.constant 0 : index
    %c80_97 = arith.constant 80 : index
    %98 = vector.load %arg18[%c0_96, %c80_97] : memref<12x440xbf16, #tpu.memory_space<vmem>>, vector<12x320xbf16>
    %c0_98 = arith.constant 0 : index
    %c81_99 = arith.constant 81 : index
    %99 = vector.load %arg18[%c0_98, %c81_99] : memref<12x440xbf16, #tpu.memory_space<vmem>>, vector<12x320xbf16>
    %100 = tpu.concatenate %91, %92, %93, %94, %95, %96, %97, %98, %99 in 0 : vector<12x320xbf16>, vector<12x320xbf16>, vector<12x320xbf16>, vector<12x320xbf16>, vector<12x320xbf16>, vector<12x320xbf16>, vector<12x320xbf16>, vector<12x320xbf16>, vector<12x320xbf16> -> vector<108x320xbf16>
    %cst_100 = arith.constant dense<0.000000e+00> : vector<12x320xf32>
    %101 = tpu.matmul %90, %100, %cst_100 {dimension_numbers = #tpu.dot_dimension_numbers<[1], [0], [0], [1], [0, 0, 1, 1], [], []>} : vector<12x108xbf16>, vector<108x320xbf16>, vector<12x320xf32> -> vector<12x320xf32>
    %c0_101 = arith.constant 0 : index
    %c0_102 = arith.constant 0 : index
    %c0_103 = arith.constant 0 : index
    %102 = vector.load %arg10[%c0_101, %c0_102, %c0_103] : memref<4x12x1xf32, #tpu.memory_space<vmem>>, vector<1x12x1xf32>
    %103 = vector.shape_cast %102 : vector<1x12x1xf32> to vector<12x1xf32>
    %c0_104 = arith.constant 0 : index
    %c0_105 = arith.constant 0 : index
    %c0_106 = arith.constant 0 : index
    %104 = vector.load %arg11[%c0_104, %c0_105, %c0_106] : memref<4x12x1xf32, #tpu.memory_space<vmem>>, vector<1x12x1xf32>
    %105 = vector.shape_cast %104 : vector<1x12x1xf32> to vector<12x1xf32>
    %106 = vector.broadcast %103 : vector<12x1xf32> to vector<12x320xf32>
    %107 = arith.addf %101, %106 : vector<12x320xf32>
    %cst_107 = arith.constant 0.000000e+00 : f32
    %108 = vector.broadcast %cst_107 : f32 to vector<12x320xf32>
    %109 = arith.cmpf ogt, %107, %108 : vector<12x320xf32>
    %110 = vector.broadcast %105 : vector<12x1xf32> to vector<12x320xf32>
    %111 = arith.mulf %110, %107 : vector<12x320xf32>
    %112 = arith.select %109, %107, %111 : vector<12x320xi1>, vector<12x320xf32>
    %113 = vector.broadcast %0 : vector<1x320xf32> to vector<12x320xf32>
    %114 = arith.mulf %112, %113 : vector<12x320xf32>
    %115 = arith.truncf %114 : vector<12x320xf32> to vector<12x320xbf16>
    %c0_108 = arith.constant 0 : index
    %c60_109 = arith.constant 60 : index
    %116 = vector.load %arg18[%c0_108, %c60_109] : memref<12x440xbf16, #tpu.memory_space<vmem>>, vector<12x320xbf16>
    tpu.vector_store %arg18[%c0_108, %c60_109], %115 {strides = array<i32>} : memref<12x440xbf16, #tpu.memory_space<vmem>>, vector<12x320xbf16>,
    %c1 = arith.constant 1 : index
    %c0_110 = arith.constant 0 : index
    %c0_111 = arith.constant 0 : index
    %117 = vector.load %arg9[%c1, %c0_110, %c0_111] : memref<4x12x108xbf16, #tpu.memory_space<vmem>>, vector<1x12x108xbf16>
    %118 = vector.shape_cast %117 : vector<1x12x108xbf16> to vector<12x108xbf16>
    %c0_112 = arith.constant 0 : index
    %c39_113 = arith.constant 39 : index
    %119 = vector.load %arg18[%c0_112, %c39_113] : memref<12x440xbf16, #tpu.memory_space<vmem>>, vector<12x320xbf16>
    %c0_114 = arith.constant 0 : index
    %c40_115 = arith.constant 40 : index
    %120 = vector.load %arg18[%c0_114, %c40_115] : memref<12x440xbf16, #tpu.memory_space<vmem>>, vector<12x320xbf16>
    %c0_116 = arith.constant 0 : index
    %c41_117 = arith.constant 41 : index
    %121 = vector.load %arg18[%c0_116, %c41_117] : memref<12x440xbf16, #tpu.memory_space<vmem>>, vector<12x320xbf16>
    %c0_118 = arith.constant 0 : index
    %c59_119 = arith.constant 59 : index
    %122 = vector.load %arg18[%c0_118, %c59_119] : memref<12x440xbf16, #tpu.memory_space<vmem>>, vector<12x320xbf16>
    %c0_120 = arith.constant 0 : index
    %c60_121 = arith.constant 60 : index
    %123 = vector.load %arg18[%c0_120, %c60_121] : memref<12x440xbf16, #tpu.memory_space<vmem>>, vector<12x320xbf16>
    %c0_122 = arith.constant 0 : index
    %c61_123 = arith.constant 61 : index
    %124 = vector.load %arg18[%c0_122, %c61_123] : memref<12x440xbf16, #tpu.memory_space<vmem>>, vector<12x320xbf16>
    %c0_124 = arith.constant 0 : index
    %c79_125 = arith.constant 79 : index
    %125 = vector.load %arg18[%c0_124, %c79_125] : memref<12x440xbf16, #tpu.memory_space<vmem>>, vector<12x320xbf16>
    %c0_126 = arith.constant 0 : index
    %c80_127 = arith.constant 80 : index
    %126 = vector.load %arg18[%c0_126, %c80_127] : memref<12x440xbf16, #tpu.memory_space<vmem>>, vector<12x320xbf16>
    %c0_128 = arith.constant 0 : index
    %c81_129 = arith.constant 81 : index
    %127 = vector.load %arg18[%c0_128, %c81_129] : memref<12x440xbf16, #tpu.memory_space<vmem>>, vector<12x320xbf16>
    %128 = tpu.concatenate %119, %120, %121, %122, %123, %124, %125, %126, %127 in 0 : vector<12x320xbf16>, vector<12x320xbf16>, vector<12x320xbf16>, vector<12x320xbf16>, vector<12x320xbf16>, vector<12x320xbf16>, vector<12x320xbf16>, vector<12x320xbf16>, vector<12x320xbf16> -> vector<108x320xbf16>
    %cst_130 = arith.constant dense<0.000000e+00> : vector<12x320xf32>
    %129 = tpu.matmul %118, %128, %cst_130 {dimension_numbers = #tpu.dot_dimension_numbers<[1], [0], [0], [1], [0, 0, 1, 1], [], []>} : vector<12x108xbf16>, vector<108x320xbf16>, vector<12x320xf32> -> vector<12x320xf32>
    %c1_131 = arith.constant 1 : index
    %c0_132 = arith.constant 0 : index
    %c0_133 = arith.constant 0 : index
    %130 = vector.load %arg10[%c1_131, %c0_132, %c0_133] : memref<4x12x1xf32, #tpu.memory_space<vmem>>, vector<1x12x1xf32>
    %131 = vector.shape_cast %130 : vector<1x12x1xf32> to vector<12x1xf32>
    %c1_134 = arith.constant 1 : index
    %c0_135 = arith.constant 0 : index
    %c0_136 = arith.constant 0 : index
    %132 = vector.load %arg11[%c1_134, %c0_135, %c0_136] : memref<4x12x1xf32, #tpu.memory_space<vmem>>, vector<1x12x1xf32>
    %133 = vector.shape_cast %132 : vector<1x12x1xf32> to vector<12x1xf32>
    %134 = vector.broadcast %131 : vector<12x1xf32> to vector<12x320xf32>
    %135 = arith.addf %129, %134 : vector<12x320xf32>
    %cst_137 = arith.constant 0.000000e+00 : f32
    %136 = vector.broadcast %cst_137 : f32 to vector<12x320xf32>
    %137 = arith.cmpf ogt, %135, %136 : vector<12x320xf32>
    %138 = vector.broadcast %133 : vector<12x1xf32> to vector<12x320xf32>
    %139 = arith.mulf %138, %135 : vector<12x320xf32>
    %140 = arith.select %137, %135, %139 : vector<12x320xi1>, vector<12x320xf32>
    %141 = vector.broadcast %0 : vector<1x320xf32> to vector<12x320xf32>
    %142 = arith.mulf %140, %141 : vector<12x320xf32>
    %143 = arith.truncf %142 : vector<12x320xf32> to vector<12x320xbf16>
    %c0_138 = arith.constant 0 : index
    %c60_139 = arith.constant 60 : index
    %144 = vector.load %arg18[%c0_138, %c60_139] : memref<12x440xbf16, #tpu.memory_space<vmem>>, vector<12x320xbf16>
    tpu.vector_store %arg18[%c0_138, %c60_139], %143 {strides = array<i32>} : memref<12x440xbf16, #tpu.memory_space<vmem>>, vector<12x320xbf16>,
    %c2 = arith.constant 2 : index
    %c0_140 = arith.constant 0 : index
    %c0_141 = arith.constant 0 : index
    %145 = vector.load %arg9[%c2, %c0_140, %c0_141] : memref<4x12x108xbf16, #tpu.memory_space<vmem>>, vector<1x12x108xbf16>
    %146 = vector.shape_cast %145 : vector<1x12x108xbf16> to vector<12x108xbf16>
    %c0_142 = arith.constant 0 : index
    %c39_143 = arith.constant 39 : index
    %147 = vector.load %arg18[%c0_142, %c39_143] : memref<12x440xbf16, #tpu.memory_space<vmem>>, vector<12x320xbf16>
    %c0_144 = arith.constant 0 : index
    %c40_145 = arith.constant 40 : index
    %148 = vector.load %arg18[%c0_144, %c40_145] : memref<12x440xbf16, #tpu.memory_space<vmem>>, vector<12x320xbf16>
    %c0_146 = arith.constant 0 : index
    %c41_147 = arith.constant 41 : index
    %149 = vector.load %arg18[%c0_146, %c41_147] : memref<12x440xbf16, #tpu.memory_space<vmem>>, vector<12x320xbf16>
    %c0_148 = arith.constant 0 : index
    %c59_149 = arith.constant 59 : index
    %150 = vector.load %arg18[%c0_148, %c59_149] : memref<12x440xbf16, #tpu.memory_space<vmem>>, vector<12x320xbf16>
    %c0_150 = arith.constant 0 : index
    %c60_151 = arith.constant 60 : index
    %151 = vector.load %arg18[%c0_150, %c60_151] : memref<12x440xbf16, #tpu.memory_space<vmem>>, vector<12x320xbf16>
    %c0_152 = arith.constant 0 : index
    %c61_153 = arith.constant 61 : index
    %152 = vector.load %arg18[%c0_152, %c61_153] : memref<12x440xbf16, #tpu.memory_space<vmem>>, vector<12x320xbf16>
    %c0_154 = arith.constant 0 : index
    %c79_155 = arith.constant 79 : index
    %153 = vector.load %arg18[%c0_154, %c79_155] : memref<12x440xbf16, #tpu.memory_space<vmem>>, vector<12x320xbf16>
    %c0_156 = arith.constant 0 : index
    %c80_157 = arith.constant 80 : index
    %154 = vector.load %arg18[%c0_156, %c80_157] : memref<12x440xbf16, #tpu.memory_space<vmem>>, vector<12x320xbf16>
    %c0_158 = arith.constant 0 : index
    %c81_159 = arith.constant 81 : index
    %155 = vector.load %arg18[%c0_158, %c81_159] : memref<12x440xbf16, #tpu.memory_space<vmem>>, vector<12x320xbf16>
    %156 = tpu.concatenate %147, %148, %149, %150, %151, %152, %153, %154, %155 in 0 : vector<12x320xbf16>, vector<12x320xbf16>, vector<12x320xbf16>, vector<12x320xbf16>, vector<12x320xbf16>, vector<12x320xbf16>, vector<12x320xbf16>, vector<12x320xbf16>, vector<12x320xbf16> -> vector<108x320xbf16>
    %cst_160 = arith.constant dense<0.000000e+00> : vector<12x320xf32>
    %157 = tpu.matmul %146, %156, %cst_160 {dimension_numbers = #tpu.dot_dimension_numbers<[1], [0], [0], [1], [0, 0, 1, 1], [], []>} : vector<12x108xbf16>, vector<108x320xbf16>, vector<12x320xf32> -> vector<12x320xf32>
    %c2_161 = arith.constant 2 : index
    %c0_162 = arith.constant 0 : index
    %c0_163 = arith.constant 0 : index
    %158 = vector.load %arg10[%c2_161, %c0_162, %c0_163] : memref<4x12x1xf32, #tpu.memory_space<vmem>>, vector<1x12x1xf32>
    %159 = vector.shape_cast %158 : vector<1x12x1xf32> to vector<12x1xf32>
    %c2_164 = arith.constant 2 : index
    %c0_165 = arith.constant 0 : index
    %c0_166 = arith.constant 0 : index
    %160 = vector.load %arg11[%c2_164, %c0_165, %c0_166] : memref<4x12x1xf32, #tpu.memory_space<vmem>>, vector<1x12x1xf32>
    %161 = vector.shape_cast %160 : vector<1x12x1xf32> to vector<12x1xf32>
    %162 = vector.broadcast %159 : vector<12x1xf32> to vector<12x320xf32>
    %163 = arith.addf %157, %162 : vector<12x320xf32>
    %cst_167 = arith.constant 0.000000e+00 : f32
    %164 = vector.broadcast %cst_167 : f32 to vector<12x320xf32>
    %165 = arith.cmpf ogt, %163, %164 : vector<12x320xf32>
    %166 = vector.broadcast %161 : vector<12x1xf32> to vector<12x320xf32>
    %167 = arith.mulf %166, %163 : vector<12x320xf32>
    %168 = arith.select %165, %163, %167 : vector<12x320xi1>, vector<12x320xf32>
    %169 = vector.broadcast %0 : vector<1x320xf32> to vector<12x320xf32>
    %170 = arith.mulf %168, %169 : vector<12x320xf32>
    %171 = arith.truncf %170 : vector<12x320xf32> to vector<12x320xbf16>
    %c0_168 = arith.constant 0 : index
    %c60_169 = arith.constant 60 : index
    %172 = vector.load %arg18[%c0_168, %c60_169] : memref<12x440xbf16, #tpu.memory_space<vmem>>, vector<12x320xbf16>
    tpu.vector_store %arg18[%c0_168, %c60_169], %171 {strides = array<i32>} : memref<12x440xbf16, #tpu.memory_space<vmem>>, vector<12x320xbf16>,
    %c3 = arith.constant 3 : index
    %c0_170 = arith.constant 0 : index
    %c0_171 = arith.constant 0 : index
    %173 = vector.load %arg9[%c3, %c0_170, %c0_171] : memref<4x12x108xbf16, #tpu.memory_space<vmem>>, vector<1x12x108xbf16>
    %174 = vector.shape_cast %173 : vector<1x12x108xbf16> to vector<12x108xbf16>
    %c0_172 = arith.constant 0 : index
    %c39_173 = arith.constant 39 : index
    %175 = vector.load %arg18[%c0_172, %c39_173] : memref<12x440xbf16, #tpu.memory_space<vmem>>, vector<12x320xbf16>
    %c0_174 = arith.constant 0 : index
    %c40_175 = arith.constant 40 : index
    %176 = vector.load %arg18[%c0_174, %c40_175] : memref<12x440xbf16, #tpu.memory_space<vmem>>, vector<12x320xbf16>
    %c0_176 = arith.constant 0 : index
    %c41_177 = arith.constant 41 : index
    %177 = vector.load %arg18[%c0_176, %c41_177] : memref<12x440xbf16, #tpu.memory_space<vmem>>, vector<12x320xbf16>
    %c0_178 = arith.constant 0 : index
    %c59_179 = arith.constant 59 : index
    %178 = vector.load %arg18[%c0_178, %c59_179] : memref<12x440xbf16, #tpu.memory_space<vmem>>, vector<12x320xbf16>
    %c0_180 = arith.constant 0 : index
    %c60_181 = arith.constant 60 : index
    %179 = vector.load %arg18[%c0_180, %c60_181] : memref<12x440xbf16, #tpu.memory_space<vmem>>, vector<12x320xbf16>
    %c0_182 = arith.constant 0 : index
    %c61_183 = arith.constant 61 : index
    %180 = vector.load %arg18[%c0_182, %c61_183] : memref<12x440xbf16, #tpu.memory_space<vmem>>, vector<12x320xbf16>
    %c0_184 = arith.constant 0 : index
    %c79_185 = arith.constant 79 : index
    %181 = vector.load %arg18[%c0_184, %c79_185] : memref<12x440xbf16, #tpu.memory_space<vmem>>, vector<12x320xbf16>
    %c0_186 = arith.constant 0 : index
    %c80_187 = arith.constant 80 : index
    %182 = vector.load %arg18[%c0_186, %c80_187] : memref<12x440xbf16, #tpu.memory_space<vmem>>, vector<12x320xbf16>
    %c0_188 = arith.constant 0 : index
    %c81_189 = arith.constant 81 : index
    %183 = vector.load %arg18[%c0_188, %c81_189] : memref<12x440xbf16, #tpu.memory_space<vmem>>, vector<12x320xbf16>
    %184 = tpu.concatenate %175, %176, %177, %178, %179, %180, %181, %182, %183 in 0 : vector<12x320xbf16>, vector<12x320xbf16>, vector<12x320xbf16>, vector<12x320xbf16>, vector<12x320xbf16>, vector<12x320xbf16>, vector<12x320xbf16>, vector<12x320xbf16>, vector<12x320xbf16> -> vector<108x320xbf16>
    %cst_190 = arith.constant dense<0.000000e+00> : vector<12x320xf32>
    %185 = tpu.matmul %174, %184, %cst_190 {dimension_numbers = #tpu.dot_dimension_numbers<[1], [0], [0], [1], [0, 0, 1, 1], [], []>} : vector<12x108xbf16>, vector<108x320xbf16>, vector<12x320xf32> -> vector<12x320xf32>
    %c3_191 = arith.constant 3 : index
    %c0_192 = arith.constant 0 : index
    %c0_193 = arith.constant 0 : index
    %186 = vector.load %arg10[%c3_191, %c0_192, %c0_193] : memref<4x12x1xf32, #tpu.memory_space<vmem>>, vector<1x12x1xf32>
    %187 = vector.shape_cast %186 : vector<1x12x1xf32> to vector<12x1xf32>
    %c3_194 = arith.constant 3 : index
    %c0_195 = arith.constant 0 : index
    %c0_196 = arith.constant 0 : index
    %188 = vector.load %arg11[%c3_194, %c0_195, %c0_196] : memref<4x12x1xf32, #tpu.memory_space<vmem>>, vector<1x12x1xf32>
    %189 = vector.shape_cast %188 : vector<1x12x1xf32> to vector<12x1xf32>
    %190 = vector.broadcast %187 : vector<12x1xf32> to vector<12x320xf32>
    %191 = arith.addf %185, %190 : vector<12x320xf32>
    %cst_197 = arith.constant 0.000000e+00 : f32
    %192 = vector.broadcast %cst_197 : f32 to vector<12x320xf32>
    %193 = arith.cmpf ogt, %191, %192 : vector<12x320xf32>
    %194 = vector.broadcast %189 : vector<12x1xf32> to vector<12x320xf32>
    %195 = arith.mulf %194, %191 : vector<12x320xf32>
    %196 = arith.select %193, %191, %195 : vector<12x320xi1>, vector<12x320xf32>
    %c0_198 = arith.constant 0 : index
    %c0_199 = arith.constant 0 : index
    %197 = vector.load %arg12[%c0_198, %c0_199] : memref<56x12xbf16, #tpu.memory_space<vmem>>, vector<56x12xbf16>
    %198 = arith.truncf %196 : vector<12x320xf32> to vector<12x320xbf16>
    %cst_200 = arith.constant dense<0.000000e+00> : vector<56x320xf32>
    %199 = tpu.matmul %197, %198, %cst_200 {dimension_numbers = #tpu.dot_dimension_numbers<[1], [0], [0], [1], [0, 0, 1, 1], [], []>} : vector<56x12xbf16>, vector<12x320xbf16>, vector<56x320xf32> -> vector<56x320xf32>
    %c0_201 = arith.constant 0 : index
    %c0_202 = arith.constant 0 : index
    %200 = vector.load %arg13[%c0_201, %c0_202] : memref<56x1xf32, #tpu.memory_space<vmem>>, vector<56x1xf32>
    %c0_203 = arith.constant 0 : index
    %c0_204 = arith.constant 0 : index
    %201 = vector.load %arg14[%c0_203, %c0_204] : memref<56x1xf32, #tpu.memory_space<vmem>>, vector<56x1xf32>
    %202 = vector.broadcast %200 : vector<56x1xf32> to vector<56x320xf32>
    %203 = arith.addf %199, %202 : vector<56x320xf32>
    %cst_205 = arith.constant 0.000000e+00 : f32
    %204 = vector.broadcast %cst_205 : f32 to vector<56x320xf32>
    %205 = arith.cmpf ogt, %203, %204 : vector<56x320xf32>
    %206 = vector.broadcast %201 : vector<56x1xf32> to vector<56x320xf32>
    %207 = arith.mulf %206, %203 : vector<56x320xf32>
    %208 = arith.select %205, %203, %207 : vector<56x320xi1>, vector<56x320xf32>
    %209 = vector.broadcast %0 : vector<1x320xf32> to vector<56x320xf32>
    %210 = arith.mulf %208, %209 : vector<56x320xf32>
    %211 = arith.truncf %210 : vector<56x320xf32> to vector<56x320xbf16>
    %c0_206 = arith.constant 0 : index
    %c60_207 = arith.constant 60 : index
    %212 = vector.load %arg19[%c0_206, %c60_207] : memref<56x440xbf16, #tpu.memory_space<vmem>>, vector<56x320xbf16>
    tpu.vector_store %arg19[%c0_206, %c60_207], %211 {strides = array<i32>} : memref<56x440xbf16, #tpu.memory_space<vmem>>, vector<56x320xbf16>,
    %c0_208 = arith.constant 0 : index
    %c0_209 = arith.constant 0 : index
    %213 = vector.load %arg15[%c0_208, %c0_209] : memref<48x504xbf16, #tpu.memory_space<vmem>>, vector<48x504xbf16>
    %c0_210 = arith.constant 0 : index
    %c39_211 = arith.constant 39 : index
    %214 = vector.load %arg19[%c0_210, %c39_211] : memref<56x440xbf16, #tpu.memory_space<vmem>>, vector<56x320xbf16>
    %c0_212 = arith.constant 0 : index
    %c40_213 = arith.constant 40 : index
    %215 = vector.load %arg19[%c0_212, %c40_213] : memref<56x440xbf16, #tpu.memory_space<vmem>>, vector<56x320xbf16>
    %c0_214 = arith.constant 0 : index
    %c41_215 = arith.constant 41 : index
    %216 = vector.load %arg19[%c0_214, %c41_215] : memref<56x440xbf16, #tpu.memory_space<vmem>>, vector<56x320xbf16>
    %c0_216 = arith.constant 0 : index
    %c59_217 = arith.constant 59 : index
    %217 = vector.load %arg19[%c0_216, %c59_217] : memref<56x440xbf16, #tpu.memory_space<vmem>>, vector<56x320xbf16>
    %c0_218 = arith.constant 0 : index
    %c60_219 = arith.constant 60 : index
    %218 = vector.load %arg19[%c0_218, %c60_219] : memref<56x440xbf16, #tpu.memory_space<vmem>>, vector<56x320xbf16>
    %c0_220 = arith.constant 0 : index
    %c61_221 = arith.constant 61 : index
    %219 = vector.load %arg19[%c0_220, %c61_221] : memref<56x440xbf16, #tpu.memory_space<vmem>>, vector<56x320xbf16>
    %c0_222 = arith.constant 0 : index
    %c79_223 = arith.constant 79 : index
    %220 = vector.load %arg19[%c0_222, %c79_223] : memref<56x440xbf16, #tpu.memory_space<vmem>>, vector<56x320xbf16>
    %c0_224 = arith.constant 0 : index
    %c80_225 = arith.constant 80 : index
    %221 = vector.load %arg19[%c0_224, %c80_225] : memref<56x440xbf16, #tpu.memory_space<vmem>>, vector<56x320xbf16>
    %c0_226 = arith.constant 0 : index
    %c81_227 = arith.constant 81 : index
    %222 = vector.load %arg19[%c0_226, %c81_227] : memref<56x440xbf16, #tpu.memory_space<vmem>>, vector<56x320xbf16>
    %223 = tpu.concatenate %214, %215, %216, %217, %218, %219, %220, %221, %222 in 0 : vector<56x320xbf16>, vector<56x320xbf16>, vector<56x320xbf16>, vector<56x320xbf16>, vector<56x320xbf16>, vector<56x320xbf16>, vector<56x320xbf16>, vector<56x320xbf16>, vector<56x320xbf16> -> vector<504x320xbf16>
    %cst_228 = arith.constant dense<0.000000e+00> : vector<48x320xf32>
    %224 = tpu.matmul %213, %223, %cst_228 {dimension_numbers = #tpu.dot_dimension_numbers<[1], [0], [0], [1], [0, 0, 1, 1], [], []>} : vector<48x504xbf16>, vector<504x320xbf16>, vector<48x320xf32> -> vector<48x320xf32>
    %c0_229 = arith.constant 0 : index
    %c0_230 = arith.constant 0 : index
    %225 = vector.load %arg16[%c0_229, %c0_230] : memref<48x1xf32, #tpu.memory_space<vmem>>, vector<48x1xf32>
    %226 = vector.broadcast %225 : vector<48x1xf32> to vector<48x320xf32>
    %227 = arith.addf %224, %226 : vector<48x320xf32>
    %c0_231 = arith.constant 0 : index
    %c0_232 = arith.constant 0 : index
    %c0_233 = arith.constant 0 : index
    %228 = vector.load %arg17[%c0_231, %c0_232, %c0_233] : memref<1x48x320xf32, #tpu.memory_space<vmem>>, vector<1x48x320xf32>
    %229 = vector.shape_cast %228 : vector<1x48x320xf32> to vector<48x320xf32>
    %230 = vector.shape_cast %227 : vector<48x320xf32> to vector<1x48x320xf32>
    tpu.vector_store %arg17[%c0_231, %c0_232, %c0_233], %230 {strides = array<i32>} : memref<1x48x320xf32, #tpu.memory_space<vmem>>, vector<1x48x320xf32>,
    return
  }
  func.func @transform_0(%arg0: i32) -> (i32, i32, i32) {
    %c0_i32 = arith.constant 0 : i32
    %c0_i32_0 = arith.constant 0 : i32
    %c0_i32_1 = arith.constant 0 : i32
    return %arg0, %c0_i32, %c0_i32_0 : i32, i32, i32
  }
  func.func @transform_1(%arg0: i32) -> (i32, i32) {
    %c0_i32 = arith.constant 0 : i32
    %c0_i32_0 = arith.constant 0 : i32
    %c0_i32_1 = arith.constant 0 : i32
    return %c0_i32, %c0_i32_0 : i32, i32
  }
  func.func @transform_2(%arg0: i32) -> (i32, i32) {
    %c0_i32 = arith.constant 0 : i32
    %c0_i32_0 = arith.constant 0 : i32
    %c0_i32_1 = arith.constant 0 : i32
    return %c0_i32, %c0_i32_0 : i32, i32
  }
  func.func @transform_3(%arg0: i32) -> (i32, i32) {
    %c0_i32 = arith.constant 0 : i32
    %c0_i32_0 = arith.constant 0 : i32
    %c0_i32_1 = arith.constant 0 : i32
    return %c0_i32, %c0_i32_0 : i32, i32
  }
  func.func @transform_4(%arg0: i32) -> (i32, i32) {
    %c0_i32 = arith.constant 0 : i32
    %c0_i32_0 = arith.constant 0 : i32
    %c0_i32_1 = arith.constant 0 : i32
    return %c0_i32, %c0_i32_0 : i32, i32
  }
  func.func @transform_5(%arg0: i32) -> (i32, i32) {
    %c0_i32 = arith.constant 0 : i32
    %c0_i32_0 = arith.constant 0 : i32
    %c0_i32_1 = arith.constant 0 : i32
    return %c0_i32, %c0_i32_0 : i32, i32
  }
  func.func @transform_6(%arg0: i32) -> (i32, i32) {
    %c0_i32 = arith.constant 0 : i32
    %c0_i32_0 = arith.constant 0 : i32
    %c0_i32_1 = arith.constant 0 : i32
    return %c0_i32, %c0_i32_0 : i32, i32
  }
  func.func @transform_7(%arg0: i32) -> (i32, i32) {
    %c0_i32 = arith.constant 0 : i32
    %c0_i32_0 = arith.constant 0 : i32
    %c0_i32_1 = arith.constant 0 : i32
    return %c0_i32, %c0_i32_0 : i32, i32
  }
  func.func @transform_8(%arg0: i32) -> (i32, i32, i32) {
    %c0_i32 = arith.constant 0 : i32
    %c0_i32_0 = arith.constant 0 : i32
    %c0_i32_1 = arith.constant 0 : i32
    %c0_i32_2 = arith.constant 0 : i32
    return %c0_i32, %c0_i32_0, %c0_i32_1 : i32, i32, i32
  }
  func.func @transform_9(%arg0: i32) -> (i32, i32, i32) {
    %c0_i32 = arith.constant 0 : i32
    %c0_i32_0 = arith.constant 0 : i32
    %c0_i32_1 = arith.constant 0 : i32
    %c0_i32_2 = arith.constant 0 : i32
    return %c0_i32, %c0_i32_0, %c0_i32_1 : i32, i32, i32
  }
  func.func @transform_10(%arg0: i32) -> (i32, i32, i32) {
    %c0_i32 = arith.constant 0 : i32
    %c0_i32_0 = arith.constant 0 : i32
    %c0_i32_1 = arith.constant 0 : i32
    %c0_i32_2 = arith.constant 0 : i32
    return %c0_i32, %c0_i32_0, %c0_i32_1 : i32, i32, i32
  }
  func.func @transform_11(%arg0: i32) -> (i32, i32) {
    %c0_i32 = arith.constant 0 : i32
    %c0_i32_0 = arith.constant 0 : i32
    %c0_i32_1 = arith.constant 0 : i32
    return %c0_i32, %c0_i32_0 : i32, i32
  }
  func.func @transform_12(%arg0: i32) -> (i32, i32) {
    %c0_i32 = arith.constant 0 : i32
    %c0_i32_0 = arith.constant 0 : i32
    %c0_i32_1 = arith.constant 0 : i32
    return %c0_i32, %c0_i32_0 : i32, i32
  }
  func.func @transform_13(%arg0: i32) -> (i32, i32) {
    %c0_i32 = arith.constant 0 : i32
    %c0_i32_0 = arith.constant 0 : i32
    %c0_i32_1 = arith.constant 0 : i32
    return %c0_i32, %c0_i32_0 : i32, i32
  }
  func.func @transform_14(%arg0: i32) -> (i32, i32) {
    %c0_i32 = arith.constant 0 : i32
    %c0_i32_0 = arith.constant 0 : i32
    %c0_i32_1 = arith.constant 0 : i32
    return %c0_i32, %c0_i32_0 : i32, i32
  }
  func.func @transform_15(%arg0: i32) -> (i32, i32) {
    %c0_i32 = arith.constant 0 : i32
    %c0_i32_0 = arith.constant 0 : i32
    %c0_i32_1 = arith.constant 0 : i32
    return %c0_i32, %c0_i32_0 : i32, i32
  }
  func.func @transform_16(%arg0: i32) -> (i32, i32, i32) {
    %c0_i32 = arith.constant 0 : i32
    %c0_i32_0 = arith.constant 0 : i32
    %c0_i32_1 = arith.constant 0 : i32
    return %arg0, %c0_i32, %c0_i32_0 : i32, i32, i32
  }
}

</mosaic_0001>

<llo_original>
// kernel: fsrcnn_forward.1
$region0: #{fsrcnn_forward.1}
  #allocation0 [shape = 'u32[]', space=smem, size = 0x4, offset = 0x4, fixed_abs, tag = 'smem constant byte address 0x4 - core index']
  #allocation1 [shape = 'u32[72,128]{1,0:T(1,128)}', space=vmem, size = 0x9000, scoped, tag = 'internal scratch']
  #allocation2 [shape = 'bf16[12,440]{1,0:T(8,128)(2,1)}', space=vmem, size = 0x4000, scoped, tag = 'scratch operand']
  #allocation3 [shape = 'bf16[56,440]{1,0:T(8,128)(2,1)}', space=vmem, size = 0xe000, scoped, tag = 'scratch operand']
  %s0 = inlined_call_operand.vmem [shape: bf16[2,3,440], index: 0, kind: input, shape index: {}]
  %s1 = inlined_call_operand.vmem [shape: f32[1,320], index: 1, kind: input, shape index: {}]
  %s2 = inlined_call_operand.hbm [shape: bf16[56,75], index: 2, kind: input, shape index: {}]
  %s3 = inlined_call_operand.vmem [shape: f32[56,1], index: 3, kind: input, shape index: {}]
  %s4 = inlined_call_operand.vmem [shape: f32[56,1], index: 4, kind: input, shape index: {}]
  %s5 = inlined_call_operand.hbm [shape: bf16[12,56], index: 5, kind: input, shape index: {}]
  %s6 = inlined_call_operand.vmem [shape: f32[12,1], index: 6, kind: input, shape index: {}]
  %s7 = inlined_call_operand.vmem [shape: f32[12,1], index: 7, kind: input, shape index: {}]
  %s8 = inlined_call_operand.vmem [shape: bf16[4,12,108], index: 8, kind: input, shape index: {}]
  %s9 = inlined_call_operand.vmem [shape: f32[4,12,1], index: 9, kind: input, shape index: {}]
  %s10 = inlined_call_operand.vmem [shape: f32[4,12,1], index: 10, kind: input, shape index: {}]
  %s11 = inlined_call_operand.vmem [shape: bf16[56,12], index: 11, kind: input, shape index: {}]
  %s12 = inlined_call_operand.vmem [shape: f32[56,1], index: 12, kind: input, shape index: {}]
  %s13 = inlined_call_operand.vmem [shape: f32[56,1], index: 13, kind: input, shape index: {}]
  %s14 = inlined_call_operand.hbm [shape: bf16[48,504], index: 14, kind: input, shape index: {}]
  %s15 = inlined_call_operand.vmem [shape: f32[48,1], index: 15, kind: input, shape index: {}]
  %s16 = inlined_call_operand.vmem [shape: f32[2,48,320], index: 16, kind: output, shape index: {}]
  %s17 = sld [smem:[#allocation0]]
  $region109: #{fsrcnn_forward.1} parent=0
    _
  %s19 = ssub.s32 1, %s17
  %s20 = scalar_select 0, %s19, %s17
  $region1: #{fsrcnn_forward.1} parent=0
    #allocation4 [shape = 'u8[14336]{0}', space=vmem, size = 0x3800, scoped, tag = 'input window, operand 2, single buffered']
    #allocation5 [shape = 's32[2]{0}', space=sflag, size = 0x8, scoped, tag = 'scoped memory for fsrcnn_forward.1']
    #allocation6 [shape = 'u8[4096]{0}', space=vmem, size = 0x1000, scoped, tag = 'input window, operand 5, single buffered']
    #allocation7 [shape = 's32[1]{0}', space=sflag, size = 0x4, scoped, tag = 'scoped memory for fsrcnn_forward.1']
    #allocation8 [shape = 'u8[49152]{0}', space=vmem, size = 0xc000, scoped, tag = 'input window, operand 14, single buffered']
    %21 = vsyncpa [#allocation5], 0
    %22 = vsyncpa [#allocation7], 0
    loop: start=0, step=1, limit=4
    $region2: #{fsrcnn_forward.1} parent=1 // loop_pre_header
      _
    $region3: #{fsrcnn_forward.1} parent=1 // loop_header
      %s24 = sphi 0, %s28
      %p25 = scmp.ge.s32.totalorder %s24, 4
      %s34 = sphi 0, %s36
      %s37 = sphi 0, %s34
      %s38 = sphi 0, %s37
      %s54 = sphi 0, %s38
      %s58 = sphi 0, %s58
      %s60 = sphi 0, %s58
      %s61 = sphi 0, %s60
      %s75 = sphi 0, %s61
      %s79 = sphi 0, %s79
      %s81 = sphi 0, %s79
      %s82 = sphi 0, %s81
      %s96 = sphi 0, %s82
      %s100 = sphi 0, %s100
      %s102 = sphi 0, %s100
      %s103 = sphi 0, %s102
      %s117 = sphi 0, %s103
      %s121 = sphi 0, %s121
      %s123 = sphi 0, %s121
      %s124 = sphi 0, %s123
      %s138 = sphi 0, %s124
      %s142 = sphi 0, %s142
      %s144 = sphi 0, %s142
      %s145 = sphi 0, %s144
      %s159 = sphi 0, %s145
      %s163 = sphi 0, %s163
      %s165 = sphi 0, %s163
      %s166 = sphi 0, %s165
      %s180 = sphi 0, %s166
      %s184 = sphi 0, %s184
      %s186 = sphi 0, %s184
      %s187 = sphi 0, %s186
      %s201 = sphi 0, %s187
      %s205 = sphi 0, %s205
      %s207 = sphi 0, %s205
      %s208 = sphi 0, %s207
      %s222 = sphi 0, %s208
      %s226 = sphi 0, %s226
      %s228 = sphi 0, %s226
      %s229 = sphi 0, %s228
      %s243 = sphi 0, %s229
      %s247 = sphi 0, %s247
      %s249 = sphi 0, %s247
      %s250 = sphi 0, %s249
      %s264 = sphi 0, %s250
      %s268 = sphi 0, %s268
      %s270 = sphi 0, %s268
      %s271 = sphi 0, %s270
      %s285 = sphi 0, %s271
      %s289 = sphi 0, %s289
      %s291 = sphi 0, %s289
      %s292 = sphi 0, %s291
      %s306 = sphi 0, %s292
      %s310 = sphi 0, %s310
      %s312 = sphi 0, %s310
      %s313 = sphi 0, %s312
      %s327 = sphi 0, %s313
      %s331 = sphi 0, %s331
      %s333 = sphi 0, %s331
      %s334 = sphi 0, %s333
      %s348 = sphi 0, %s334
      %s352 = sphi 0, %s352
      %s354 = sphi 0, %s352
      %s355 = sphi 0, %s354
      %s369 = sphi 0, %s355
      %s375 = sphi 0, %s377
      %s378 = sphi 0, %s375
      %s379 = sphi 0, %s378
      %s395 = sphi 0, %s379
    $region4: #{fsrcnn_forward.1} parent=1 // loop_header_branch
      %27 = sbr.rel (%p25) target = $region8
    $region5: #{fsrcnn_forward.1} parent=1 // loop_body
      %s29 = ssub.s32 %s24, 1
      %s30 = ssub.s32 %s24, 2
      %s31 = sadd.s32 %s24, 1
      %s32 = ssub.s32 %s24, %s31
      %p33 = scmp.eq.s32.totalorder %s32, 0
      %s35 = sadd.s32 %s34, 1
      %s36 = scalar_select %p33, %s34, %s35
      %p39 = pneg %p33
      %p40 = scmp.eq.s32.totalorder %s24, 1
      %p41 = por %p39, %p40
      %p42 = scmp.ne.s32.totalorder %s34, %s37
      %p43 = scmp.eq.s32.totalorder %s24, 0
      %p44 = por %p42, %p43
      %p45 = scmp.ne.s32.totalorder %s34, %s37
      %p46 = scmp.eq.s32.totalorder %s29, 1
      %p47 = por %p45, %p46
      %p48 = scmp.ne.s32.totalorder %s37, %s38
      %p49 = scmp.eq.s32.totalorder %s29, 0
      %p50 = por %p48, %p49
      %p51 = scmp.ne.s32.totalorder %s37, %s38
      %p52 = scmp.eq.s32.totalorder %s30, 1
      %p53 = por %p51, %p52
      %p55 = scmp.ne.s32.totalorder %s38, %s54
      %p56 = scmp.eq.s32.totalorder %s30, 0
      %p57 = por %p55, %p56
      %s59 = sadd.s32 %s58, 1
      %p62 = scmp.eq.s32.totalorder %s24, 1
      %p63 = scmp.ne.s32.totalorder %s58, %s60
      %p64 = scmp.eq.s32.totalorder %s24, 0
      %p65 = por %p63, %p64
      %p66 = scmp.ne.s32.totalorder %s58, %s60
      %p67 = scmp.eq.s32.totalorder %s29, 1
      %p68 = por %p66, %p67
      %p69 = scmp.ne.s32.totalorder %s60, %s61
      %p70 = scmp.eq.s32.totalorder %s29, 0
      %p71 = por %p69, %p70
      %p72 = scmp.ne.s32.totalorder %s60, %s61
      %p73 = scmp.eq.s32.totalorder %s30, 1
      %p74 = por %p72, %p73
      %p76 = scmp.ne.s32.totalorder %s61, %s75
      %p77 = scmp.eq.s32.totalorder %s30, 0
      %p78 = por %p76, %p77
      %s80 = sadd.s32 %s79, 1
      %p83 = scmp.eq.s32.totalorder %s24, 1
      %p84 = scmp.ne.s32.totalorder %s79, %s81
      %p85 = scmp.eq.s32.totalorder %s24, 0
      %p86 = por %p84, %p85
      %p87 = scmp.ne.s32.totalorder %s79, %s81
      %p88 = scmp.eq.s32.totalorder %s29, 1
      %p89 = por %p87, %p88
      %p90 = scmp.ne.s32.totalorder %s81, %s82
      %p91 = scmp.eq.s32.totalorder %s29, 0
      %p92 = por %p90, %p91
      %p93 = scmp.ne.s32.totalorder %s81, %s82
      %p94 = scmp.eq.s32.totalorder %s30, 1
      %p95 = por %p93, %p94
      %p97 = scmp.ne.s32.totalorder %s82, %s96
      %p98 = scmp.eq.s32.totalorder %s30, 0
      %p99 = por %p97, %p98
      %s101 = sadd.s32 %s100, 1
      %p104 = scmp.eq.s32.totalorder %s24, 1
      %p105 = scmp.ne.s32.totalorder %s100, %s102
      %p106 = scmp.eq.s32.totalorder %s24, 0
      %p107 = por %p105, %p106
      %p108 = scmp.ne.s32.totalorder %s100, %s102
      %p109 = scmp.eq.s32.totalorder %s29, 1
      %p110 = por %p108, %p109
      %p111 = scmp.ne.s32.totalorder %s102, %s103
      %p112 = scmp.eq.s32.totalorder %s29, 0
      %p113 = por %p111, %p112
      %p114 = scmp.ne.s32.totalorder %s102, %s103
      %p115 = scmp.eq.s32.totalorder %s30, 1
      %p116 = por %p114, %p115
      %p118 = scmp.ne.s32.totalorder %s103, %s117
      %p119 = scmp.eq.s32.totalorder %s30, 0
      %p120 = por %p118, %p119
      %s122 = sadd.s32 %s121, 1
      %p125 = scmp.eq.s32.totalorder %s24, 1
      %p126 = scmp.ne.s32.totalorder %s121, %s123
      %p127 = scmp.eq.s32.totalorder %s24, 0
      %p128 = por %p126, %p127
      %p129 = scmp.ne.s32.totalorder %s121, %s123
      %p130 = scmp.eq.s32.totalorder %s29, 1
      %p131 = por %p129, %p130
      %p132 = scmp.ne.s32.totalorder %s123, %s124
      %p133 = scmp.eq.s32.totalorder %s29, 0
      %p134 = por %p132, %p133
      %p135 = scmp.ne.s32.totalorder %s123, %s124
      %p136 = scmp.eq.s32.totalorder %s30, 1
      %p137 = por %p135, %p136
      %p139 = scmp.ne.s32.totalorder %s124, %s138
      %p140 = scmp.eq.s32.totalorder %s30, 0
      %p141 = por %p139, %p140
      %s143 = sadd.s32 %s142, 1
      %p146 = scmp.eq.s32.totalorder %s24, 1
      %p147 = scmp.ne.s32.totalorder %s142, %s144
      %p148 = scmp.eq.s32.totalorder %s24, 0
      %p149 = por %p147, %p148
      %p150 = scmp.ne.s32.totalorder %s142, %s144
      %p151 = scmp.eq.s32.totalorder %s29, 1
      %p152 = por %p150, %p151
      %p153 = scmp.ne.s32.totalorder %s144, %s145
      %p154 = scmp.eq.s32.totalorder %s29, 0
      %p155 = por %p153, %p154
      %p156 = scmp.ne.s32.totalorder %s144, %s145
      %p157 = scmp.eq.s32.totalorder %s30, 1
      %p158 = por %p156, %p157
      %p160 = scmp.ne.s32.totalorder %s145, %s159
      %p161 = scmp.eq.s32.totalorder %s30, 0
      %p162 = por %p160, %p161
      %s164 = sadd.s32 %s163, 1
      %p167 = scmp.eq.s32.totalorder %s24, 1
      %p168 = scmp.ne.s32.totalorder %s163, %s165
      %p169 = scmp.eq.s32.totalorder %s24, 0
      %p170 = por %p168, %p169
      %p171 = scmp.ne.s32.totalorder %s163, %s165
      %p172 = scmp.eq.s32.totalorder %s29, 1
      %p173 = por %p171, %p172
      %p174 = scmp.ne.s32.totalorder %s165, %s166
      %p175 = scmp.eq.s32.totalorder %s29, 0
      %p176 = por %p174, %p175
      %p177 = scmp.ne.s32.totalorder %s165, %s166
      %p178 = scmp.eq.s32.totalorder %s30, 1
      %p179 = por %p177, %p178
      %p181 = scmp.ne.s32.totalorder %s166, %s180
      %p182 = scmp.eq.s32.totalorder %s30, 0
      %p183 = por %p181, %p182
      %s185 = sadd.s32 %s184, 1
      %p188 = scmp.eq.s32.totalorder %s24, 1
      %p189 = scmp.ne.s32.totalorder %s184, %s186
      %p190 = scmp.eq.s32.totalorder %s24, 0
      %p191 = por %p189, %p190
      %p192 = scmp.ne.s32.totalorder %s184, %s186
      %p193 = scmp.eq.s32.totalorder %s29, 1
      %p194 = por %p192, %p193
      %p195 = scmp.ne.s32.totalorder %s186, %s187
      %p196 = scmp.eq.s32.totalorder %s29, 0
      %p197 = por %p195, %p196
      %p198 = scmp.ne.s32.totalorder %s186, %s187
      %p199 = scmp.eq.s32.totalorder %s30, 1
      %p200 = por %p198, %p199
      %p202 = scmp.ne.s32.totalorder %s187, %s201
      %p203 = scmp.eq.s32.totalorder %s30, 0
      %p204 = por %p202, %p203
      %s206 = sadd.s32 %s205, 1
      %p209 = scmp.eq.s32.totalorder %s24, 1
      %p210 = scmp.ne.s32.totalorder %s205, %s207
      %p211 = scmp.eq.s32.totalorder %s24, 0
      %p212 = por %p210, %p211
      %p213 = scmp.ne.s32.totalorder %s205, %s207
      %p214 = scmp.eq.s32.totalorder %s29, 1
      %p215 = por %p213, %p214
      %p216 = scmp.ne.s32.totalorder %s207, %s208
      %p217 = scmp.eq.s32.totalorder %s29, 0
      %p218 = por %p216, %p217
      %p219 = scmp.ne.s32.totalorder %s207, %s208
      %p220 = scmp.eq.s32.totalorder %s30, 1
      %p221 = por %p219, %p220
      %p223 = scmp.ne.s32.totalorder %s208, %s222
      %p224 = scmp.eq.s32.totalorder %s30, 0
      %p225 = por %p223, %p224
      %s227 = sadd.s32 %s226, 1
      %p230 = scmp.eq.s32.totalorder %s24, 1
      %p231 = scmp.ne.s32.totalorder %s226, %s228
      %p232 = scmp.eq.s32.totalorder %s24, 0
      %p233 = por %p231, %p232
      %p234 = scmp.ne.s32.totalorder %s226, %s228
      %p235 = scmp.eq.s32.totalorder %s29, 1
      %p236 = por %p234, %p235
      %p237 = scmp.ne.s32.totalorder %s228, %s229
      %p238 = scmp.eq.s32.totalorder %s29, 0
      %p239 = por %p237, %p238
      %p240 = scmp.ne.s32.totalorder %s228, %s229
      %p241 = scmp.eq.s32.totalorder %s30, 1
      %p242 = por %p240, %p241
      %p244 = scmp.ne.s32.totalorder %s229, %s243
      %p245 = scmp.eq.s32.totalorder %s30, 0
      %p246 = por %p244, %p245
      %s248 = sadd.s32 %s247, 1
      %p251 = scmp.eq.s32.totalorder %s24, 1
      %p252 = scmp.ne.s32.totalorder %s247, %s249
      %p253 = scmp.eq.s32.totalorder %s24, 0
      %p254 = por %p252, %p253
      %p255 = scmp.ne.s32.totalorder %s247, %s249
      %p256 = scmp.eq.s32.totalorder %s29, 1
      %p257 = por %p255, %p256
      %p258 = scmp.ne.s32.totalorder %s249, %s250
      %p259 = scmp.eq.s32.totalorder %s29, 0
      %p260 = por %p258, %p259
      %p261 = scmp.ne.s32.totalorder %s249, %s250
      %p262 = scmp.eq.s32.totalorder %s30, 1
      %p263 = por %p261, %p262
      %p265 = scmp.ne.s32.totalorder %s250, %s264
      %p266 = scmp.eq.s32.totalorder %s30, 0
      %p267 = por %p265, %p266
      %s269 = sadd.s32 %s268, 1
      %p272 = scmp.eq.s32.totalorder %s24, 1
      %p273 = scmp.ne.s32.totalorder %s268, %s270
      %p274 = scmp.eq.s32.totalorder %s24, 0
      %p275 = por %p273, %p274
      %p276 = scmp.ne.s32.totalorder %s268, %s270
      %p277 = scmp.eq.s32.totalorder %s29, 1
      %p278 = por %p276, %p277
      %p279 = scmp.ne.s32.totalorder %s270, %s271
      %p280 = scmp.eq.s32.totalorder %s29, 0
      %p281 = por %p279, %p280
      %p282 = scmp.ne.s32.totalorder %s270, %s271
      %p283 = scmp.eq.s32.totalorder %s30, 1
      %p284 = por %p282, %p283
      %p286 = scmp.ne.s32.totalorder %s271, %s285
      %p287 = scmp.eq.s32.totalorder %s30, 0
      %p288 = por %p286, %p287
      %s290 = sadd.s32 %s289, 1
      %p293 = scmp.eq.s32.totalorder %s24, 1
      %p294 = scmp.ne.s32.totalorder %s289, %s291
      %p295 = scmp.eq.s32.totalorder %s24, 0
      %p296 = por %p294, %p295
      %p297 = scmp.ne.s32.totalorder %s289, %s291
      %p298 = scmp.eq.s32.totalorder %s29, 1
      %p299 = por %p297, %p298
      %p300 = scmp.ne.s32.totalorder %s291, %s292
      %p301 = scmp.eq.s32.totalorder %s29, 0
      %p302 = por %p300, %p301
      %p303 = scmp.ne.s32.totalorder %s291, %s292
      %p304 = scmp.eq.s32.totalorder %s30, 1
      %p305 = por %p303, %p304
      %p307 = scmp.ne.s32.totalorder %s292, %s306
      %p308 = scmp.eq.s32.totalorder %s30, 0
      %p309 = por %p307, %p308
      %s311 = sadd.s32 %s310, 1
      %p314 = scmp.eq.s32.totalorder %s24, 1
      %p315 = scmp.ne.s32.totalorder %s310, %s312
      %p316 = scmp.eq.s32.totalorder %s24, 0
      %p317 = por %p315, %p316
      %p318 = scmp.ne.s32.totalorder %s310, %s312
      %p319 = scmp.eq.s32.totalorder %s29, 1
      %p320 = por %p318, %p319
      %p321 = scmp.ne.s32.totalorder %s312, %s313
      %p322 = scmp.eq.s32.totalorder %s29, 0
      %p323 = por %p321, %p322
      %p324 = scmp.ne.s32.totalorder %s312, %s313
      %p325 = scmp.eq.s32.totalorder %s30, 1
      %p326 = por %p324, %p325
      %p328 = scmp.ne.s32.totalorder %s313, %s327
      %p329 = scmp.eq.s32.totalorder %s30, 0
      %p330 = por %p328, %p329
      %s332 = sadd.s32 %s331, 1
      %p335 = scmp.eq.s32.totalorder %s24, 1
      %p336 = scmp.ne.s32.totalorder %s331, %s333
      %p337 = scmp.eq.s32.totalorder %s24, 0
      %p338 = por %p336, %p337
      %p339 = scmp.ne.s32.totalorder %s331, %s333
      %p340 = scmp.eq.s32.totalorder %s29, 1
      %p341 = por %p339, %p340
      %p342 = scmp.ne.s32.totalorder %s333, %s334
      %p343 = scmp.eq.s32.totalorder %s29, 0
      %p344 = por %p342, %p343
      %p345 = scmp.ne.s32.totalorder %s333, %s334
      %p346 = scmp.eq.s32.totalorder %s30, 1
      %p347 = por %p345, %p346
      %p349 = scmp.ne.s32.totalorder %s334, %s348
      %p350 = scmp.eq.s32.totalorder %s30, 0
      %p351 = por %p349, %p350
      %s353 = sadd.s32 %s352, 1
      %p356 = scmp.eq.s32.totalorder %s24, 1
      %p357 = scmp.ne.s32.totalorder %s352, %s354
      %p358 = scmp.eq.s32.totalorder %s24, 0
      %p359 = por %p357, %p358
      %p360 = scmp.ne.s32.totalorder %s352, %s354
      %p361 = scmp.eq.s32.totalorder %s29, 1
      %p362 = por %p360, %p361
      %p363 = scmp.ne.s32.totalorder %s354, %s355
      %p364 = scmp.eq.s32.totalorder %s29, 0
      %p365 = por %p363, %p364
      %p366 = scmp.ne.s32.totalorder %s354, %s355
      %p367 = scmp.eq.s32.totalorder %s30, 1
      %p368 = por %p366, %p367
      %p370 = scmp.ne.s32.totalorder %s355, %s369
      %p371 = scmp.eq.s32.totalorder %s30, 0
      %p372 = por %p370, %p371
      %s373 = ssub.s32 %s24, %s31
      %p374 = scmp.eq.s32.totalorder %s373, 0
      %s376 = sadd.s32 %s375, 1
      %s377 = scalar_select %p374, %s375, %s376
      %p380 = pneg %p374
      %p381 = scmp.eq.s32.totalorder %s24, 1
      %p382 = por %p380, %p381
      %p383 = scmp.ne.s32.totalorder %s375, %s378
      %p384 = scmp.eq.s32.totalorder %s24, 0
      %p385 = por %p383, %p384
      %p386 = scmp.ne.s32.totalorder %s375, %s378
      %p387 = scmp.eq.s32.totalorder %s29, 1
      %p388 = por %p386, %p387
      %p389 = scmp.ne.s32.totalorder %s378, %s379
      %p390 = scmp.eq.s32.totalorder %s29, 0
      %p391 = por %p389, %p390
      %p392 = scmp.ne.s32.totalorder %s378, %s379
      %p393 = scmp.eq.s32.totalorder %s30, 1
      %p394 = por %p392, %p393
      %p396 = scmp.ne.s32.totalorder %s379, %s395
      %p397 = scmp.eq.s32.totalorder %s30, 0
      %p398 = por %p396, %p397
      %p399 = scmp.le.s32.totalorder 1, %s24
      %p400 = scmp.lt.s32.totalorder %s24, 3
      %p401 = pnand %p399, %p400
      %p402 = pneg %p401
      // Predicated region
      $region9: #{fsrcnn_forward.1} parent=5 // pred_check
        _
      $region10: #{fsrcnn_forward.1} parent=5 // pred_check_branch
        %404 = sbr.rel (%p401) target = $region12
      $region11: #{fsrcnn_forward.1} parent=5 // pred_region
        %s405 = ssub.s32 %s24, 1
        // Predicated region
        $region13: #{fsrcnn_forward.1} parent=11 // pred_check
          %p406 = pneg %p71
        $region14: #{fsrcnn_forward.1} parent=11 // pred_check_branch
          %408 = sbr.rel (%p406) target = $region16
        $region15: #{fsrcnn_forward.1} parent=11 // pred_region
          _
        $region16: #{fsrcnn_forward.1} parent=11 // pred_fallthru
          _
        // Predicated region
        $region17: #{fsrcnn_forward.1} parent=11 // pred_check
          %p409 = pneg %p92
        $region18: #{fsrcnn_forward.1} parent=11 // pred_check_branch
          %411 = sbr.rel (%p409) target = $region20
        $region19: #{fsrcnn_forward.1} parent=11 // pred_region
          %413 = vsyncadd [#allocation5], 0
          %s414 = sshll.u32 %s2, 4
          %s415 = int_to_ptr.hbm [resolvable:$true] %s414
          %s416 = sshll.u32 [#allocation4], 4
          %s417 = int_to_ptr.vmem [resolvable:$true] %s416
          %422 = dma.hbm_to_vmem [thread:$0]  %s415, 448, %s417, [#allocation5], 64, 64, 4
        $region20: #{fsrcnn_forward.1} parent=11 // pred_fallthru
          _
        // Predicated region
        $region21: #{fsrcnn_forward.1} parent=11 // pred_check
          %p423 = pneg %p113
        $region22: #{fsrcnn_forward.1} parent=11 // pred_check_branch
          %425 = sbr.rel (%p423) target = $region24
        $region23: #{fsrcnn_forward.1} parent=11 // pred_region
          _
        $region24: #{fsrcnn_forward.1} parent=11 // pred_fallthru
          _
        // Predicated region
        $region25: #{fsrcnn_forward.1} parent=11 // pred_check
          %p426 = pneg %p134
        $region26: #{fsrcnn_forward.1} parent=11 // pred_check_branch
          %428 = sbr.rel (%p426) target = $region28
        $region27: #{fsrcnn_forward.1} parent=11 // pred_region
          _
        $region28: #{fsrcnn_forward.1} parent=11 // pred_fallthru
          _
        // Predicated region
        $region29: #{fsrcnn_forward.1} parent=11 // pred_check
          %p429 = pneg %p155
        $region30: #{fsrcnn_forward.1} parent=11 // pred_check_branch
          %431 = sbr.rel (%p429) target = $region32
        $region31: #{fsrcnn_forward.1} parent=11 // pred_region
          %433 = vsyncadd [#allocation7], 0
          %s434 = sshll.u32 %s5, 4
          %s435 = int_to_ptr.hbm [resolvable:$true] %s434
          %s436 = sshll.u32 [#allocation6], 4
          %s437 = int_to_ptr.vmem [resolvable:$true] %s436
          %442 = dma.hbm_to_vmem [thread:$0]  %s435, 128, %s437, [#allocation7], 64, 64, 4
        $region32: #{fsrcnn_forward.1} parent=11 // pred_fallthru
          _
        // Predicated region
        $region33: #{fsrcnn_forward.1} parent=11 // pred_check
          %p443 = pneg %p176
        $region34: #{fsrcnn_forward.1} parent=11 // pred_check_branch
          %445 = sbr.rel (%p443) target = $region36
        $region35: #{fsrcnn_forward.1} parent=11 // pred_region
          _
        $region36: #{fsrcnn_forward.1} parent=11 // pred_fallthru
          _
        // Predicated region
        $region37: #{fsrcnn_forward.1} parent=11 // pred_check
          %p446 = pneg %p197
        $region38: #{fsrcnn_forward.1} parent=11 // pred_check_branch
          %448 = sbr.rel (%p446) target = $region40
        $region39: #{fsrcnn_forward.1} parent=11 // pred_region
          _
        $region40: #{fsrcnn_forward.1} parent=11 // pred_fallthru
          _
        // Predicated region
        $region41: #{fsrcnn_forward.1} parent=11 // pred_check
          %p449 = pneg %p218
        $region42: #{fsrcnn_forward.1} parent=11 // pred_check_branch
          %451 = sbr.rel (%p449) target = $region44
        $region43: #{fsrcnn_forward.1} parent=11 // pred_region
          _
        $region44: #{fsrcnn_forward.1} parent=11 // pred_fallthru
          _
        // Predicated region
        $region45: #{fsrcnn_forward.1} parent=11 // pred_check
          %p452 = pneg %p239
        $region46: #{fsrcnn_forward.1} parent=11 // pred_check_branch
          %454 = sbr.rel (%p452) target = $region48
        $region47: #{fsrcnn_forward.1} parent=11 // pred_region
          _
        $region48: #{fsrcnn_forward.1} parent=11 // pred_fallthru
          _
        // Predicated region
        $region49: #{fsrcnn_forward.1} parent=11 // pred_check
          %p455 = pneg %p260
        $region50: #{fsrcnn_forward.1} parent=11 // pred_check_branch
          %457 = sbr.rel (%p455) target = $region52
        $region51: #{fsrcnn_forward.1} parent=11 // pred_region
          _
        $region52: #{fsrcnn_forward.1} parent=11 // pred_fallthru
          _
        // Predicated region
        $region53: #{fsrcnn_forward.1} parent=11 // pred_check
          %p458 = pneg %p281
        $region54: #{fsrcnn_forward.1} parent=11 // pred_check_branch
          %460 = sbr.rel (%p458) target = $region56
        $region55: #{fsrcnn_forward.1} parent=11 // pred_region
          _
        $region56: #{fsrcnn_forward.1} parent=11 // pred_fallthru
          _
        // Predicated region
        $region57: #{fsrcnn_forward.1} parent=11 // pred_check
          %p461 = pneg %p302
        $region58: #{fsrcnn_forward.1} parent=11 // pred_check_branch
          %463 = sbr.rel (%p461) target = $region60
        $region59: #{fsrcnn_forward.1} parent=11 // pred_region
          _
        $region60: #{fsrcnn_forward.1} parent=11 // pred_fallthru
          _
        // Predicated region
        $region61: #{fsrcnn_forward.1} parent=11 // pred_check
          %p464 = pneg %p323
        $region62: #{fsrcnn_forward.1} parent=11 // pred_check_branch
          %466 = sbr.rel (%p464) target = $region64
        $region63: #{fsrcnn_forward.1} parent=11 // pred_region
          _
        $region64: #{fsrcnn_forward.1} parent=11 // pred_fallthru
          _
        // Predicated region
        $region65: #{fsrcnn_forward.1} parent=11 // pred_check
          %p467 = pneg %p344
        $region66: #{fsrcnn_forward.1} parent=11 // pred_check_branch
          %469 = sbr.rel (%p467) target = $region68
        $region67: #{fsrcnn_forward.1} parent=11 // pred_region
          %471 = vsyncadd [#allocation7], 0
          %s472 = sshll.u32 %s14, 4
          %s473 = int_to_ptr.hbm [resolvable:$true] %s472
          %s474 = sshll.u32 [#allocation8], 4
          %s475 = int_to_ptr.vmem [resolvable:$true] %s474
          %480 = dma.hbm_to_vmem [thread:$0]  %s473, 1536, %s475, [#allocation7], 256, 256, 16
        $region68: #{fsrcnn_forward.1} parent=11 // pred_fallthru
          _
        // Predicated region
        $region69: #{fsrcnn_forward.1} parent=11 // pred_check
          %p481 = pneg %p365
        $region70: #{fsrcnn_forward.1} parent=11 // pred_check_branch
          %483 = sbr.rel (%p481) target = $region72
        $region71: #{fsrcnn_forward.1} parent=11 // pred_region
          _
        $region72: #{fsrcnn_forward.1} parent=11 // pred_fallthru
          _
      $region12: #{fsrcnn_forward.1} parent=5 // pred_fallthru
        _
      %p484 = scmp.lt.s32.totalorder %s24, 2
      // Predicated region
      $region73: #{fsrcnn_forward.1} parent=5 // pred_check
        %p485 = pneg %p484
      $region74: #{fsrcnn_forward.1} parent=5 // pred_check_branch
        %487 = sbr.rel (%p485) target = $region76
      $region75: #{fsrcnn_forward.1} parent=5 // pred_region
        // Predicated region
        $region77: #{fsrcnn_forward.1} parent=75 // pred_check
          %p488 = pneg %p44
        $region78: #{fsrcnn_forward.1} parent=75 // pred_check_branch
          %490 = sbr.rel (%p488) target = $region80
        $region79: #{fsrcnn_forward.1} parent=75 // pred_region
          %p491 = scmp.lt.s32.totalorder %s24, 1
          %s492 = scalar_select %p491, %s24, 1
          %s493 = smul.addr %s492, 4
          %s494 = smul.addr %s493, 2
          %s495 = scalar_lea.vmem %s0, %s494
        $region80: #{fsrcnn_forward.1} parent=75 // pred_fallthru
          _
      $region76: #{fsrcnn_forward.1} parent=5 // pred_fallthru
        _
      %p496 = scmp.le.s32.totalorder 1, %s24
      %p497 = scmp.lt.s32.totalorder %s24, 3
      %p498 = pnand %p496, %p497
      %p499 = pneg %p498
      // Predicated region
      $region81: #{fsrcnn_forward.1} parent=5 // pred_check
        _
      $region82: #{fsrcnn_forward.1} parent=5 // pred_check_branch
        %501 = sbr.rel (%p498) target = $region84
      $region83: #{fsrcnn_forward.1} parent=5 // pred_region
        %s502 = ssub.s32 %s24, 1
        // Predicated region
        $region85: #{fsrcnn_forward.1} parent=83 // pred_check
          %p503 = pneg %p92
        $region86: #{fsrcnn_forward.1} parent=83 // pred_check_branch
          %505 = sbr.rel (%p503) target = $region88
        $region87: #{fsrcnn_forward.1} parent=83 // pred_region
          %507 = dma.done [#allocation5], 448
        $region88: #{fsrcnn_forward.1} parent=83 // pred_fallthru
          _
        // Predicated region
        $region89: #{fsrcnn_forward.1} parent=83 // pred_check
          %p508 = pneg %p155
        $region90: #{fsrcnn_forward.1} parent=83 // pred_check_branch
          %510 = sbr.rel (%p508) target = $region92
        $region91: #{fsrcnn_forward.1} parent=83 // pred_region
          %512 = dma.done [#allocation7], 128
        $region92: #{fsrcnn_forward.1} parent=83 // pred_fallthru
          _
        // Predicated region
        $region93: #{fsrcnn_forward.1} parent=83 // pred_check
          %p513 = pneg %p344
        $region94: #{fsrcnn_forward.1} parent=83 // pred_check_branch
          %515 = sbr.rel (%p513) target = $region96
        $region95: #{fsrcnn_forward.1} parent=83 // pred_region
          %517 = dma.done [#allocation7], 1536
        $region96: #{fsrcnn_forward.1} parent=83 // pred_fallthru
          _
        %p518 = scmp.lt.s32.totalorder %s29, 1
        %s519 = scalar_select %p518, %s29, 1
        %s520 = smul.addr %s519, 4
        %s521 = smul.addr %s520, 2
        %s522 = scalar_lea.vmem %s0, %s521
        %p523 = pneg %p50
        %p524 = pneg %p47
        %p525 = pneg %p71
        %p526 = pneg %p68
        %p527 = pneg %p92
        %p528 = pneg %p89
        %p529 = pneg %p113
        %p530 = pneg %p110
        %p531 = pneg %p134
        %p532 = pneg %p131
        %p533 = pneg %p155
        %p534 = pneg %p152
        %p535 = pneg %p176
        %p536 = pneg %p173
        %p537 = pneg %p197
        %p538 = pneg %p194
        %p539 = pneg %p218
        %p540 = pneg %p215
        %p541 = pneg %p239
        %p542 = pneg %p236
        %p543 = pneg %p260
        %p544 = pneg %p257
        %p545 = pneg %p281
        %p546 = pneg %p278
        %p547 = pneg %p302
        %p548 = pneg %p299
        %p549 = pneg %p323
        %p550 = pneg %p320
        %p551 = pneg %p344
        %p552 = pneg %p341
        %p553 = pneg %p365
        %p554 = pneg %p362
        %p555 = pneg %p391
        %p556 = pneg %p388
        %p557 = scmp.lt.s32.totalorder %s29, 1
        %s558 = scalar_select %p557, %s29, 1
        %s559 = smul.addr %s558, 18
        %s560 = smul.addr %s559, 8
        %s561 = scalar_lea.vmem %s16, %s560
        %p562 = scmp.lt.s32.totalorder %s29, 1
        %s563 = scalar_select %p562, %s29, 1
        %s564 = smul.addr %s563, 4
        %s565 = smul.addr %s564, 2
        %s566 = scalar_lea.vmem %s0, %s565
        %p567 = scmp.lt.s32.totalorder %s29, 1
        %s568 = scalar_select %p567, %s29, 1
        %s569 = smul.addr %s568, 18
        %s570 = smul.addr %s569, 8
        %s571 = scalar_lea.vmem %s16, %s570
        %v573 = vld [vmem:[%s1] sm:$0x7]
        %vm574 = vcmask 486400
        %575 = vst.msk [vmem:[#allocation2] sm:$0xf] %vm574, 0
        %vm576 = vcmask 484352
        %577 = vst.msk [vmem:[#allocation2 + $0x10] sm:$0x3] %vm576, 0
        %vm578 = vcmask 1044448
        %vm579 = vcmask 457732
        %vm580 = vmor %vm579, %vm578
        %581 = vst.msk [vmem:[#allocation2 + $0x8] sm:$0xff] %vm580, 0
        %vm582 = vcmask 1042400
        %vm583 = vcmask 455684
        %vm584 = vmor %vm583, %vm582
        %585 = vst.msk [vmem:[#allocation2 + $0x18] sm:$0x33] %vm584, 0
        %586 = vst.msk [vmem:[#allocation3] sm:$0xf] %vm574, 0
        %587 = vst.msk [vmem:[#allocation3 + $0x10] sm:$0xf] %vm574, 0
        %588 = vst.msk [vmem:[#allocation3 + $0x20] sm:$0xf] %vm574, 0
        %589 = vst.msk [vmem:[#allocation3 + $0x30] sm:$0xf] %vm574, 0
        %590 = vst.msk [vmem:[#allocation3 + $0x40] sm:$0xf] %vm574, 0
        %591 = vst.msk [vmem:[#allocation3 + $0x50] sm:$0xf] %vm574, 0
        %592 = vst.msk [vmem:[#allocation3 + $0x60] sm:$0xf] %vm574, 0
        %593 = vst.msk [vmem:[#allocation3 + $0x8] sm:$0xff] %vm580, 0
        %594 = vst.msk [vmem:[#allocation3 + $0x18] sm:$0xff] %vm580, 0
        %595 = vst.msk [vmem:[#allocation3 + $0x28] sm:$0xff] %vm580, 0
        %596 = vst.msk [vmem:[#allocation3 + $0x38] sm:$0xff] %vm580, 0
        %597 = vst.msk [vmem:[#allocation3 + $0x48] sm:$0xff] %vm580, 0
        %598 = vst.msk [vmem:[#allocation3 + $0x58] sm:$0xff] %vm580, 0
        %599 = vst.msk [vmem:[#allocation3 + $0x68] sm:$0xff] %vm580, 0
        %v600 = vld [vmem:[#allocation4] sm:$0xf]
        %v601 = vld [vmem:[#allocation4 + $0x4] sm:$0xf]
        %v602 = vld [vmem:[#allocation4 + $0x8] sm:$0xf]
        %v603 = vld [vmem:[#allocation4 + $0xc] sm:$0xf]
        %v604 = vld [vmem:[#allocation4 + $0x10] sm:$0xf]
        %v605 = vld [vmem:[#allocation4 + $0x14] sm:$0xf]
        %v606 = vld [vmem:[#allocation4 + $0x18] sm:$0xf]
        %v607 = vld [vmem:[%s566] sm:$0x3f]
        %v608 = vld [vmem:[%s566] sm:$0xff]
        %610 = vst [vmem:[#allocation1] ss:$4 sm:$0xff] %v607
        %v611 = vld.sshfl [vmem:[#allocation1] sm:$0xff pattern:$0x73625140]
        %v612 = vld.sshfl [vmem:[#allocation1 + $0x8] sm:$0xff pattern:$0x73625140]
        %v613 = vld.sshfl [vmem:[#allocation1 + $0x10] sm:$0xff pattern:$0x73625140]
        %617 = vst [vmem:[#allocation1] ss:$4 sm:$0xff] %v607
        %v618 = vld.sshfl [vmem:[#allocation1] sm:$0xff pattern:$0x73625140]
        %v619 = vld.sshfl [vmem:[#allocation1 + $0x8] sm:$0xff pattern:$0x73625140]
        %v620 = vld.sshfl [vmem:[#allocation1 + $0x10] sm:$0xff pattern:$0x73625140]
        %v621 = vshrl.u32 %v618, 16
        %v623 = vrot.slane %v621, 6
        %v624 = vshll.u32 %v618, 16
        %v626 = vrot.slane %v624, 7
        %v627 = vor.u32 %v623, %v626
        %v628 = vshrl.u32 %v619, 16
        %v630 = vrot.slane %v628, 6
        %v631 = vshll.u32 %v619, 16
        %v633 = vrot.slane %v631, 7
        %v634 = vor.u32 %v630, %v633
        %v635 = vshrl.u32 %v620, 16
        %v637 = vrot.slane %v635, 6
        %v638 = vshll.u32 %v620, 16
        %v640 = vrot.slane %v638, 7
        %v641 = vor.u32 %v637, %v640
        %642 = vrot.lane.b32.xlu0 %v627, 127
        %v643 = vpop.permute.xlu0 %642
        %644 = vrot.lane.b32.xlu0 %v634, 127
        %v645 = vpop.permute.xlu0 %644
        %646 = vrot.lane.b32.xlu0 %v641, 127
        %v647 = vpop.permute.xlu0 %646
        %vm648 = vcmask 1039360
        %v649 = vsel %vm648, %v643, %v645
        %v650 = vsel %vm648, %v645, %v647
        %654 = vst [vmem:[#allocation1] ss:$4 sm:$0xff] %v607
        %v655 = vld.sshfl [vmem:[#allocation1] sm:$0xff pattern:$0x73625140]
        %v657 = vld.sshfl [vmem:[#allocation1 + $0x8] sm:$0xff pattern:$0x73625140]
        %v659 = vld.sshfl [vmem:[#allocation1 + $0x10] sm:$0xff pattern:$0x73625140]
        %v661 = vrot.slane %v655, 5
        %v662 = vrot.slane %v657, 5
        %v663 = vrot.slane %v659, 5
        %664 = vrot.lane.b32.xlu0 %v661, 126
        %v665 = vpop.permute.xlu0 %664
        %666 = vrot.lane.b32.xlu0 %v662, 126
        %v667 = vpop.permute.xlu0 %666
        %668 = vrot.lane.b32.xlu0 %v663, 126
        %v669 = vpop.permute.xlu0 %668
        %vm670 = vcmask 1031168
        %v671 = vsel %vm670, %v665, %v667
        %v672 = vsel %vm670, %v667, %v669
        %673 = vst [vmem:[#allocation1] ss:$4 sm:$0xff] %v607
        %v674 = vld.sshfl [vmem:[#allocation1] sm:$0xff pattern:$0x73625140]
        %v675 = vld.sshfl [vmem:[#allocation1 + $0x8] sm:$0xff pattern:$0x73625140]
        %v676 = vld.sshfl [vmem:[#allocation1 + $0x10] sm:$0xff pattern:$0x73625140]
        %v677 = vshrl.u32 %v674, 16
        %v679 = vrot.slane %v677, 3
        %v680 = vshll.u32 %v674, 16
        %v682 = vrot.slane %v680, 4
        %v683 = vor.u32 %v679, %v682
        %v684 = vshrl.u32 %v675, 16
        %v686 = vrot.slane %v684, 3
        %v687 = vshll.u32 %v675, 16
        %v689 = vrot.slane %v687, 4
        %v690 = vor.u32 %v686, %v689
        %v691 = vshrl.u32 %v676, 16
        %v693 = vrot.slane %v691, 3
        %v694 = vshll.u32 %v676, 16
        %v696 = vrot.slane %v694, 4
        %v697 = vor.u32 %v693, %v696
        %698 = vrot.lane.b32.xlu0 %v683, 125
        %v699 = vpop.permute.xlu0 %698
        %700 = vrot.lane.b32.xlu0 %v690, 125
        %v701 = vpop.permute.xlu0 %700
        %702 = vrot.lane.b32.xlu0 %v697, 125
        %v703 = vpop.permute.xlu0 %702
        %vm704 = vcmask 1022976
        %v705 = vsel %vm704, %v699, %v701
        %v706 = vsel %vm704, %v701, %v703
        %s710 = scalar_lea.vmem [#allocation1], 3
        %711 = vst [vmem:[%s710] ss:$4 sm:$0xff] %v607
        %v712 = vld.sshfl [vmem:[#allocation1] sm:$0xff pattern:$0x73625140]
        %v714 = vld.sshfl [vmem:[#allocation1 + $0x8] sm:$0xff pattern:$0x73625140]
        %v716 = vld.sshfl [vmem:[#allocation1 + $0x10] sm:$0xff pattern:$0x73625140]
        %718 = vrot.lane.b32.xlu0 %v712, 124
        %v719 = vpop.permute.xlu0 %718
        %720 = vrot.lane.b32.xlu0 %v714, 124
        %v721 = vpop.permute.xlu0 %720
        %722 = vrot.lane.b32.xlu0 %v716, 124
        %v723 = vpop.permute.xlu0 %722
        %vm724 = vcmask 1014784
        %v725 = vsel %vm724, %v719, %v721
        %v726 = vsel %vm724, %v721, %v723
        %727 = vst [vmem:[#allocation1] ss:$4 sm:$0xff] %v607
        %v728 = vld.sshfl [vmem:[#allocation1] sm:$0xff pattern:$0x73625140]
        %v729 = vld.sshfl [vmem:[#allocation1 + $0x8] sm:$0xff pattern:$0x73625140]
        %v730 = vld.sshfl [vmem:[#allocation1 + $0x10] sm:$0xff pattern:$0x73625140]
        %v731 = vshll.u32 %v728, 16
        %v733 = vrot.slane %v731, 1
        %v734 = vshll.u32 %v729, 16
        %v736 = vrot.slane %v734, 1
        %v737 = vshll.u32 %v730, 16
        %v739 = vrot.slane %v737, 1
        %v740 = vshrl.u32 %v728, 16
        %v742 = vor.u32 %v740, %v733
        %v743 = vshrl.u32 %v729, 16
        %v745 = vor.u32 %v743, %v736
        %v746 = vshrl.u32 %v730, 16
        %v748 = vor.u32 %v746, %v739
        %749 = vrot.lane.b32.xlu0 %v733, 108
        %v750 = vpop.permute.xlu0 %749
        %751 = vrot.lane.b32.xlu0 %v736, 108
        %v752 = vpop.permute.xlu0 %751
        %753 = vrot.lane.b32.xlu0 %v739, 108
        %v754 = vpop.permute.xlu0 %753
        %755 = vrot.lane.b32.xlu0 %v742, 108
        %v756 = vpop.permute.xlu0 %755
        %757 = vrot.lane.b32.xlu0 %v745, 108
        %v758 = vpop.permute.xlu0 %757
        %759 = vrot.lane.b32.xlu0 %v748, 108
        %v760 = vpop.permute.xlu0 %759
        %vm761 = vcmask 883712
        %v762 = vsel %vm761, %v750, %v752
        %v763 = vsel %vm761, %v752, %v754
        %v764 = vsel %vm761, %v756, %v758
        %v765 = vsel %vm761, %v758, %v760
        %769 = vst [vmem:[#allocation1] ss:$4 sm:$0xff] %v607
        %v770 = vld.sshfl [vmem:[#allocation1] sm:$0xff pattern:$0x73625140]
        %v772 = vld.sshfl [vmem:[#allocation1 + $0x8] sm:$0xff pattern:$0x73625140]
        %v774 = vld.sshfl [vmem:[#allocation1 + $0x10] sm:$0xff pattern:$0x73625140]
        %v776 = vrot.slane %v770, 7
        %v777 = vrot.slane %v772, 7
        %v778 = vrot.slane %v774, 7
        %779 = vrot.lane.b32.xlu0 %v776, 107
        %v780 = vpop.permute.xlu0 %779
        %781 = vrot.lane.b32.xlu0 %v777, 107
        %v782 = vpop.permute.xlu0 %781
        %783 = vrot.lane.b32.xlu0 %v778, 107
        %v784 = vpop.permute.xlu0 %783
        %vm785 = vcmask 875520
        %v786 = vsel %vm785, %v780, %v782
        %v787 = vsel %vm785, %v782, %v784
        %788 = vst [vmem:[#allocation1] ss:$4 sm:$0xff] %v607
        %v789 = vld.sshfl [vmem:[#allocation1] sm:$0xff pattern:$0x73625140]
        %v790 = vld.sshfl [vmem:[#allocation1 + $0x8] sm:$0xff pattern:$0x73625140]
        %v791 = vld.sshfl [vmem:[#allocation1 + $0x10] sm:$0xff pattern:$0x73625140]
        %v792 = vshrl.u32 %v789, 16
        %v794 = vrot.slane %v792, 5
        %v795 = vshll.u32 %v789, 16
        %v797 = vrot.slane %v795, 6
        %v798 = vor.u32 %v794, %v797
        %v799 = vshrl.u32 %v790, 16
        %v801 = vrot.slane %v799, 5
        %v802 = vshll.u32 %v790, 16
        %v804 = vrot.slane %v802, 6
        %v805 = vor.u32 %v801, %v804
        %v806 = vshrl.u32 %v791, 16
        %v808 = vrot.slane %v806, 5
        %v809 = vshll.u32 %v791, 16
        %v811 = vrot.slane %v809, 6
        %v812 = vor.u32 %v808, %v811
        %813 = vrot.lane.b32.xlu0 %v798, 106
        %v814 = vpop.permute.xlu0 %813
        %815 = vrot.lane.b32.xlu0 %v805, 106
        %v816 = vpop.permute.xlu0 %815
        %817 = vrot.lane.b32.xlu0 %v812, 106
        %v818 = vpop.permute.xlu0 %817
        %vm819 = vcmask 867328
        %v820 = vsel %vm819, %v814, %v816
        %v821 = vsel %vm819, %v816, %v818
        %s825 = scalar_lea.vmem [#allocation1], 2
        %826 = vst [vmem:[%s825] ss:$4 sm:$0xff] %v607
        %v827 = vld.sshfl [vmem:[#allocation1] sm:$0xff pattern:$0x73625140]
        %v829 = vld.sshfl [vmem:[#allocation1 + $0x8] sm:$0xff pattern:$0x73625140]
        %v831 = vld.sshfl [vmem:[#allocation1 + $0x10] sm:$0xff pattern:$0x73625140]
        %833 = vrot.lane.b32.xlu0 %v827, 105
        %v834 = vpop.permute.xlu0 %833
        %835 = vrot.lane.b32.xlu0 %v829, 105
        %v836 = vpop.permute.xlu0 %835
        %837 = vrot.lane.b32.xlu0 %v831, 105
        %v838 = vpop.permute.xlu0 %837
        %vm839 = vcmask 859136
        %v840 = vsel %vm839, %v834, %v836
        %v841 = vsel %vm839, %v836, %v838
        %842 = vst [vmem:[#allocation1] ss:$4 sm:$0xff] %v607
        %v843 = vld.sshfl [vmem:[#allocation1] sm:$0xff pattern:$0x73625140]
        %v844 = vld.sshfl [vmem:[#allocation1 + $0x8] sm:$0xff pattern:$0x73625140]
        %v845 = vld.sshfl [vmem:[#allocation1 + $0x10] sm:$0xff pattern:$0x73625140]
        %v846 = vshrl.u32 %v843, 16
        %v848 = vrot.slane %v846, 2
        %v849 = vshll.u32 %v843, 16
        %v851 = vrot.slane %v849, 3
        %v852 = vor.u32 %v848, %v851
        %v853 = vshrl.u32 %v844, 16
        %v855 = vrot.slane %v853, 2
        %v856 = vshll.u32 %v844, 16
        %v858 = vrot.slane %v856, 3
        %v859 = vor.u32 %v855, %v858
        %v860 = vshrl.u32 %v845, 16
        %v862 = vrot.slane %v860, 2
        %v863 = vshll.u32 %v845, 16
        %v865 = vrot.slane %v863, 3
        %v866 = vor.u32 %v862, %v865
        %867 = vrot.lane.b32.xlu0 %v852, 104
        %v868 = vpop.permute.xlu0 %867
        %869 = vrot.lane.b32.xlu0 %v859, 104
        %v870 = vpop.permute.xlu0 %869
        %871 = vrot.lane.b32.xlu0 %v866, 104
        %v872 = vpop.permute.xlu0 %871
        %vm873 = vcmask 850944
        %v874 = vsel %vm873, %v868, %v870
        %v875 = vsel %vm873, %v870, %v872
        %879 = vst [vmem:[#allocation1] ss:$4 sm:$0xff] %v607
        %v880 = vld.sshfl [vmem:[#allocation1] sm:$0xff pattern:$0x73625140]
        %v882 = vld.sshfl [vmem:[#allocation1 + $0x8] sm:$0xff pattern:$0x73625140]
        %v884 = vld.sshfl [vmem:[#allocation1 + $0x10] sm:$0xff pattern:$0x73625140]
        %v886 = vrot.slane %v880, 1
        %v887 = vrot.slane %v882, 1
        %v888 = vrot.slane %v884, 1
        %889 = vrot.lane.b32.xlu0 %v886, 88
        %v890 = vpop.permute.xlu0 %889
        %891 = vrot.lane.b32.xlu0 %v887, 88
        %v892 = vpop.permute.xlu0 %891
        %893 = vrot.lane.b32.xlu0 %v888, 88
        %v894 = vpop.permute.xlu0 %893
        %vm895 = vcmask 719872
        %v896 = vsel %vm895, %v890, %v892
        %v897 = vsel %vm895, %v892, %v894
        %901 = vst [vmem:[#allocation1] ss:$4 sm:$0xff] %v607
        %v902 = vld.sshfl [vmem:[#allocation1] sm:$0xff pattern:$0x73625140]
        %v903 = vld.sshfl [vmem:[#allocation1 + $0x8] sm:$0xff pattern:$0x73625140]
        %v904 = vld.sshfl [vmem:[#allocation1 + $0x10] sm:$0xff pattern:$0x73625140]
        %v905 = vshrl.u32 %v902, 16
        %v907 = vrot.slane %v905, 7
        %v908 = vshll.u32 %v902, 16
        %v910 = vor.u32 %v907, %v908
        %v911 = vshrl.u32 %v903, 16
        %v913 = vrot.slane %v911, 7
        %v914 = vshll.u32 %v903, 16
        %v916 = vor.u32 %v913, %v914
        %v917 = vshrl.u32 %v904, 16
        %v919 = vrot.slane %v917, 7
        %v920 = vshll.u32 %v904, 16
        %v922 = vor.u32 %v919, %v920
        %923 = vrot.lane.b32.xlu0 %v910, 87
        %v924 = vpop.permute.xlu0 %923
        %925 = vrot.lane.b32.xlu0 %v916, 87
        %v926 = vpop.permute.xlu0 %925
        %927 = vrot.lane.b32.xlu0 %v922, 87
        %v928 = vpop.permute.xlu0 %927
        %vm929 = vcmask 711680
        %v930 = vsel %vm929, %v924, %v926
        %v931 = vsel %vm929, %v926, %v928
        %s935 = scalar_lea.vmem [#allocation1], 1
        %936 = vst [vmem:[%s935] ss:$4 sm:$0xff] %v607
        %v937 = vld.sshfl [vmem:[#allocation1] sm:$0xff pattern:$0x73625140]
        %v939 = vld.sshfl [vmem:[#allocation1 + $0x8] sm:$0xff pattern:$0x73625140]
        %v941 = vld.sshfl [vmem:[#allocation1 + $0x10] sm:$0xff pattern:$0x73625140]
        %943 = vrot.lane.b32.xlu0 %v937, 86
        %v944 = vpop.permute.xlu0 %943
        %945 = vrot.lane.b32.xlu0 %v939, 86
        %v946 = vpop.permute.xlu0 %945
        %947 = vrot.lane.b32.xlu0 %v941, 86
        %v948 = vpop.permute.xlu0 %947
        %vm949 = vcmask 703488
        %v950 = vsel %vm949, %v944, %v946
        %v951 = vsel %vm949, %v946, %v948
        %952 = vst [vmem:[#allocation1] ss:$4 sm:$0xff] %v607
        %v953 = vld.sshfl [vmem:[#allocation1] sm:$0xff pattern:$0x73625140]
        %v954 = vld.sshfl [vmem:[#allocation1 + $0x8] sm:$0xff pattern:$0x73625140]
        %v955 = vld.sshfl [vmem:[#allocation1 + $0x10] sm:$0xff pattern:$0x73625140]
        %v956 = vshrl.u32 %v953, 16
        %v958 = vrot.slane %v956, 4
        %v959 = vshll.u32 %v953, 16
        %v961 = vrot.slane %v959, 5
        %v962 = vor.u32 %v958, %v961
        %v963 = vshrl.u32 %v954, 16
        %v965 = vrot.slane %v963, 4
        %v966 = vshll.u32 %v954, 16
        %v968 = vrot.slane %v966, 5
        %v969 = vor.u32 %v965, %v968
        %v970 = vshrl.u32 %v955, 16
        %v972 = vrot.slane %v970, 4
        %v973 = vshll.u32 %v955, 16
        %v975 = vrot.slane %v973, 5
        %v976 = vor.u32 %v972, %v975
        %977 = vrot.lane.b32.xlu0 %v962, 85
        %v978 = vpop.permute.xlu0 %977
        %979 = vrot.lane.b32.xlu0 %v969, 85
        %v980 = vpop.permute.xlu0 %979
        %981 = vrot.lane.b32.xlu0 %v976, 85
        %v982 = vpop.permute.xlu0 %981
        %vm983 = vcmask 695296
        %v984 = vsel %vm983, %v978, %v980
        %v985 = vsel %vm983, %v980, %v982
        %989 = vst [vmem:[#allocation1] ss:$4 sm:$0xff] %v607
        %v990 = vld.sshfl [vmem:[#allocation1] sm:$0xff pattern:$0x73625140]
        %v992 = vld.sshfl [vmem:[#allocation1 + $0x8] sm:$0xff pattern:$0x73625140]
        %v994 = vld.sshfl [vmem:[#allocation1 + $0x10] sm:$0xff pattern:$0x73625140]
        %v996 = vrot.slane %v990, 3
        %v997 = vrot.slane %v992, 3
        %v998 = vrot.slane %v994, 3
        %999 = vrot.lane.b32.xlu0 %v996, 84
        %v1000 = vpop.permute.xlu0 %999
        %1001 = vrot.lane.b32.xlu0 %v997, 84
        %v1002 = vpop.permute.xlu0 %1001
        %1003 = vrot.lane.b32.xlu0 %v998, 84
        %v1004 = vpop.permute.xlu0 %1003
        %vm1005 = vcmask 687104
        %v1006 = vsel %vm1005, %v1000, %v1002
        %v1007 = vsel %vm1005, %v1002, %v1004
        %1009 = vst [vmem:[#allocation1] ss:$4 sm:$0xff] %v608
        %v1010 = vld.sshfl [vmem:[#allocation1] sm:$0xff pattern:$0x73625140]
        %v1011 = vld.sshfl [vmem:[#allocation1 + $0x8] sm:$0xff pattern:$0x73625140]
        %v1012 = vld.sshfl [vmem:[#allocation1 + $0x10] sm:$0xff pattern:$0x73625140]
        %v1013 = vld.sshfl [vmem:[#allocation1 + $0x18] sm:$0xff pattern:$0x73625140]
        %v1014 = vshrl.u32 %v1010, 16
        %v1016 = vrot.slane %v1014, 1
        %v1017 = vshll.u32 %v1010, 16
        %v1019 = vrot.slane %v1017, 2
        %v1020 = vor.u32 %v1016, %v1019
        %v1021 = vshrl.u32 %v1011, 16
        %v1023 = vrot.slane %v1021, 1
        %v1024 = vshll.u32 %v1011, 16
        %v1026 = vrot.slane %v1024, 2
        %v1027 = vor.u32 %v1023, %v1026
        %v1028 = vshrl.u32 %v1012, 16
        %v1030 = vrot.slane %v1028, 1
        %v1031 = vshll.u32 %v1012, 16
        %v1033 = vrot.slane %v1031, 2
        %v1034 = vor.u32 %v1030, %v1033
        %v1035 = vshrl.u32 %v1013, 16
        %v1037 = vrot.slane %v1035, 1
        %v1038 = vshll.u32 %v1013, 16
        %v1040 = vrot.slane %v1038, 2
        %v1041 = vor.u32 %v1037, %v1040
        %1042 = vrot.lane.b32.xlu0 %v1020, 68
        %v1043 = vpop.permute.xlu0 %1042
        %1044 = vrot.lane.b32.xlu0 %v1027, 68
        %v1045 = vpop.permute.xlu0 %1044
        %1046 = vrot.lane.b32.xlu0 %v1034, 68
        %v1047 = vpop.permute.xlu0 %1046
        %1048 = vrot.lane.b32.xlu0 %v1041, 68
        %v1049 = vpop.permute.xlu0 %1048
        %vm1050 = vcmask 556032
        %v1051 = vsel %vm1050, %v1043, %v1045
        %v1052 = vsel %vm1050, %v1045, %v1047
        %v1053 = vsel %vm1050, %v1047, %v1049
        %vm1057 = vcmask 1041408
        %vm1058 = vsmask.f32 1280
        %vm1059 = vmand %vm1057, %vm1058
        %v1060 = vsel %vm1059, %v611, %v649
        %v1061 = vsel %vm1059, %v612, %v650
        %v1062 = vsel %vm1059, %v613, %v647
        %vm1063 = vcmask 1042432
        %v1066 = vsel %vm1063, %v1060, %v671
        %v1070 = vsel %vm1063, %v1061, %v672
        %v1074 = vsel %vm1063, %v1062, %v669
        %vm1076 = vcmask 1044480
        %vm1077 = vsmask.f32 4352
        %vm1078 = vmand %vm1076, %vm1077
        %v1079 = vsel %vm1078, %v1066, %v705
        %v1080 = vsel %vm1078, %v1070, %v706
        %v1081 = vsel %vm1078, %v1074, %v703
        %vm1082 = vcmask 1045504
        %v1085 = vsel %vm1082, %v1079, %v725
        %v1089 = vsel %vm1082, %v1080, %v726
        %v1093 = vsel %vm1082, %v1081, %v723
        %vm1095 = vcmask 1047552
        %vm1096 = vsmask.f32 7424
        %vm1097 = vmand %vm1095, %vm1096
        %v1098 = vsel %vm1097, %v1085, %v762
        %v1099 = vsel %vm1097, %v1089, %v763
        %v1100 = vsel %vm1097, %v1093, %v754
        %vm1101 = vcmask 1040384
        %v1104 = vsel %vm1101, %v764, %v786
        %v1108 = vsel %vm1101, %v765, %v787
        %v1112 = vsel %vm1101, %v760, %v784
        %vm1114 = vcmask 1042432
        %vm1115 = vsmask.f32 2304
        %vm1116 = vmand %vm1114, %vm1115
        %v1117 = vsel %vm1116, %v1104, %v820
        %v1118 = vsel %vm1116, %v1108, %v821
        %v1119 = vsel %vm1116, %v1112, %v818
        %vm1120 = vcmask 1043456
        %v1123 = vsel %vm1120, %v1117, %v840
        %v1127 = vsel %vm1120, %v1118, %v841
        %v1131 = vsel %vm1120, %v1119, %v838
        %vm1133 = vcmask 1045504
        %vm1134 = vsmask.f32 5376
        %vm1135 = vmand %vm1133, %vm1134
        %v1136 = vsel %vm1135, %v1123, %v874
        %v1137 = vsel %vm1135, %v1127, %v875
        %v1138 = vsel %vm1135, %v1131, %v872
        %vm1139 = vcmask 1046528
        %v1142 = vsel %vm1139, %v1136, %v896
        %v1145 = vsel %vm1139, %v1137, %v897
        %v1148 = vsel %vm1139, %v1138, %v894
        %vm1149 = vcmask 1040384
        %vm1150 = vsmask.f32 256
        %vm1151 = vmand %vm1149, %vm1150
        %v1152 = vsel %vm1151, %v896, %v930
        %v1153 = vsel %vm1151, %v897, %v931
        %v1154 = vsel %vm1151, %v894, %v928
        %vm1155 = vcmask 1041408
        %v1158 = vsel %vm1155, %v1152, %v950
        %v1162 = vsel %vm1155, %v1153, %v951
        %v1166 = vsel %vm1155, %v1154, %v948
        %vm1168 = vcmask 1043456
        %vm1169 = vsmask.f32 3328
        %vm1170 = vmand %vm1168, %vm1169
        %v1171 = vsel %vm1170, %v1158, %v984
        %v1172 = vsel %vm1170, %v1162, %v985
        %v1173 = vsel %vm1170, %v1166, %v982
        %vm1174 = vcmask 1044480
        %v1177 = vsel %vm1174, %v1171, %v1006
        %v1181 = vsel %vm1174, %v1172, %v1007
        %v1185 = vsel %vm1174, %v1173, %v1004
        %vm1187 = vcmask 1046528
        %vm1188 = vsmask.f32 6400
        %vm1189 = vmand %vm1187, %vm1188
        %v1190 = vsel %vm1189, %v1177, %v1051
        %v1191 = vsel %vm1189, %v1181, %v1052
        %v1192 = vsel %vm1189, %v1185, %v1053
        %1193 = vst [vmem:[#allocation1] ss:$4 sm:$0xff] %v608
        %v1194 = vld.sshfl [vmem:[#allocation1] sm:$0xff pattern:$0x73625140]
        %v1195 = vld.sshfl [vmem:[#allocation1 + $0x8] sm:$0xff pattern:$0x73625140]
        %v1196 = vld.sshfl [vmem:[#allocation1 + $0x10] sm:$0xff pattern:$0x73625140]
        %v1197 = vld.sshfl [vmem:[#allocation1 + $0x18] sm:$0xff pattern:$0x73625140]
        %1202 = vst [vmem:[#allocation1] ss:$4 sm:$0xff] %v608
        %v1203 = vld.sshfl [vmem:[#allocation1] sm:$0xff pattern:$0x73625140]
        %v1204 = vld.sshfl [vmem:[#allocation1 + $0x8] sm:$0xff pattern:$0x73625140]
        %v1205 = vld.sshfl [vmem:[#allocation1 + $0x10] sm:$0xff pattern:$0x73625140]
        %v1206 = vld.sshfl [vmem:[#allocation1 + $0x18] sm:$0xff pattern:$0x73625140]
        %v1207 = vshrl.u32 %v1203, 16
        %v1209 = vrot.slane %v1207, 6
        %v1210 = vshll.u32 %v1203, 16
        %v1212 = vrot.slane %v1210, 7
        %v1213 = vor.u32 %v1209, %v1212
        %v1214 = vshrl.u32 %v1204, 16
        %v1216 = vrot.slane %v1214, 6
        %v1217 = vshll.u32 %v1204, 16
        %v1219 = vrot.slane %v1217, 7
        %v1220 = vor.u32 %v1216, %v1219
        %v1221 = vshrl.u32 %v1205, 16
        %v1223 = vrot.slane %v1221, 6
        %v1224 = vshll.u32 %v1205, 16
        %v1226 = vrot.slane %v1224, 7
        %v1227 = vor.u32 %v1223, %v1226
        %v1228 = vshrl.u32 %v1206, 16
        %v1230 = vrot.slane %v1228, 6
        %v1231 = vshll.u32 %v1206, 16
        %v1233 = vrot.slane %v1231, 7
        %v1234 = vor.u32 %v1230, %v1233
        %1235 = vrot.lane.b32.xlu0 %v1213, 127
        %v1236 = vpop.permute.xlu0 %1235
        %1237 = vrot.lane.b32.xlu0 %v1220, 127
        %v1238 = vpop.permute.xlu0 %1237
        %1239 = vrot.lane.b32.xlu0 %v1227, 127
        %v1240 = vpop.permute.xlu0 %1239
        %1241 = vrot.lane.b32.xlu0 %v1234, 127
        %v1242 = vpop.permute.xlu0 %1241
        %v1243 = vsel %vm648, %v1236, %v1238
        %v1244 = vsel %vm648, %v1238, %v1240
        %v1245 = vsel %vm648, %v1240, %v1242
        %1250 = vst [vmem:[#allocation1] ss:$4 sm:$0xff] %v608
        %v1251 = vld.sshfl [vmem:[#allocation1] sm:$0xff pattern:$0x73625140]
        %v1253 = vld.sshfl [vmem:[#allocation1 + $0x8] sm:$0xff pattern:$0x73625140]
        %v1255 = vld.sshfl [vmem:[#allocation1 + $0x10] sm:$0xff pattern:$0x73625140]
        %v1257 = vld.sshfl [vmem:[#allocation1 + $0x18] sm:$0xff pattern:$0x73625140]
        %v1259 = vrot.slane %v1251, 5
        %v1260 = vrot.slane %v1253, 5
        %v1261 = vrot.slane %v1255, 5
        %v1262 = vrot.slane %v1257, 5
        %1263 = vrot.lane.b32.xlu0 %v1259, 126
        %v1264 = vpop.permute.xlu0 %1263
        %1265 = vrot.lane.b32.xlu0 %v1260, 126
        %v1266 = vpop.permute.xlu0 %1265
        %1267 = vrot.lane.b32.xlu0 %v1261, 126
        %v1268 = vpop.permute.xlu0 %1267
        %1269 = vrot.lane.b32.xlu0 %v1262, 126
        %v1270 = vpop.permute.xlu0 %1269
        %v1271 = vsel %vm670, %v1264, %v1266
        %v1272 = vsel %vm670, %v1266, %v1268
        %v1273 = vsel %vm670, %v1268, %v1270
        %1274 = vst [vmem:[#allocation1] ss:$4 sm:$0xff] %v608
        %v1275 = vld.sshfl [vmem:[#allocation1] sm:$0xff pattern:$0x73625140]
        %v1276 = vld.sshfl [vmem:[#allocation1 + $0x8] sm:$0xff pattern:$0x73625140]
        %v1277 = vld.sshfl [vmem:[#allocation1 + $0x10] sm:$0xff pattern:$0x73625140]
        %v1278 = vld.sshfl [vmem:[#allocation1 + $0x18] sm:$0xff pattern:$0x73625140]
        %v1279 = vshrl.u32 %v1275, 16
        %v1281 = vrot.slane %v1279, 3
        %v1282 = vshll.u32 %v1275, 16
        %v1284 = vrot.slane %v1282, 4
        %v1285 = vor.u32 %v1281, %v1284
        %v1286 = vshrl.u32 %v1276, 16
        %v1288 = vrot.slane %v1286, 3
        %v1289 = vshll.u32 %v1276, 16
        %v1291 = vrot.slane %v1289, 4
        %v1292 = vor.u32 %v1288, %v1291
        %v1293 = vshrl.u32 %v1277, 16
        %v1295 = vrot.slane %v1293, 3
        %v1296 = vshll.u32 %v1277, 16
        %v1298 = vrot.slane %v1296, 4
        %v1299 = vor.u32 %v1295, %v1298
        %v1300 = vshrl.u32 %v1278, 16
        %v1302 = vrot.slane %v1300, 3
        %v1303 = vshll.u32 %v1278, 16
        %v1305 = vrot.slane %v1303, 4
        %v1306 = vor.u32 %v1302, %v1305
        %1307 = vrot.lane.b32.xlu0 %v1285, 125
        %v1308 = vpop.permute.xlu0 %1307
        %1309 = vrot.lane.b32.xlu0 %v1292, 125
        %v1310 = vpop.permute.xlu0 %1309
        %1311 = vrot.lane.b32.xlu0 %v1299, 125
        %v1312 = vpop.permute.xlu0 %1311
        %1313 = vrot.lane.b32.xlu0 %v1306, 125
        %v1314 = vpop.permute.xlu0 %1313
        %v1315 = vsel %vm704, %v1308, %v1310
        %v1316 = vsel %vm704, %v1310, %v1312
        %v1317 = vsel %vm704, %v1312, %v1314
        %s1322 = scalar_lea.vmem [#allocation1], 3
        %1323 = vst [vmem:[%s1322] ss:$4 sm:$0xff] %v608
        %v1324 = vld.sshfl [vmem:[#allocation1] sm:$0xff pattern:$0x73625140]
        %v1326 = vld.sshfl [vmem:[#allocation1 + $0x8] sm:$0xff pattern:$0x73625140]
        %v1328 = vld.sshfl [vmem:[#allocation1 + $0x10] sm:$0xff pattern:$0x73625140]
        %v1330 = vld.sshfl [vmem:[#allocation1 + $0x18] sm:$0xff pattern:$0x73625140]
        %1332 = vrot.lane.b32.xlu0 %v1324, 109
        %v1333 = vpop.permute.xlu0 %1332
        %1334 = vrot.lane.b32.xlu0 %v1326, 109
        %v1335 = vpop.permute.xlu0 %1334
        %1336 = vrot.lane.b32.xlu0 %v1328, 109
        %v1337 = vpop.permute.xlu0 %1336
        %1338 = vrot.lane.b32.xlu0 %v1330, 109
        %v1339 = vpop.permute.xlu0 %1338
        %vm1340 = vcmask 891904
        %v1341 = vsel %vm1340, %v1333, %v1335
        %v1342 = vsel %vm1340, %v1335, %v1337
        %v1343 = vsel %vm1340, %v1337, %v1339
        %1344 = vst [vmem:[#allocation1] ss:$4 sm:$0xff] %v608
        %v1345 = vld.sshfl [vmem:[#allocation1] sm:$0xff pattern:$0x73625140]
        %v1346 = vld.sshfl [vmem:[#allocation1 + $0x8] sm:$0xff pattern:$0x73625140]
        %v1347 = vld.sshfl [vmem:[#allocation1 + $0x10] sm:$0xff pattern:$0x73625140]
        %v1348 = vld.sshfl [vmem:[#allocation1 + $0x18] sm:$0xff pattern:$0x73625140]
        %v1349 = vshll.u32 %v1345, 16
        %v1351 = vrot.slane %v1349, 1
        %v1352 = vshll.u32 %v1346, 16
        %v1354 = vrot.slane %v1352, 1
        %v1355 = vshll.u32 %v1347, 16
        %v1357 = vrot.slane %v1355, 1
        %v1358 = vshll.u32 %v1348, 16
        %v1360 = vrot.slane %v1358, 1
        %v1361 = vshrl.u32 %v1345, 16
        %v1363 = vor.u32 %v1361, %v1351
        %v1364 = vshrl.u32 %v1346, 16
        %v1366 = vor.u32 %v1364, %v1354
        %v1367 = vshrl.u32 %v1347, 16
        %v1369 = vor.u32 %v1367, %v1357
        %v1370 = vshrl.u32 %v1348, 16
        %v1372 = vor.u32 %v1370, %v1360
        %1373 = vrot.lane.b32.xlu0 %v1351, 108
        %v1374 = vpop.permute.xlu0 %1373
        %1375 = vrot.lane.b32.xlu0 %v1354, 108
        %v1376 = vpop.permute.xlu0 %1375
        %1377 = vrot.lane.b32.xlu0 %v1357, 108
        %v1378 = vpop.permute.xlu0 %1377
        %1379 = vrot.lane.b32.xlu0 %v1360, 108
        %v1380 = vpop.permute.xlu0 %1379
        %1381 = vrot.lane.b32.xlu0 %v1363, 108
        %v1382 = vpop.permute.xlu0 %1381
        %1383 = vrot.lane.b32.xlu0 %v1366, 108
        %v1384 = vpop.permute.xlu0 %1383
        %1385 = vrot.lane.b32.xlu0 %v1369, 108
        %v1386 = vpop.permute.xlu0 %1385
        %1387 = vrot.lane.b32.xlu0 %v1372, 108
        %v1388 = vpop.permute.xlu0 %1387
        %v1389 = vsel %vm761, %v1374, %v1376
        %v1390 = vsel %vm761, %v1376, %v1378
        %v1391 = vsel %vm761, %v1378, %v1380
        %v1392 = vsel %vm761, %v1382, %v1384
        %v1393 = vsel %vm761, %v1384, %v1386
        %v1394 = vsel %vm761, %v1386, %v1388
        %1399 = vst [vmem:[#allocation1] ss:$4 sm:$0xff] %v608
        %v1400 = vld.sshfl [vmem:[#allocation1] sm:$0xff pattern:$0x73625140]
        %v1402 = vld.sshfl [vmem:[#allocation1 + $0x8] sm:$0xff pattern:$0x73625140]
        %v1404 = vld.sshfl [vmem:[#allocation1 + $0x10] sm:$0xff pattern:$0x73625140]
        %v1406 = vld.sshfl [vmem:[#allocation1 + $0x18] sm:$0xff pattern:$0x73625140]
        %v1408 = vrot.slane %v1400, 7
        %v1409 = vrot.slane %v1402, 7
        %v1410 = vrot.slane %v1404, 7
        %v1411 = vrot.slane %v1406, 7
        %1412 = vrot.lane.b32.xlu0 %v1408, 107
        %v1413 = vpop.permute.xlu0 %1412
        %1414 = vrot.lane.b32.xlu0 %v1409, 107
        %v1415 = vpop.permute.xlu0 %1414
        %1416 = vrot.lane.b32.xlu0 %v1410, 107
        %v1417 = vpop.permute.xlu0 %1416
        %1418 = vrot.lane.b32.xlu0 %v1411, 107
        %v1419 = vpop.permute.xlu0 %1418
        %v1420 = vsel %vm785, %v1413, %v1415
        %v1421 = vsel %vm785, %v1415, %v1417
        %v1422 = vsel %vm785, %v1417, %v1419
        %1423 = vst [vmem:[#allocation1] ss:$4 sm:$0xff] %v608
        %v1424 = vld.sshfl [vmem:[#allocation1] sm:$0xff pattern:$0x73625140]
        %v1425 = vld.sshfl [vmem:[#allocation1 + $0x8] sm:$0xff pattern:$0x73625140]
        %v1426 = vld.sshfl [vmem:[#allocation1 + $0x10] sm:$0xff pattern:$0x73625140]
        %v1427 = vld.sshfl [vmem:[#allocation1 + $0x18] sm:$0xff pattern:$0x73625140]
        %v1428 = vshrl.u32 %v1424, 16
        %v1430 = vrot.slane %v1428, 5
        %v1431 = vshll.u32 %v1424, 16
        %v1433 = vrot.slane %v1431, 6
        %v1434 = vor.u32 %v1430, %v1433
        %v1435 = vshrl.u32 %v1425, 16
        %v1437 = vrot.slane %v1435, 5
        %v1438 = vshll.u32 %v1425, 16
        %v1440 = vrot.slane %v1438, 6
        %v1441 = vor.u32 %v1437, %v1440
        %v1442 = vshrl.u32 %v1426, 16
        %v1444 = vrot.slane %v1442, 5
        %v1445 = vshll.u32 %v1426, 16
        %v1447 = vrot.slane %v1445, 6
        %v1448 = vor.u32 %v1444, %v1447
        %v1449 = vshrl.u32 %v1427, 16
        %v1451 = vrot.slane %v1449, 5
        %v1452 = vshll.u32 %v1427, 16
        %v1454 = vrot.slane %v1452, 6
        %v1455 = vor.u32 %v1451, %v1454
        %1456 = vrot.lane.b32.xlu0 %v1434, 106
        %v1457 = vpop.permute.xlu0 %1456
        %1458 = vrot.lane.b32.xlu0 %v1441, 106
        %v1459 = vpop.permute.xlu0 %1458
        %1460 = vrot.lane.b32.xlu0 %v1448, 106
        %v1461 = vpop.permute.xlu0 %1460
        %1462 = vrot.lane.b32.xlu0 %v1455, 106
        %v1463 = vpop.permute.xlu0 %1462
        %v1464 = vsel %vm819, %v1457, %v1459
        %v1465 = vsel %vm819, %v1459, %v1461
        %v1466 = vsel %vm819, %v1461, %v1463
        %s1471 = scalar_lea.vmem [#allocation1], 2
        %1472 = vst [vmem:[%s1471] ss:$4 sm:$0xff] %v608
        %v1473 = vld.sshfl [vmem:[#allocation1] sm:$0xff pattern:$0x73625140]
        %v1475 = vld.sshfl [vmem:[#allocation1 + $0x8] sm:$0xff pattern:$0x73625140]
        %v1477 = vld.sshfl [vmem:[#allocation1 + $0x10] sm:$0xff pattern:$0x73625140]
        %v1479 = vld.sshfl [vmem:[#allocation1 + $0x18] sm:$0xff pattern:$0x73625140]
        %1481 = vrot.lane.b32.xlu0 %v1473, 105
        %v1482 = vpop.permute.xlu0 %1481
        %1483 = vrot.lane.b32.xlu0 %v1475, 105
        %v1484 = vpop.permute.xlu0 %1483
        %1485 = vrot.lane.b32.xlu0 %v1477, 105
        %v1486 = vpop.permute.xlu0 %1485
        %1487 = vrot.lane.b32.xlu0 %v1479, 105
        %v1488 = vpop.permute.xlu0 %1487
        %v1489 = vsel %vm839, %v1482, %v1484
        %v1490 = vsel %vm839, %v1484, %v1486
        %v1491 = vsel %vm839, %v1486, %v1488
        %v1492 = vsel %vm1059, %v1194, %v1243
        %v1493 = vsel %vm1059, %v1195, %v1244
        %v1494 = vsel %vm1059, %v1196, %v1245
        %v1495 = vsel %vm1059, %v1197, %v1242
        %v1498 = vsel %vm1063, %v1492, %v1271
        %v1502 = vsel %vm1063, %v1493, %v1272
        %v1506 = vsel %vm1063, %v1494, %v1273
        %v1510 = vsel %vm1063, %v1495, %v1270
        %v1512 = vsel %vm1078, %v1498, %v1315
        %v1513 = vsel %vm1078, %v1502, %v1316
        %v1514 = vsel %vm1078, %v1506, %v1317
        %v1515 = vsel %vm1078, %v1510, %v1314
        %v1518 = vsel %vm1082, %v1512, %v1341
        %v1522 = vsel %vm1082, %v1513, %v1342
        %v1526 = vsel %vm1082, %v1514, %v1343
        %v1530 = vsel %vm1082, %v1515, %v1339
        %v1532 = vsel %vm1097, %v1518, %v1389
        %v1533 = vsel %vm1097, %v1522, %v1390
        %v1534 = vsel %vm1097, %v1526, %v1391
        %v1535 = vsel %vm1097, %v1530, %v1380
        %v1538 = vsel %vm1101, %v1392, %v1420
        %v1542 = vsel %vm1101, %v1393, %v1421
        %v1546 = vsel %vm1101, %v1394, %v1422
        %v1550 = vsel %vm1101, %v1388, %v1419
        %v1552 = vsel %vm1116, %v1538, %v1464
        %v1553 = vsel %vm1116, %v1542, %v1465
        %v1554 = vsel %vm1116, %v1546, %v1466
        %v1555 = vsel %vm1116, %v1550, %v1463
        %v1558 = vsel %vm1120, %v1552, %v1489
        %v1561 = vsel %vm1120, %v1553, %v1490
        %v1564 = vsel %vm1120, %v1554, %v1491
        %v1567 = vsel %vm1120, %v1555, %v1488
        %1576 = vrot.lane.b32.xlu0 %v1532, 67
        %v1577 = vpop.permute.xlu0 %1576
        %1578 = vrot.lane.b32.xlu0 %v1533, 67
        %v1579 = vpop.permute.xlu0 %1578
        %1580 = vrot.lane.b32.xlu0 %v1534, 67
        %v1581 = vpop.permute.xlu0 %1580
        %1582 = vrot.lane.b32.xlu0 %v1535, 67
        %v1583 = vpop.permute.xlu0 %1582
        %1584 = vrot.lane.b32.xlu0 %v1558, 67
        %v1585 = vpop.permute.xlu0 %1584
        %1586 = vrot.lane.b32.xlu0 %v1561, 67
        %v1587 = vpop.permute.xlu0 %1586
        %1588 = vrot.lane.b32.xlu0 %v1564, 67
        %v1589 = vpop.permute.xlu0 %1588
        %1590 = vrot.lane.b32.xlu0 %v1567, 67
        %v1591 = vpop.permute.xlu0 %1590
        %vm1592 = vcmask 547840
        %v1593 = vsel %vm1592, %v1577, %v1579
        %v1594 = vsel %vm1592, %v1579, %v1581
        %v1595 = vsel %vm1592, %v1581, %v1583
        %v1596 = vsel %vm1592, %v1585, %v1587
        %v1597 = vsel %vm1592, %v1587, %v1589
        %v1598 = vsel %vm1592, %v1589, %v1591
        %v1599 = vld [vmem:[%s3] sm:$0xff]
        %v1600 = vld [vmem:[%s3 + $0x8] sm:$0xff]
        %v1601 = vld [vmem:[%s3 + $0x10] sm:$0xff]
        %v1602 = vld [vmem:[%s3 + $0x18] sm:$0xff]
        %v1603 = vld [vmem:[%s3 + $0x20] sm:$0xff]
        %v1604 = vld [vmem:[%s3 + $0x28] sm:$0xff]
        %v1605 = vld [vmem:[%s3 + $0x30] sm:$0xff]
        %v1606 = vld [vmem:[%s4] sm:$0xff]
        %v1607 = vld [vmem:[%s4 + $0x8] sm:$0xff]
        %v1608 = vld [vmem:[%s4 + $0x10] sm:$0xff]
        %v1609 = vld [vmem:[%s4 + $0x18] sm:$0xff]
        %v1610 = vld [vmem:[%s4 + $0x20] sm:$0xff]
        %v1611 = vld [vmem:[%s4 + $0x28] sm:$0xff]
        %v1612 = vld [vmem:[%s4 + $0x30] sm:$0xff]
        %1614 = vset.pattern.permute.xlu0 0
        %1615 = vperm.xlu0 %1614, %v1599
        %v1616 = vpop.permute.xlu0 %1615
        %1619 = vset.pattern.permute.xlu0 0
        %1620 = vperm.xlu0 %1619, %v1600
        %v1621 = vpop.permute.xlu0 %1620
        %1624 = vset.pattern.permute.xlu0 0
        %1625 = vperm.xlu0 %1624, %v1601
        %v1626 = vpop.permute.xlu0 %1625
        %1629 = vset.pattern.permute.xlu0 0
        %1630 = vperm.xlu0 %1629, %v1602
        %v1631 = vpop.permute.xlu0 %1630
        %1634 = vset.pattern.permute.xlu0 0
        %1635 = vperm.xlu0 %1634, %v1603
        %v1636 = vpop.permute.xlu0 %1635
        %1639 = vset.pattern.permute.xlu0 0
        %1640 = vperm.xlu0 %1639, %v1604
        %v1641 = vpop.permute.xlu0 %1640
        %1644 = vset.pattern.permute.xlu0 0
        %1645 = vperm.xlu0 %1644, %v1605
        %v1646 = vpop.permute.xlu0 %1645
        %v1655 = vunpack.c.l.b16 %v600
        %v1656 = vunpack.c.l.b16 %v601
        %v1657 = vunpack.c.l.b16 %v602
        %v1658 = vunpack.c.l.b16 %v603
        %v1659 = vunpack.c.l.b16 %v604
        %v1660 = vunpack.c.l.b16 %v605
        %v1661 = vunpack.c.l.b16 %v606
        %v1662 = vpack.c.b16 %v1656, %v1655
        %v1663 = vpack.c.b16 %v1658, %v1657
        %v1664 = vpack.c.b16 %v1660, %v1659
        %v1665 = vpack.c.b16 %v1661, %v1661
        %1675 = vrot.lane.b32.xlu0 %v1098, 110
        %v1676 = vpop.permute.xlu0 %1675
        %1677 = vrot.lane.b32.xlu0 %v1099, 110
        %v1678 = vpop.permute.xlu0 %1677
        %1679 = vrot.lane.b32.xlu0 %v1100, 110
        %v1680 = vpop.permute.xlu0 %1679
        %1681 = vrot.lane.b32.xlu0 %v1142, 110
        %v1682 = vpop.permute.xlu0 %1681
        %1683 = vrot.lane.b32.xlu0 %v1145, 110
        %v1684 = vpop.permute.xlu0 %1683
        %1685 = vrot.lane.b32.xlu0 %v1148, 110
        %v1686 = vpop.permute.xlu0 %1685
        %1687 = vrot.lane.b32.xlu0 %v1190, 110
        %v1688 = vpop.permute.xlu0 %1687
        %1689 = vrot.lane.b32.xlu0 %v1191, 110
        %v1690 = vpop.permute.xlu0 %1689
        %1691 = vrot.lane.b32.xlu0 %v1192, 110
        %v1692 = vpop.permute.xlu0 %1691
        %1693 = vrot.lane.b32.xlu0 %v1593, 110
        %v1694 = vpop.permute.xlu0 %1693
        %1695 = vrot.lane.b32.xlu0 %v1594, 110
        %v1696 = vpop.permute.xlu0 %1695
        %1697 = vrot.lane.b32.xlu0 %v1595, 110
        %v1698 = vpop.permute.xlu0 %1697
        %1699 = vrot.lane.b32.xlu0 %v1596, 110
        %v1700 = vpop.permute.xlu0 %1699
        %1701 = vrot.lane.b32.xlu0 %v1597, 110
        %v1702 = vpop.permute.xlu0 %1701
        %1703 = vrot.lane.b32.xlu0 %v1598, 110
        %v1704 = vpop.permute.xlu0 %1703
        %vm1705 = vcmask 900096
        %v1706 = vsel %vm1705, %v1676, %v1678
        %v1707 = vsel %vm1705, %v1678, %v1680
        %v1708 = vsel %vm1705, %v1682, %v1684
        %v1709 = vsel %vm1705, %v1684, %v1686
        %v1710 = vsel %vm1705, %v1688, %v1690
        %v1711 = vsel %vm1705, %v1690, %v1692
        %v1712 = vsel %vm1705, %v1694, %v1696
        %v1713 = vsel %vm1705, %v1696, %v1698
        %v1714 = vsel %vm1705, %v1700, %v1702
        %v1715 = vsel %vm1705, %v1702, %v1704
        %vm1728 = vcmask 613376
        %v1730 = vsel %vm1728, %v1662, 0
        %v1733 = vsel %vm1728, %v1663, 0
        %v1736 = vsel %vm1728, %v1664, 0
        %v1739 = vsel %vm1728, %v1665, 0
        %v1741 = vsel %vm1174, 4294967295, 65535
        %v1742 = vsel %vm1082, %v1741, 0
        %v1744 = vand.u32 %v1714, %v1742
        %v1747 = vand.u32 %v1715, %v1742
        %v1750 = vand.u32 %v1704, %v1742
        %1752 = vmatpush.bf16.msra.mxu0 0
        %1753 = vmatpush.bf16.msra.mxu0 0
        %1754 = vmatpush.bf16.msra.mxu0 0
        %1755 = vmatpush.bf16.msra.mxu0 %v1744
        %1756 = vmatpush.bf16.msra.mxu0 %v1712
        %1757 = vmatpush.bf16.msra.mxu0 %v1710
        %1758 = vmatpush.bf16.msra.mxu0 %v1708
        %1759 = vmatpush.bf16.msra.mxu0 %v1706
        %1760 = vmatmul.bf16.gmra.mxu0 %v1730
        %v1761 = vpop.f32.mrf.mxu0
        %v1762 = vadd.f32 %v1616, %v1761
        %v1763 = vpop.f32.mrf.mxu0
        %v1764 = vadd.f32 %v1621, %v1763
        %1765 = vmatmul.bf16.gmra.mxu0 %v1733
        %v1766 = vpop.f32.mrf.mxu0
        %v1767 = vadd.f32 %v1626, %v1766
        %v1768 = vpop.f32.mrf.mxu0
        %v1769 = vadd.f32 %v1631, %v1768
        %1770 = vmatmul.bf16.gmra.mxu0 %v1736
        %v1771 = vpop.f32.mrf.mxu0
        %v1772 = vadd.f32 %v1636, %v1771
        %v1773 = vpop.f32.mrf.mxu0
        %v1774 = vadd.f32 %v1641, %v1773
        %1775 = vmatmul.bf16.gmra.mxu0 %v1739
        %v1776 = vpop.f32.mrf.mxu0
        %v1777 = vadd.f32 %v1646, %v1776
        %v1778 = vpop.f32.mrf.mxu0
        %1779 = vdwg.mxu0
        %1780 = vmatpush.bf16.msra.mxu0 0
        %1781 = vmatpush.bf16.msra.mxu0 0
        %1782 = vmatpush.bf16.msra.mxu0 0
        %1783 = vmatpush.bf16.msra.mxu0 %v1747
        %1784 = vmatpush.bf16.msra.mxu0 %v1713
        %1785 = vmatpush.bf16.msra.mxu0 %v1711
        %1786 = vmatpush.bf16.msra.mxu0 %v1709
        %1787 = vmatpush.bf16.msra.mxu0 %v1707
        %1788 = vmatmul.bf16.gmra.mxu0 %v1730
        %v1789 = vpop.f32.mrf.mxu0
        %v1790 = vadd.f32 %v1616, %v1789
        %v1791 = vpop.f32.mrf.mxu0
        %v1792 = vadd.f32 %v1621, %v1791
        %1793 = vmatmul.bf16.gmra.mxu0 %v1733
        %v1794 = vpop.f32.mrf.mxu0
        %v1795 = vadd.f32 %v1626, %v1794
        %v1796 = vpop.f32.mrf.mxu0
        %v1797 = vadd.f32 %v1631, %v1796
        %1798 = vmatmul.bf16.gmra.mxu0 %v1736
        %v1799 = vpop.f32.mrf.mxu0
        %v1800 = vadd.f32 %v1636, %v1799
        %v1801 = vpop.f32.mrf.mxu0
        %v1802 = vadd.f32 %v1641, %v1801
        %1803 = vmatmul.bf16.gmra.mxu0 %v1739
        %v1804 = vpop.f32.mrf.mxu0
        %v1805 = vadd.f32 %v1646, %v1804
        %v1806 = vpop.f32.mrf.mxu0
        %1807 = vdwg.mxu0
        %1808 = vmatpush.bf16.msra.mxu0 0
        %1809 = vmatpush.bf16.msra.mxu0 0
        %1810 = vmatpush.bf16.msra.mxu0 0
        %1811 = vmatpush.bf16.msra.mxu0 %v1750
        %1812 = vmatpush.bf16.msra.mxu0 %v1698
        %1813 = vmatpush.bf16.msra.mxu0 %v1692
        %1814 = vmatpush.bf16.msra.mxu0 %v1686
        %1815 = vmatpush.bf16.msra.mxu0 %v1680
        %1816 = vmatmul.bf16.gmra.mxu0 %v1730
        %v1817 = vpop.f32.mrf.mxu0
        %v1818 = vadd.f32 %v1616, %v1817
        %v1819 = vpop.f32.mrf.mxu0
        %v1820 = vadd.f32 %v1621, %v1819
        %1821 = vmatmul.bf16.gmra.mxu0 %v1733
        %v1822 = vpop.f32.mrf.mxu0
        %v1823 = vadd.f32 %v1626, %v1822
        %v1824 = vpop.f32.mrf.mxu0
        %v1825 = vadd.f32 %v1631, %v1824
        %1826 = vmatmul.bf16.gmra.mxu0 %v1736
        %v1827 = vpop.f32.mrf.mxu0
        %v1828 = vadd.f32 %v1636, %v1827
        %v1829 = vpop.f32.mrf.mxu0
        %v1830 = vadd.f32 %v1641, %v1829
        %1831 = vmatmul.bf16.gmra.mxu0 %v1739
        %v1832 = vpop.f32.mrf.mxu0
        %v1833 = vadd.f32 %v1646, %v1832
        %v1834 = vpop.f32.mrf.mxu0
        %1835 = vdwg.mxu0
        %vm1836 = vcmp.gt.f32.partialorder %v1762, 0.0
        %vm1837 = vcmp.gt.f32.partialorder %v1790, 0.0
        %vm1838 = vcmp.gt.f32.partialorder %v1818, 0.0
        %vm1839 = vcmp.gt.f32.partialorder %v1764, 0.0
        %vm1840 = vcmp.gt.f32.partialorder %v1792, 0.0
        %vm1841 = vcmp.gt.f32.partialorder %v1820, 0.0
        %vm1842 = vcmp.gt.f32.partialorder %v1767, 0.0
        %vm1843 = vcmp.gt.f32.partialorder %v1795, 0.0
        %vm1844 = vcmp.gt.f32.partialorder %v1823, 0.0
        %vm1845 = vcmp.gt.f32.partialorder %v1769, 0.0
        %vm1846 = vcmp.gt.f32.partialorder %v1797, 0.0
        %vm1847 = vcmp.gt.f32.partialorder %v1825, 0.0
        %vm1848 = vcmp.gt.f32.partialorder %v1772, 0.0
        %vm1849 = vcmp.gt.f32.partialorder %v1800, 0.0
        %vm1850 = vcmp.gt.f32.partialorder %v1828, 0.0
        %vm1851 = vcmp.gt.f32.partialorder %v1774, 0.0
        %vm1852 = vcmp.gt.f32.partialorder %v1802, 0.0
        %vm1853 = vcmp.gt.f32.partialorder %v1830, 0.0
        %vm1854 = vcmp.gt.f32.partialorder %v1777, 0.0
        %vm1855 = vcmp.gt.f32.partialorder %v1805, 0.0
        %vm1856 = vcmp.gt.f32.partialorder %v1833, 0.0
        %1858 = vset.pattern.permute.xlu0 0
        %1859 = vperm.xlu0 %1858, %v1606
        %v1860 = vpop.permute.xlu0 %1859
        %1863 = vset.pattern.permute.xlu0 0
        %1864 = vperm.xlu0 %1863, %v1607
        %v1865 = vpop.permute.xlu0 %1864
        %1868 = vset.pattern.permute.xlu0 0
        %1869 = vperm.xlu0 %1868, %v1608
        %v1870 = vpop.permute.xlu0 %1869
        %1873 = vset.pattern.permute.xlu0 0
        %1874 = vperm.xlu0 %1873, %v1609
        %v1875 = vpop.permute.xlu0 %1874
        %1878 = vset.pattern.permute.xlu0 0
        %1879 = vperm.xlu0 %1878, %v1610
        %v1880 = vpop.permute.xlu0 %1879
        %1883 = vset.pattern.permute.xlu0 0
        %1884 = vperm.xlu0 %1883, %v1611
        %v1885 = vpop.permute.xlu0 %1884
        %1888 = vset.pattern.permute.xlu0 0
        %1889 = vperm.xlu0 %1888, %v1612
        %v1890 = vpop.permute.xlu0 %1889
        %v1892 = vmul.f32 %v1860, %v1762
        %v1893 = vmul.f32 %v1860, %v1790
        %v1894 = vmul.f32 %v1860, %v1818
        %v1895 = vmul.f32 %v1865, %v1764
        %v1896 = vmul.f32 %v1865, %v1792
        %v1897 = vmul.f32 %v1865, %v1820
        %v1898 = vmul.f32 %v1870, %v1767
        %v1899 = vmul.f32 %v1870, %v1795
        %v1900 = vmul.f32 %v1870, %v1823
        %v1901 = vmul.f32 %v1875, %v1769
        %v1902 = vmul.f32 %v1875, %v1797
        %v1903 = vmul.f32 %v1875, %v1825
        %v1904 = vmul.f32 %v1880, %v1772
        %v1905 = vmul.f32 %v1880, %v1800
        %v1906 = vmul.f32 %v1880, %v1828
        %v1907 = vmul.f32 %v1885, %v1774
        %v1908 = vmul.f32 %v1885, %v1802
        %v1909 = vmul.f32 %v1885, %v1830
        %v1910 = vmul.f32 %v1890, %v1777
        %v1911 = vmul.f32 %v1890, %v1805
        %v1912 = vmul.f32 %v1890, %v1833
        %v1913 = vsel %vm1836, %v1762, %v1892
        %v1914 = vsel %vm1837, %v1790, %v1893
        %v1915 = vsel %vm1838, %v1818, %v1894
        %v1916 = vsel %vm1839, %v1764, %v1895
        %v1917 = vsel %vm1840, %v1792, %v1896
        %v1918 = vsel %vm1841, %v1820, %v1897
        %v1919 = vsel %vm1842, %v1767, %v1898
        %v1920 = vsel %vm1843, %v1795, %v1899
        %v1921 = vsel %vm1844, %v1823, %v1900
        %v1922 = vsel %vm1845, %v1769, %v1901
        %v1923 = vsel %vm1846, %v1797, %v1902
        %v1924 = vsel %vm1847, %v1825, %v1903
        %v1925 = vsel %vm1848, %v1772, %v1904
        %v1926 = vsel %vm1849, %v1800, %v1905
        %v1927 = vsel %vm1850, %v1828, %v1906
        %v1928 = vsel %vm1851, %v1774, %v1907
        %v1929 = vsel %vm1852, %v1802, %v1908
        %v1930 = vsel %vm1853, %v1830, %v1909
        %v1931 = vsel %vm1854, %v1777, %v1910
        %v1932 = vsel %vm1855, %v1805, %v1911
        %v1933 = vsel %vm1856, %v1833, %v1912
        %v1934 = vld [vmem:[#allocation6] sm:$0xf]
        %v1935 = vld [vmem:[#allocation6 + $0x4] sm:$0x3]
        %v1936 = vpack.c.bf16 %v1916, %v1913
        %v1937 = vpack.c.bf16 %v1917, %v1914
        %v1938 = vpack.c.bf16 %v1918, %v1915
        %v1939 = vpack.c.bf16 %v1922, %v1919
        %v1940 = vpack.c.bf16 %v1923, %v1920
        %v1941 = vpack.c.bf16 %v1924, %v1921
        %v1942 = vpack.c.bf16 %v1928, %v1925
        %v1943 = vpack.c.bf16 %v1929, %v1926
        %v1944 = vpack.c.bf16 %v1930, %v1927
        %v1945 = vpack.c.bf16 %v1931, %v1931
        %v1946 = vpack.c.bf16 %v1932, %v1932
        %v1947 = vpack.c.bf16 %v1933, %v1933
        %v1948 = vld [vmem:[%s6] sm:$0xff]
        %v1949 = vld [vmem:[%s6 + $0x8] sm:$0xf]
        %v1950 = vld [vmem:[%s7] sm:$0xff]
        %v1951 = vld [vmem:[%s7 + $0x8] sm:$0xf]
        %1953 = vset.pattern.permute.xlu0 0
        %1954 = vperm.xlu0 %1953, %v1948
        %v1955 = vpop.permute.xlu0 %1954
        %1958 = vset.pattern.permute.xlu0 0
        %1959 = vperm.xlu0 %1958, %v1949
        %v1960 = vpop.permute.xlu0 %1959
        %v1964 = vunpack.c.l.b16 %v1934
        %v1965 = vunpack.c.l.b16 %v1935
        %v1966 = vpack.c.b16 %v1965, %v1964
        %vm1967 = vcmask 457728
        %v1969 = vsel %vm1967, %v1966, 0
        %v1972 = vsel %vm1120, %v1945, 0
        %v1975 = vsel %vm1120, %v1946, 0
        %v1978 = vsel %vm1120, %v1947, 0
        %1980 = vmatpush.bf16.msra.mxu0 0
        %1981 = vmatpush.bf16.msra.mxu0 0
        %1982 = vmatpush.bf16.msra.mxu0 0
        %1983 = vmatpush.bf16.msra.mxu0 0
        %1984 = vmatpush.bf16.msra.mxu0 %v1972
        %1985 = vmatpush.bf16.msra.mxu0 %v1942
        %1986 = vmatpush.bf16.msra.mxu0 %v1939
        %1987 = vmatpush.bf16.msra.mxu0 %v1936
        %1988 = vmatmul.bf16.gmra.mxu0 %v1969
        %v1989 = vpop.f32.mrf.mxu0
        %v1990 = vadd.f32 %v1955, %v1989
        %v1991 = vpop.f32.mrf.mxu0
        %v1992 = vadd.f32 %v1960, %v1991
        %1993 = vdwg.mxu0
        %1994 = vmatpush.bf16.msra.mxu0 0
        %1995 = vmatpush.bf16.msra.mxu0 0
        %1996 = vmatpush.bf16.msra.mxu0 0
        %1997 = vmatpush.bf16.msra.mxu0 0
        %1998 = vmatpush.bf16.msra.mxu0 %v1975
        %1999 = vmatpush.bf16.msra.mxu0 %v1943
        %2000 = vmatpush.bf16.msra.mxu0 %v1940
        %2001 = vmatpush.bf16.msra.mxu0 %v1937
        %2002 = vmatmul.bf16.gmra.mxu0 %v1969
        %v2003 = vpop.f32.mrf.mxu0
        %v2004 = vadd.f32 %v1955, %v2003
        %v2005 = vpop.f32.mrf.mxu0
        %v2006 = vadd.f32 %v1960, %v2005
        %2007 = vdwg.mxu0
        %2008 = vmatpush.bf16.msra.mxu0 0
        %2009 = vmatpush.bf16.msra.mxu0 0
        %2010 = vmatpush.bf16.msra.mxu0 0
        %2011 = vmatpush.bf16.msra.mxu0 0
        %2012 = vmatpush.bf16.msra.mxu0 %v1978
        %2013 = vmatpush.bf16.msra.mxu0 %v1944
        %2014 = vmatpush.bf16.msra.mxu0 %v1941
        %2015 = vmatpush.bf16.msra.mxu0 %v1938
        %2016 = vmatmul.bf16.gmra.mxu0 %v1969
        %v2017 = vpop.f32.mrf.mxu0
        %v2018 = vadd.f32 %v1955, %v2017
        %v2019 = vpop.f32.mrf.mxu0
        %v2020 = vadd.f32 %v1960, %v2019
        %2021 = vdwg.mxu0
        %vm2022 = vcmp.gt.f32.partialorder %v1990, 0.0
        %vm2023 = vcmp.gt.f32.partialorder %v2004, 0.0
        %vm2024 = vcmp.gt.f32.partialorder %v2018, 0.0
        %vm2025 = vcmp.gt.f32.partialorder %v1992, 0.0
        %vm2026 = vcmp.gt.f32.partialorder %v2006, 0.0
        %vm2027 = vcmp.gt.f32.partialorder %v2020, 0.0
        %2029 = vset.pattern.permute.xlu0 0
        %2030 = vperm.xlu0 %2029, %v1950
        %v2031 = vpop.permute.xlu0 %2030
        %2034 = vset.pattern.permute.xlu0 0
        %2035 = vperm.xlu0 %2034, %v1951
        %v2036 = vpop.permute.xlu0 %2035
        %v2038 = vmul.f32 %v2031, %v1990
        %v2039 = vmul.f32 %v2031, %v2004
        %v2040 = vmul.f32 %v2031, %v2018
        %v2041 = vmul.f32 %v2036, %v1992
        %v2042 = vmul.f32 %v2036, %v2006
        %v2043 = vmul.f32 %v2036, %v2020
        %v2044 = vsel %vm2022, %v1990, %v2038
        %v2045 = vsel %vm2023, %v2004, %v2039
        %v2046 = vsel %vm2024, %v2018, %v2040
        %v2047 = vsel %vm2025, %v1992, %v2041
        %v2048 = vsel %vm2026, %v2006, %v2042
        %v2049 = vsel %vm2027, %v2020, %v2043
        %v2051 = vperm.slane %v573, 0
        %v2052 = vperm.slane %v573, 1
        %v2053 = vperm.slane %v573, 2
        %v2057 = vmul.f32 %v2044, %v2051
        %v2058 = vmul.f32 %v2045, %v2052
        %v2059 = vmul.f32 %v2046, %v2053
        %v2060 = vmul.f32 %v2047, %v2051
        %v2061 = vmul.f32 %v2048, %v2052
        %v2062 = vmul.f32 %v2049, %v2053
        %v2063 = vpack.c.bf16 %v2058, %v2057
        %v2064 = vpack.c.bf16 %v2059, %v2059
        %v2065 = vpack.c.bf16 %v2061, %v2060
        %v2066 = vpack.c.bf16 %v2062, %v2062
        %2071 = vrot.lane.b32.xlu0 %v2063, 60
        %v2072 = vpop.permute.xlu0 %2071
        %2073 = vrot.lane.b32.xlu0 %v2064, 60
        %v2074 = vpop.permute.xlu0 %2073
        %2075 = vrot.lane.b32.xlu0 %v2065, 60
        %v2076 = vpop.permute.xlu0 %2075
        %2077 = vrot.lane.b32.xlu0 %v2066, 60
        %v2078 = vpop.permute.xlu0 %2077
        %v2079 = vrot.slane %v2072, 4
        %v2080 = vrot.slane %v2076, 4
        %vm2081 = vcmask 490496
        %v2082 = vsel %vm2081, %v2079, %v2072
        %v2083 = vsel %vm2081, %v2079, %v2074
        %v2084 = vsel %vm2081, %v2080, %v2076
        %v2085 = vsel %vm2081, %v2080, %v2078
        %vm2090 = vcmask 1043936
        %vm2091 = vcmask 1047556
        %vm2092 = vmor %vm2091, %vm2090
        %2093 = vst.msk [vmem:[#allocation2] sm:$0xff] %vm2092, %v2082
        %vm2094 = vcmask 1010688
        %2095 = vst.msk [vmem:[#allocation2 + $0x8] sm:$0xf] %vm2094, %v2083
        %vm2096 = vcmask 1041888
        %vm2097 = vcmask 1045508
        %vm2098 = vmor %vm2097, %vm2096
        %2099 = vst.msk [vmem:[#allocation2 + $0x10] sm:$0x33] %vm2098, %v2084
        %vm2100 = vcmask 1008640
        %2101 = vst.msk [vmem:[#allocation2 + $0x18] sm:$0x3] %vm2100, %v2085
        %v2102 = vld [vmem:[%s8] sm:$0xf]
        %v2103 = vld [vmem:[%s8 + $0x4] sm:$0x3]
        %v2104 = vld [vmem:[#allocation2] sm:$0xff]
        %v2105 = vld [vmem:[#allocation2 + $0x8] sm:$0xf]
        %v2106 = vld [vmem:[#allocation2 + $0x10] sm:$0x33]
        %v2107 = vld [vmem:[#allocation2 + $0x18] sm:$0x3]
        %v2108 = vld [vmem:[#allocation2 + $0x8] sm:$0xff]
        %v2109 = vld [vmem:[#allocation2 + $0x18] sm:$0x33]
        %v2114 = vunpack.c.l.b16 %v2104
        %v2115 = vunpack.c.h.b16 %v2104
        %v2116 = vunpack.c.l.b16 %v2105
        %v2117 = vunpack.c.l.b16 %v2106
        %v2118 = vunpack.c.h.b16 %v2106
        %v2119 = vunpack.c.l.b16 %v2107
        %v2120 = vpack.c.b16 %v2117, %v2114
        %v2121 = vpack.c.b16 %v2118, %v2115
        %v2122 = vpack.c.b16 %v2119, %v2116
        %v2123 = vrot.slane %v2120, 2
        %v2124 = vrot.slane %v2121, 2
        %v2125 = vrot.slane %v2122, 2
        %2126 = vrot.lane.b32.xlu0 %v2123, 127
        %v2127 = vpop.permute.xlu0 %2126
        %2128 = vrot.lane.b32.xlu0 %v2124, 127
        %v2129 = vpop.permute.xlu0 %2128
        %2130 = vrot.lane.b32.xlu0 %v2125, 127
        %v2131 = vpop.permute.xlu0 %2130
        %v2132 = vsel %vm648, %v2127, %v2129
        %v2133 = vsel %vm648, %v2129, %v2131
        %v2134 = vpack.c.b16 %v2114, %v2114
        %v2135 = vpack.c.b16 %v2115, %v2115
        %v2136 = vpack.c.b16 %v2116, %v2116
        %v2137 = vpack.c.b16 %v2117, %v2117
        %v2138 = vpack.c.b16 %v2118, %v2118
        %v2139 = vpack.c.b16 %v2119, %v2119
        %2140 = vrot.lane.b32.xlu0 %v2134, 126
        %v2141 = vpop.permute.xlu0 %2140
        %2142 = vrot.lane.b32.xlu0 %v2135, 126
        %v2143 = vpop.permute.xlu0 %2142
        %2144 = vrot.lane.b32.xlu0 %v2136, 126
        %v2145 = vpop.permute.xlu0 %2144
        %2146 = vrot.lane.b32.xlu0 %v2137, 126
        %v2147 = vpop.permute.xlu0 %2146
        %2148 = vrot.lane.b32.xlu0 %v2138, 126
        %v2149 = vpop.permute.xlu0 %2148
        %2150 = vrot.lane.b32.xlu0 %v2139, 126
        %v2151 = vpop.permute.xlu0 %2150
        %v2152 = vsel %vm670, %v2141, %v2143
        %v2153 = vsel %vm670, %v2143, %v2145
        %v2154 = vsel %vm670, %v2147, %v2149
        %v2155 = vsel %vm670, %v2149, %v2151
        %v2156 = vrot.slane %v2120, 6
        %v2157 = vrot.slane %v2121, 6
        %v2158 = vrot.slane %v2122, 6
        %2159 = vrot.lane.b32.xlu0 %v2156, 108
        %v2160 = vpop.permute.xlu0 %2159
        %2161 = vrot.lane.b32.xlu0 %v2157, 108
        %v2162 = vpop.permute.xlu0 %2161
        %2163 = vrot.lane.b32.xlu0 %v2158, 108
        %v2164 = vpop.permute.xlu0 %2163
        %v2165 = vsel %vm761, %v2160, %v2162
        %v2166 = vsel %vm761, %v2162, %v2164
        %2167 = vrot.lane.b32.xlu0 %v2120, 107
        %v2168 = vpop.permute.xlu0 %2167
        %2169 = vrot.lane.b32.xlu0 %v2121, 107
        %v2170 = vpop.permute.xlu0 %2169
        %2171 = vrot.lane.b32.xlu0 %v2122, 107
        %v2172 = vpop.permute.xlu0 %2171
        %v2173 = vsel %vm785, %v2168, %v2170
        %v2174 = vsel %vm785, %v2170, %v2172
        %2175 = vrot.lane.b32.xlu0 %v2123, 106
        %v2176 = vpop.permute.xlu0 %2175
        %2177 = vrot.lane.b32.xlu0 %v2124, 106
        %v2178 = vpop.permute.xlu0 %2177
        %2179 = vrot.lane.b32.xlu0 %v2125, 106
        %v2180 = vpop.permute.xlu0 %2179
        %v2181 = vsel %vm819, %v2176, %v2178
        %v2182 = vsel %vm819, %v2178, %v2180
        %v2185 = vunpack.c.l.b16 %v2108
        %v2186 = vunpack.c.h.b16 %v2108
        %v2187 = vunpack.c.l.b16 %v2109
        %v2188 = vunpack.c.h.b16 %v2109
        %v2189 = vpack.c.b16 %v2185, %v2185
        %v2190 = vpack.c.b16 %v2186, %v2186
        %v2191 = vpack.c.b16 %v2187, %v2187
        %v2192 = vpack.c.b16 %v2188, %v2188
        %2193 = vrot.lane.b32.xlu0 %v2134, 88
        %v2194 = vpop.permute.xlu0 %2193
        %2195 = vrot.lane.b32.xlu0 %v2135, 88
        %v2196 = vpop.permute.xlu0 %2195
        %2197 = vrot.lane.b32.xlu0 %v2189, 88
        %v2198 = vpop.permute.xlu0 %2197
        %2199 = vrot.lane.b32.xlu0 %v2190, 88
        %v2200 = vpop.permute.xlu0 %2199
        %2201 = vrot.lane.b32.xlu0 %v2137, 88
        %v2202 = vpop.permute.xlu0 %2201
        %2203 = vrot.lane.b32.xlu0 %v2138, 88
        %v2204 = vpop.permute.xlu0 %2203
        %2205 = vrot.lane.b32.xlu0 %v2191, 88
        %v2206 = vpop.permute.xlu0 %2205
        %2207 = vrot.lane.b32.xlu0 %v2192, 88
        %v2208 = vpop.permute.xlu0 %2207
        %v2209 = vsel %vm895, %v2194, %v2196
        %v2210 = vsel %vm895, %v2196, %v2198
        %v2211 = vsel %vm895, %v2198, %v2200
        %v2212 = vsel %vm895, %v2202, %v2204
        %v2213 = vsel %vm895, %v2204, %v2206
        %v2214 = vsel %vm895, %v2206, %v2208
        %v2215 = vpack.c.b16 %v2187, %v2185
        %v2216 = vpack.c.b16 %v2188, %v2186
        %v2217 = vrot.slane %v2215, 6
        %v2218 = vrot.slane %v2216, 6
        %2219 = vrot.lane.b32.xlu0 %v2156, 87
        %v2220 = vpop.permute.xlu0 %2219
        %2221 = vrot.lane.b32.xlu0 %v2157, 87
        %v2222 = vpop.permute.xlu0 %2221
        %2223 = vrot.lane.b32.xlu0 %v2217, 87
        %v2224 = vpop.permute.xlu0 %2223
        %2225 = vrot.lane.b32.xlu0 %v2218, 87
        %v2226 = vpop.permute.xlu0 %2225
        %v2227 = vsel %vm929, %v2220, %v2222
        %v2228 = vsel %vm929, %v2222, %v2224
        %v2229 = vsel %vm929, %v2224, %v2226
        %2230 = vrot.lane.b32.xlu0 %v2120, 86
        %v2231 = vpop.permute.xlu0 %2230
        %2232 = vrot.lane.b32.xlu0 %v2121, 86
        %v2233 = vpop.permute.xlu0 %2232
        %2234 = vrot.lane.b32.xlu0 %v2215, 86
        %v2235 = vpop.permute.xlu0 %2234
        %2236 = vrot.lane.b32.xlu0 %v2216, 86
        %v2237 = vpop.permute.xlu0 %2236
        %v2238 = vsel %vm949, %v2231, %v2233
        %v2239 = vsel %vm949, %v2233, %v2235
        %v2240 = vsel %vm949, %v2235, %v2237
        %v2243 = vsel %vm1082, %v2120, %v2132
        %v2246 = vsel %vm1082, %v2121, %v2133
        %v2249 = vsel %vm1082, %v2122, %v2131
        %v2251 = vsel %vm1120, %v2132, %v2152
        %v2253 = vsel %vm1120, %v2133, %v2153
        %v2255 = vsel %vm1120, %v2131, %v2145
        %v2258 = vsel %vm1155, %v2154, %v2165
        %v2261 = vsel %vm1155, %v2155, %v2166
        %v2264 = vsel %vm1155, %v2151, %v2164
        %v2267 = vsel %vm1082, %v2173, %v2181
        %v2270 = vsel %vm1082, %v2174, %v2182
        %v2273 = vsel %vm1082, %v2172, %v2180
        %v2275 = vsel %vm1120, %v2181, %v2209
        %v2277 = vsel %vm1120, %v2182, %v2210
        %v2279 = vsel %vm1120, %v2180, %v2211
        %v2282 = vsel %vm1155, %v2212, %v2227
        %v2285 = vsel %vm1155, %v2213, %v2228
        %v2288 = vsel %vm1155, %v2214, %v2229
        %v2289 = vld [vmem:[%s9] sm:$0xff]
        %v2290 = vld [vmem:[%s9 + $0x8] sm:$0xf]
        %v2291 = vld [vmem:[%s10] sm:$0xff]
        %v2292 = vld [vmem:[%s10 + $0x8] sm:$0xf]
        %2294 = vset.pattern.permute.xlu0 0
        %2295 = vperm.xlu0 %2294, %v2289
        %v2296 = vpop.permute.xlu0 %2295
        %2299 = vset.pattern.permute.xlu0 0
        %2300 = vperm.xlu0 %2299, %v2290
        %v2301 = vpop.permute.xlu0 %2300
        %v2305 = vunpack.c.l.b16 %v2102
        %v2306 = vunpack.c.l.b16 %v2103
        %v2307 = vpack.c.b16 %v2306, %v2305
        %2326 = vrot.lane.b32.xlu0 %v2243, 89
        %v2327 = vpop.permute.xlu0 %2326
        %2328 = vrot.lane.b32.xlu0 %v2246, 89
        %v2329 = vpop.permute.xlu0 %2328
        %2330 = vrot.lane.b32.xlu0 %v2249, 89
        %v2331 = vpop.permute.xlu0 %2330
        %2332 = vrot.lane.b32.xlu0 %v2251, 89
        %v2333 = vpop.permute.xlu0 %2332
        %2334 = vrot.lane.b32.xlu0 %v2253, 89
        %v2335 = vpop.permute.xlu0 %2334
        %2336 = vrot.lane.b32.xlu0 %v2255, 89
        %v2337 = vpop.permute.xlu0 %2336
        %2338 = vrot.lane.b32.xlu0 %v2258, 89
        %v2339 = vpop.permute.xlu0 %2338
        %2340 = vrot.lane.b32.xlu0 %v2261, 89
        %v2341 = vpop.permute.xlu0 %2340
        %2342 = vrot.lane.b32.xlu0 %v2264, 89
        %v2343 = vpop.permute.xlu0 %2342
        %2344 = vrot.lane.b32.xlu0 %v2267, 89
        %v2345 = vpop.permute.xlu0 %2344
        %2346 = vrot.lane.b32.xlu0 %v2270, 89
        %v2347 = vpop.permute.xlu0 %2346
        %2348 = vrot.lane.b32.xlu0 %v2273, 89
        %v2349 = vpop.permute.xlu0 %2348
        %2350 = vrot.lane.b32.xlu0 %v2275, 89
        %v2351 = vpop.permute.xlu0 %2350
        %2352 = vrot.lane.b32.xlu0 %v2277, 89
        %v2353 = vpop.permute.xlu0 %2352
        %2354 = vrot.lane.b32.xlu0 %v2279, 89
        %v2355 = vpop.permute.xlu0 %2354
        %2356 = vrot.lane.b32.xlu0 %v2282, 89
        %v2357 = vpop.permute.xlu0 %2356
        %2358 = vrot.lane.b32.xlu0 %v2285, 89
        %v2359 = vpop.permute.xlu0 %2358
        %2360 = vrot.lane.b32.xlu0 %v2288, 89
        %v2361 = vpop.permute.xlu0 %2360
        %2362 = vrot.lane.b32.xlu0 %v2238, 89
        %v2363 = vpop.permute.xlu0 %2362
        %2364 = vrot.lane.b32.xlu0 %v2239, 89
        %v2365 = vpop.permute.xlu0 %2364
        %2366 = vrot.lane.b32.xlu0 %v2240, 89
        %v2367 = vpop.permute.xlu0 %2366
        %vm2368 = vcmask 728064
        %v2369 = vsel %vm2368, %v2327, %v2329
        %v2370 = vsel %vm2368, %v2329, %v2331
        %v2371 = vsel %vm2368, %v2333, %v2335
        %v2372 = vsel %vm2368, %v2335, %v2337
        %v2373 = vsel %vm2368, %v2339, %v2341
        %v2374 = vsel %vm2368, %v2341, %v2343
        %v2375 = vsel %vm2368, %v2345, %v2347
        %v2376 = vsel %vm2368, %v2347, %v2349
        %v2377 = vsel %vm2368, %v2351, %v2353
        %v2378 = vsel %vm2368, %v2353, %v2355
        %v2379 = vsel %vm2368, %v2357, %v2359
        %v2380 = vsel %vm2368, %v2359, %v2361
        %v2381 = vsel %vm2368, %v2363, %v2365
        %v2382 = vsel %vm2368, %v2365, %v2367
        %vm2401 = vcmask 883712
        %v2403 = vsel %vm2401, %v2307, 0
        %v2406 = vsel %vm1082, %v2381, 0
        %v2409 = vsel %vm1082, %v2382, 0
        %v2412 = vsel %vm1082, %v2367, 0
        %2414 = vmatpush.bf16.msra.mxu0 0
        %2415 = vmatpush.bf16.msra.mxu0 %v2406
        %2416 = vmatpush.bf16.msra.mxu0 %v2379
        %2417 = vmatpush.bf16.msra.mxu0 %v2377
        %2418 = vmatpush.bf16.msra.mxu0 %v2375
        %2419 = vmatpush.bf16.msra.mxu0 %v2373
        %2420 = vmatpush.bf16.msra.mxu0 %v2371
        %2421 = vmatpush.bf16.msra.mxu0 %v2369
        %2422 = vmatmul.bf16.gmra.mxu0 %v2403
        %v2423 = vpop.f32.mrf.mxu0
        %v2424 = vadd.f32 %v2296, %v2423
        %v2425 = vpop.f32.mrf.mxu0
        %v2426 = vadd.f32 %v2301, %v2425
        %2427 = vdwg.mxu0
        %2428 = vmatpush.bf16.msra.mxu0 0
        %2429 = vmatpush.bf16.msra.mxu0 %v2409
        %2430 = vmatpush.bf16.msra.mxu0 %v2380
        %2431 = vmatpush.bf16.msra.mxu0 %v2378
        %2432 = vmatpush.bf16.msra.mxu0 %v2376
        %2433 = vmatpush.bf16.msra.mxu0 %v2374
        %2434 = vmatpush.bf16.msra.mxu0 %v2372
        %2435 = vmatpush.bf16.msra.mxu0 %v2370
        %2436 = vmatmul.bf16.gmra.mxu0 %v2403
        %v2437 = vpop.f32.mrf.mxu0
        %v2438 = vadd.f32 %v2296, %v2437
        %v2439 = vpop.f32.mrf.mxu0
        %v2440 = vadd.f32 %v2301, %v2439
        %2441 = vdwg.mxu0
        %2442 = vmatpush.bf16.msra.mxu0 0
        %2443 = vmatpush.bf16.msra.mxu0 %v2412
        %2444 = vmatpush.bf16.msra.mxu0 %v2361
        %2445 = vmatpush.bf16.msra.mxu0 %v2355
        %2446 = vmatpush.bf16.msra.mxu0 %v2349
        %2447 = vmatpush.bf16.msra.mxu0 %v2343
        %2448 = vmatpush.bf16.msra.mxu0 %v2337
        %2449 = vmatpush.bf16.msra.mxu0 %v2331
        %2450 = vmatmul.bf16.gmra.mxu0 %v2403
        %v2451 = vpop.f32.mrf.mxu0
        %v2452 = vadd.f32 %v2296, %v2451
        %v2453 = vpop.f32.mrf.mxu0
        %v2454 = vadd.f32 %v2301, %v2453
        %2455 = vdwg.mxu0
        %vm2456 = vcmp.gt.f32.partialorder %v2424, 0.0
        %vm2457 = vcmp.gt.f32.partialorder %v2438, 0.0
        %vm2458 = vcmp.gt.f32.partialorder %v2452, 0.0
        %vm2459 = vcmp.gt.f32.partialorder %v2426, 0.0
        %vm2460 = vcmp.gt.f32.partialorder %v2440, 0.0
        %vm2461 = vcmp.gt.f32.partialorder %v2454, 0.0
        %2463 = vset.pattern.permute.xlu0 0
        %2464 = vperm.xlu0 %2463, %v2291
        %v2465 = vpop.permute.xlu0 %2464
        %2468 = vset.pattern.permute.xlu0 0
        %2469 = vperm.xlu0 %2468, %v2292
        %v2470 = vpop.permute.xlu0 %2469
        %v2472 = vmul.f32 %v2465, %v2424
        %v2473 = vmul.f32 %v2465, %v2438
        %v2474 = vmul.f32 %v2465, %v2452
        %v2475 = vmul.f32 %v2470, %v2426
        %v2476 = vmul.f32 %v2470, %v2440
        %v2477 = vmul.f32 %v2470, %v2454
        %v2478 = vsel %vm2456, %v2424, %v2472
        %v2479 = vsel %vm2457, %v2438, %v2473
        %v2480 = vsel %vm2458, %v2452, %v2474
        %v2481 = vsel %vm2459, %v2426, %v2475
        %v2482 = vsel %vm2460, %v2440, %v2476
        %v2483 = vsel %vm2461, %v2454, %v2477
        %v2484 = vmul.f32 %v2478, %v2051
        %v2485 = vmul.f32 %v2479, %v2052
        %v2486 = vmul.f32 %v2480, %v2053
        %v2487 = vmul.f32 %v2481, %v2051
        %v2488 = vmul.f32 %v2482, %v2052
        %v2489 = vmul.f32 %v2483, %v2053
        %v2490 = vpack.c.bf16 %v2485, %v2484
        %v2491 = vpack.c.bf16 %v2486, %v2486
        %v2492 = vpack.c.bf16 %v2488, %v2487
        %v2493 = vpack.c.bf16 %v2489, %v2489
        %2498 = vrot.lane.b32.xlu0 %v2490, 60
        %v2499 = vpop.permute.xlu0 %2498
        %2500 = vrot.lane.b32.xlu0 %v2491, 60
        %v2501 = vpop.permute.xlu0 %2500
        %2502 = vrot.lane.b32.xlu0 %v2492, 60
        %v2503 = vpop.permute.xlu0 %2502
        %2504 = vrot.lane.b32.xlu0 %v2493, 60
        %v2505 = vpop.permute.xlu0 %2504
        %v2506 = vrot.slane %v2499, 4
        %v2507 = vrot.slane %v2503, 4
        %v2508 = vsel %vm2081, %v2506, %v2499
        %v2509 = vsel %vm2081, %v2506, %v2501
        %v2510 = vsel %vm2081, %v2507, %v2503
        %v2511 = vsel %vm2081, %v2507, %v2505
        %2516 = vst.msk [vmem:[#allocation2] sm:$0xff] %vm2092, %v2508
        %2517 = vst.msk [vmem:[#allocation2 + $0x8] sm:$0xf] %vm2094, %v2509
        %2518 = vst.msk [vmem:[#allocation2 + $0x10] sm:$0x33] %vm2098, %v2510
        %2519 = vst.msk [vmem:[#allocation2 + $0x18] sm:$0x3] %vm2100, %v2511
        %s2520 = scalar_lea.vmem %s8, 8
        %v2521 = vld [vmem:[%s2520] sm:$0xf]
        %v2522 = vld [vmem:[%s2520 + $0x4] sm:$0x3]
        %v2523 = vld [vmem:[#allocation2] sm:$0xff]
        %v2524 = vld [vmem:[#allocation2 + $0x8] sm:$0xf]
        %v2525 = vld [vmem:[#allocation2 + $0x10] sm:$0x33]
        %v2526 = vld [vmem:[#allocation2 + $0x18] sm:$0x3]
        %v2527 = vld [vmem:[#allocation2 + $0x8] sm:$0xff]
        %v2528 = vld [vmem:[#allocation2 + $0x18] sm:$0x33]
        %v2533 = vunpack.c.l.b16 %v2523
        %v2534 = vunpack.c.h.b16 %v2523
        %v2535 = vunpack.c.l.b16 %v2524
        %v2536 = vunpack.c.l.b16 %v2525
        %v2537 = vunpack.c.h.b16 %v2525
        %v2538 = vunpack.c.l.b16 %v2526
        %v2539 = vpack.c.b16 %v2536, %v2533
        %v2540 = vpack.c.b16 %v2537, %v2534
        %v2541 = vpack.c.b16 %v2538, %v2535
        %v2542 = vrot.slane %v2539, 2
        %v2543 = vrot.slane %v2540, 2
        %v2544 = vrot.slane %v2541, 2
        %2545 = vrot.lane.b32.xlu0 %v2542, 127
        %v2546 = vpop.permute.xlu0 %2545
        %2547 = vrot.lane.b32.xlu0 %v2543, 127
        %v2548 = vpop.permute.xlu0 %2547
        %2549 = vrot.lane.b32.xlu0 %v2544, 127
        %v2550 = vpop.permute.xlu0 %2549
        %v2551 = vsel %vm648, %v2546, %v2548
        %v2552 = vsel %vm648, %v2548, %v2550
        %v2553 = vpack.c.b16 %v2533, %v2533
        %v2554 = vpack.c.b16 %v2534, %v2534
        %v2555 = vpack.c.b16 %v2535, %v2535
        %v2556 = vpack.c.b16 %v2536, %v2536
        %v2557 = vpack.c.b16 %v2537, %v2537
        %v2558 = vpack.c.b16 %v2538, %v2538
        %2559 = vrot.lane.b32.xlu0 %v2553, 126
        %v2560 = vpop.permute.xlu0 %2559
        %2561 = vrot.lane.b32.xlu0 %v2554, 126
        %v2562 = vpop.permute.xlu0 %2561
        %2563 = vrot.lane.b32.xlu0 %v2555, 126
        %v2564 = vpop.permute.xlu0 %2563
        %2565 = vrot.lane.b32.xlu0 %v2556, 126
        %v2566 = vpop.permute.xlu0 %2565
        %2567 = vrot.lane.b32.xlu0 %v2557, 126
        %v2568 = vpop.permute.xlu0 %2567
        %2569 = vrot.lane.b32.xlu0 %v2558, 126
        %v2570 = vpop.permute.xlu0 %2569
        %v2571 = vsel %vm670, %v2560, %v2562
        %v2572 = vsel %vm670, %v2562, %v2564
        %v2573 = vsel %vm670, %v2566, %v2568
        %v2574 = vsel %vm670, %v2568, %v2570
        %v2575 = vrot.slane %v2539, 6
        %v2576 = vrot.slane %v2540, 6
        %v2577 = vrot.slane %v2541, 6
        %2578 = vrot.lane.b32.xlu0 %v2575, 108
        %v2579 = vpop.permute.xlu0 %2578
        %2580 = vrot.lane.b32.xlu0 %v2576, 108
        %v2581 = vpop.permute.xlu0 %2580
        %2582 = vrot.lane.b32.xlu0 %v2577, 108
        %v2583 = vpop.permute.xlu0 %2582
        %v2584 = vsel %vm761, %v2579, %v2581
        %v2585 = vsel %vm761, %v2581, %v2583
        %2586 = vrot.lane.b32.xlu0 %v2539, 107
        %v2587 = vpop.permute.xlu0 %2586
        %2588 = vrot.lane.b32.xlu0 %v2540, 107
        %v2589 = vpop.permute.xlu0 %2588
        %2590 = vrot.lane.b32.xlu0 %v2541, 107
        %v2591 = vpop.permute.xlu0 %2590
        %v2592 = vsel %vm785, %v2587, %v2589
        %v2593 = vsel %vm785, %v2589, %v2591
        %2594 = vrot.lane.b32.xlu0 %v2542, 106
        %v2595 = vpop.permute.xlu0 %2594
        %2596 = vrot.lane.b32.xlu0 %v2543, 106
        %v2597 = vpop.permute.xlu0 %2596
        %2598 = vrot.lane.b32.xlu0 %v2544, 106
        %v2599 = vpop.permute.xlu0 %2598
        %v2600 = vsel %vm819, %v2595, %v2597
        %v2601 = vsel %vm819, %v2597, %v2599
        %v2604 = vunpack.c.l.b16 %v2527
        %v2605 = vunpack.c.h.b16 %v2527
        %v2606 = vunpack.c.l.b16 %v2528
        %v2607 = vunpack.c.h.b16 %v2528
        %v2608 = vpack.c.b16 %v2604, %v2604
        %v2609 = vpack.c.b16 %v2605, %v2605
        %v2610 = vpack.c.b16 %v2606, %v2606
        %v2611 = vpack.c.b16 %v2607, %v2607
        %2612 = vrot.lane.b32.xlu0 %v2553, 88
        %v2613 = vpop.permute.xlu0 %2612
        %2614 = vrot.lane.b32.xlu0 %v2554, 88
        %v2615 = vpop.permute.xlu0 %2614
        %2616 = vrot.lane.b32.xlu0 %v2608, 88
        %v2617 = vpop.permute.xlu0 %2616
        %2618 = vrot.lane.b32.xlu0 %v2609, 88
        %v2619 = vpop.permute.xlu0 %2618
        %2620 = vrot.lane.b32.xlu0 %v2556, 88
        %v2621 = vpop.permute.xlu0 %2620
        %2622 = vrot.lane.b32.xlu0 %v2557, 88
        %v2623 = vpop.permute.xlu0 %2622
        %2624 = vrot.lane.b32.xlu0 %v2610, 88
        %v2625 = vpop.permute.xlu0 %2624
        %2626 = vrot.lane.b32.xlu0 %v2611, 88
        %v2627 = vpop.permute.xlu0 %2626
        %v2628 = vsel %vm895, %v2613, %v2615
        %v2629 = vsel %vm895, %v2615, %v2617
        %v2630 = vsel %vm895, %v2617, %v2619
        %v2631 = vsel %vm895, %v2621, %v2623
        %v2632 = vsel %vm895, %v2623, %v2625
        %v2633 = vsel %vm895, %v2625, %v2627
        %v2634 = vpack.c.b16 %v2606, %v2604
        %v2635 = vpack.c.b16 %v2607, %v2605
        %v2636 = vrot.slane %v2634, 6
        %v2637 = vrot.slane %v2635, 6
        %2638 = vrot.lane.b32.xlu0 %v2575, 87
        %v2639 = vpop.permute.xlu0 %2638
        %2640 = vrot.lane.b32.xlu0 %v2576, 87
        %v2641 = vpop.permute.xlu0 %2640
        %2642 = vrot.lane.b32.xlu0 %v2636, 87
        %v2643 = vpop.permute.xlu0 %2642
        %2644 = vrot.lane.b32.xlu0 %v2637, 87
        %v2645 = vpop.permute.xlu0 %2644
        %v2646 = vsel %vm929, %v2639, %v2641
        %v2647 = vsel %vm929, %v2641, %v2643
        %v2648 = vsel %vm929, %v2643, %v2645
        %2649 = vrot.lane.b32.xlu0 %v2539, 86
        %v2650 = vpop.permute.xlu0 %2649
        %2651 = vrot.lane.b32.xlu0 %v2540, 86
        %v2652 = vpop.permute.xlu0 %2651
        %2653 = vrot.lane.b32.xlu0 %v2634, 86
        %v2654 = vpop.permute.xlu0 %2653
        %2655 = vrot.lane.b32.xlu0 %v2635, 86
        %v2656 = vpop.permute.xlu0 %2655
        %v2657 = vsel %vm949, %v2650, %v2652
        %v2658 = vsel %vm949, %v2652, %v2654
        %v2659 = vsel %vm949, %v2654, %v2656
        %v2662 = vsel %vm1082, %v2539, %v2551
        %v2665 = vsel %vm1082, %v2540, %v2552
        %v2668 = vsel %vm1082, %v2541, %v2550
        %v2670 = vsel %vm1120, %v2551, %v2571
        %v2672 = vsel %vm1120, %v2552, %v2572
        %v2674 = vsel %vm1120, %v2550, %v2564
        %v2677 = vsel %vm1155, %v2573, %v2584
        %v2680 = vsel %vm1155, %v2574, %v2585
        %v2683 = vsel %vm1155, %v2570, %v2583
        %v2686 = vsel %vm1082, %v2592, %v2600
        %v2689 = vsel %vm1082, %v2593, %v2601
        %v2692 = vsel %vm1082, %v2591, %v2599
        %v2694 = vsel %vm1120, %v2600, %v2628
        %v2696 = vsel %vm1120, %v2601, %v2629
        %v2698 = vsel %vm1120, %v2599, %v2630
        %v2701 = vsel %vm1155, %v2631, %v2646
        %v2704 = vsel %vm1155, %v2632, %v2647
        %v2707 = vsel %vm1155, %v2633, %v2648
        %s2708 = scalar_lea.vmem %s9, 16
        %v2709 = vld [vmem:[%s2708] sm:$0xff]
        %v2710 = vld [vmem:[%s2708 + $0x8] sm:$0xf]
        %s2711 = scalar_lea.vmem %s10, 16
        %v2712 = vld [vmem:[%s2711] sm:$0xff]
        %v2713 = vld [vmem:[%s2711 + $0x8] sm:$0xf]
        %2715 = vset.pattern.permute.xlu0 0
        %2716 = vperm.xlu0 %2715, %v2709
        %v2717 = vpop.permute.xlu0 %2716
        %2720 = vset.pattern.permute.xlu0 0
        %2721 = vperm.xlu0 %2720, %v2710
        %v2722 = vpop.permute.xlu0 %2721
        %v2726 = vunpack.c.l.b16 %v2521
        %v2727 = vunpack.c.l.b16 %v2522
        %v2728 = vpack.c.b16 %v2727, %v2726
        %2747 = vrot.lane.b32.xlu0 %v2662, 89
        %v2748 = vpop.permute.xlu0 %2747
        %2749 = vrot.lane.b32.xlu0 %v2665, 89
        %v2750 = vpop.permute.xlu0 %2749
        %2751 = vrot.lane.b32.xlu0 %v2668, 89
        %v2752 = vpop.permute.xlu0 %2751
        %2753 = vrot.lane.b32.xlu0 %v2670, 89
        %v2754 = vpop.permute.xlu0 %2753
        %2755 = vrot.lane.b32.xlu0 %v2672, 89
        %v2756 = vpop.permute.xlu0 %2755
        %2757 = vrot.lane.b32.xlu0 %v2674, 89
        %v2758 = vpop.permute.xlu0 %2757
        %2759 = vrot.lane.b32.xlu0 %v2677, 89
        %v2760 = vpop.permute.xlu0 %2759
        %2761 = vrot.lane.b32.xlu0 %v2680, 89
        %v2762 = vpop.permute.xlu0 %2761
        %2763 = vrot.lane.b32.xlu0 %v2683, 89
        %v2764 = vpop.permute.xlu0 %2763
        %2765 = vrot.lane.b32.xlu0 %v2686, 89
        %v2766 = vpop.permute.xlu0 %2765
        %2767 = vrot.lane.b32.xlu0 %v2689, 89
        %v2768 = vpop.permute.xlu0 %2767
        %2769 = vrot.lane.b32.xlu0 %v2692, 89
        %v2770 = vpop.permute.xlu0 %2769
        %2771 = vrot.lane.b32.xlu0 %v2694, 89
        %v2772 = vpop.permute.xlu0 %2771
        %2773 = vrot.lane.b32.xlu0 %v2696, 89
        %v2774 = vpop.permute.xlu0 %2773
        %2775 = vrot.lane.b32.xlu0 %v2698, 89
        %v2776 = vpop.permute.xlu0 %2775
        %2777 = vrot.lane.b32.xlu0 %v2701, 89
        %v2778 = vpop.permute.xlu0 %2777
        %2779 = vrot.lane.b32.xlu0 %v2704, 89
        %v2780 = vpop.permute.xlu0 %2779
        %2781 = vrot.lane.b32.xlu0 %v2707, 89
        %v2782 = vpop.permute.xlu0 %2781
        %2783 = vrot.lane.b32.xlu0 %v2657, 89
        %v2784 = vpop.permute.xlu0 %2783
        %2785 = vrot.lane.b32.xlu0 %v2658, 89
        %v2786 = vpop.permute.xlu0 %2785
        %2787 = vrot.lane.b32.xlu0 %v2659, 89
        %v2788 = vpop.permute.xlu0 %2787
        %v2789 = vsel %vm2368, %v2748, %v2750
        %v2790 = vsel %vm2368, %v2750, %v2752
        %v2791 = vsel %vm2368, %v2754, %v2756
        %v2792 = vsel %vm2368, %v2756, %v2758
        %v2793 = vsel %vm2368, %v2760, %v2762
        %v2794 = vsel %vm2368, %v2762, %v2764
        %v2795 = vsel %vm2368, %v2766, %v2768
        %v2796 = vsel %vm2368, %v2768, %v2770
        %v2797 = vsel %vm2368, %v2772, %v2774
        %v2798 = vsel %vm2368, %v2774, %v2776
        %v2799 = vsel %vm2368, %v2778, %v2780
        %v2800 = vsel %vm2368, %v2780, %v2782
        %v2801 = vsel %vm2368, %v2784, %v2786
        %v2802 = vsel %vm2368, %v2786, %v2788
        %v2822 = vsel %vm2401, %v2728, 0
        %v2825 = vsel %vm1082, %v2801, 0
        %v2828 = vsel %vm1082, %v2802, 0
        %v2831 = vsel %vm1082, %v2788, 0
        %2833 = vmatpush.bf16.msra.mxu0 0
        %2834 = vmatpush.bf16.msra.mxu0 %v2825
        %2835 = vmatpush.bf16.msra.mxu0 %v2799
        %2836 = vmatpush.bf16.msra.mxu0 %v2797
        %2837 = vmatpush.bf16.msra.mxu0 %v2795
        %2838 = vmatpush.bf16.msra.mxu0 %v2793
        %2839 = vmatpush.bf16.msra.mxu0 %v2791
        %2840 = vmatpush.bf16.msra.mxu0 %v2789
        %2841 = vmatmul.bf16.gmra.mxu0 %v2822
        %v2842 = vpop.f32.mrf.mxu0
        %v2843 = vadd.f32 %v2717, %v2842
        %v2844 = vpop.f32.mrf.mxu0
        %v2845 = vadd.f32 %v2722, %v2844
        %2846 = vdwg.mxu0
        %2847 = vmatpush.bf16.msra.mxu0 0
        %2848 = vmatpush.bf16.msra.mxu0 %v2828
        %2849 = vmatpush.bf16.msra.mxu0 %v2800
        %2850 = vmatpush.bf16.msra.mxu0 %v2798
        %2851 = vmatpush.bf16.msra.mxu0 %v2796
        %2852 = vmatpush.bf16.msra.mxu0 %v2794
        %2853 = vmatpush.bf16.msra.mxu0 %v2792
        %2854 = vmatpush.bf16.msra.mxu0 %v2790
        %2855 = vmatmul.bf16.gmra.mxu0 %v2822
        %v2856 = vpop.f32.mrf.mxu0
        %v2857 = vadd.f32 %v2717, %v2856
        %v2858 = vpop.f32.mrf.mxu0
        %v2859 = vadd.f32 %v2722, %v2858
        %2860 = vdwg.mxu0
        %2861 = vmatpush.bf16.msra.mxu0 0
        %2862 = vmatpush.bf16.msra.mxu0 %v2831
        %2863 = vmatpush.bf16.msra.mxu0 %v2782
        %2864 = vmatpush.bf16.msra.mxu0 %v2776
        %2865 = vmatpush.bf16.msra.mxu0 %v2770
        %2866 = vmatpush.bf16.msra.mxu0 %v2764
        %2867 = vmatpush.bf16.msra.mxu0 %v2758
        %2868 = vmatpush.bf16.msra.mxu0 %v2752
        %2869 = vmatmul.bf16.gmra.mxu0 %v2822
        %v2870 = vpop.f32.mrf.mxu0
        %v2871 = vadd.f32 %v2717, %v2870
        %v2872 = vpop.f32.mrf.mxu0
        %v2873 = vadd.f32 %v2722, %v2872
        %2874 = vdwg.mxu0
        %vm2875 = vcmp.gt.f32.partialorder %v2843, 0.0
        %vm2876 = vcmp.gt.f32.partialorder %v2857, 0.0
        %vm2877 = vcmp.gt.f32.partialorder %v2871, 0.0
        %vm2878 = vcmp.gt.f32.partialorder %v2845, 0.0
        %vm2879 = vcmp.gt.f32.partialorder %v2859, 0.0
        %vm2880 = vcmp.gt.f32.partialorder %v2873, 0.0
        %2882 = vset.pattern.permute.xlu0 0
        %2883 = vperm.xlu0 %2882, %v2712
        %v2884 = vpop.permute.xlu0 %2883
        %2887 = vset.pattern.permute.xlu0 0
        %2888 = vperm.xlu0 %2887, %v2713
        %v2889 = vpop.permute.xlu0 %2888
        %v2891 = vmul.f32 %v2884, %v2843
        %v2892 = vmul.f32 %v2884, %v2857
        %v2893 = vmul.f32 %v2884, %v2871
        %v2894 = vmul.f32 %v2889, %v2845
        %v2895 = vmul.f32 %v2889, %v2859
        %v2896 = vmul.f32 %v2889, %v2873
        %v2897 = vsel %vm2875, %v2843, %v2891
        %v2898 = vsel %vm2876, %v2857, %v2892
        %v2899 = vsel %vm2877, %v2871, %v2893
        %v2900 = vsel %vm2878, %v2845, %v2894
        %v2901 = vsel %vm2879, %v2859, %v2895
        %v2902 = vsel %vm2880, %v2873, %v2896
        %v2903 = vmul.f32 %v2897, %v2051
        %v2904 = vmul.f32 %v2898, %v2052
        %v2905 = vmul.f32 %v2899, %v2053
        %v2906 = vmul.f32 %v2900, %v2051
        %v2907 = vmul.f32 %v2901, %v2052
        %v2908 = vmul.f32 %v2902, %v2053
        %v2909 = vpack.c.bf16 %v2904, %v2903
        %v2910 = vpack.c.bf16 %v2905, %v2905
        %v2911 = vpack.c.bf16 %v2907, %v2906
        %v2912 = vpack.c.bf16 %v2908, %v2908
        %2917 = vrot.lane.b32.xlu0 %v2909, 60
        %v2918 = vpop.permute.xlu0 %2917
        %2919 = vrot.lane.b32.xlu0 %v2910, 60
        %v2920 = vpop.permute.xlu0 %2919
        %2921 = vrot.lane.b32.xlu0 %v2911, 60
        %v2922 = vpop.permute.xlu0 %2921
        %2923 = vrot.lane.b32.xlu0 %v2912, 60
        %v2924 = vpop.permute.xlu0 %2923
        %v2925 = vrot.slane %v2918, 4
        %v2926 = vrot.slane %v2922, 4
        %v2927 = vsel %vm2081, %v2925, %v2918
        %v2928 = vsel %vm2081, %v2925, %v2920
        %v2929 = vsel %vm2081, %v2926, %v2922
        %v2930 = vsel %vm2081, %v2926, %v2924
        %2935 = vst.msk [vmem:[#allocation2] sm:$0xff] %vm2092, %v2927
        %2936 = vst.msk [vmem:[#allocation2 + $0x8] sm:$0xf] %vm2094, %v2928
        %2937 = vst.msk [vmem:[#allocation2 + $0x10] sm:$0x33] %vm2098, %v2929
        %2938 = vst.msk [vmem:[#allocation2 + $0x18] sm:$0x3] %vm2100, %v2930
        %s2939 = scalar_lea.vmem %s8, 16
        %v2940 = vld [vmem:[%s2939] sm:$0xf]
        %v2941 = vld [vmem:[%s2939 + $0x4] sm:$0x3]
        %v2942 = vld [vmem:[#allocation2] sm:$0xff]
        %v2943 = vld [vmem:[#allocation2 + $0x8] sm:$0xf]
        %v2944 = vld [vmem:[#allocation2 + $0x10] sm:$0x33]
        %v2945 = vld [vmem:[#allocation2 + $0x18] sm:$0x3]
        %v2946 = vld [vmem:[#allocation2 + $0x8] sm:$0xff]
        %v2947 = vld [vmem:[#allocation2 + $0x18] sm:$0x33]
        %v2952 = vunpack.c.l.b16 %v2942
        %v2953 = vunpack.c.h.b16 %v2942
        %v2954 = vunpack.c.l.b16 %v2943
        %v2955 = vunpack.c.l.b16 %v2944
        %v2956 = vunpack.c.h.b16 %v2944
        %v2957 = vunpack.c.l.b16 %v2945
        %v2958 = vpack.c.b16 %v2955, %v2952
        %v2959 = vpack.c.b16 %v2956, %v2953
        %v2960 = vpack.c.b16 %v2957, %v2954
        %v2961 = vrot.slane %v2958, 2
        %v2962 = vrot.slane %v2959, 2
        %v2963 = vrot.slane %v2960, 2
        %2964 = vrot.lane.b32.xlu0 %v2961, 127
        %v2965 = vpop.permute.xlu0 %2964
        %2966 = vrot.lane.b32.xlu0 %v2962, 127
        %v2967 = vpop.permute.xlu0 %2966
        %2968 = vrot.lane.b32.xlu0 %v2963, 127
        %v2969 = vpop.permute.xlu0 %2968
        %v2970 = vsel %vm648, %v2965, %v2967
        %v2971 = vsel %vm648, %v2967, %v2969
        %v2972 = vpack.c.b16 %v2952, %v2952
        %v2973 = vpack.c.b16 %v2953, %v2953
        %v2974 = vpack.c.b16 %v2954, %v2954
        %v2975 = vpack.c.b16 %v2955, %v2955
        %v2976 = vpack.c.b16 %v2956, %v2956
        %v2977 = vpack.c.b16 %v2957, %v2957
        %2978 = vrot.lane.b32.xlu0 %v2972, 126
        %v2979 = vpop.permute.xlu0 %2978
        %2980 = vrot.lane.b32.xlu0 %v2973, 126
        %v2981 = vpop.permute.xlu0 %2980
        %2982 = vrot.lane.b32.xlu0 %v2974, 126
        %v2983 = vpop.permute.xlu0 %2982
        %2984 = vrot.lane.b32.xlu0 %v2975, 126
        %v2985 = vpop.permute.xlu0 %2984
        %2986 = vrot.lane.b32.xlu0 %v2976, 126
        %v2987 = vpop.permute.xlu0 %2986
        %2988 = vrot.lane.b32.xlu0 %v2977, 126
        %v2989 = vpop.permute.xlu0 %2988
        %v2990 = vsel %vm670, %v2979, %v2981
        %v2991 = vsel %vm670, %v2981, %v2983
        %v2992 = vsel %vm670, %v2985, %v2987
        %v2993 = vsel %vm670, %v2987, %v2989
        %v2994 = vrot.slane %v2958, 6
        %v2995 = vrot.slane %v2959, 6
        %v2996 = vrot.slane %v2960, 6
        %2997 = vrot.lane.b32.xlu0 %v2994, 108
        %v2998 = vpop.permute.xlu0 %2997
        %2999 = vrot.lane.b32.xlu0 %v2995, 108
        %v3000 = vpop.permute.xlu0 %2999
        %3001 = vrot.lane.b32.xlu0 %v2996, 108
        %v3002 = vpop.permute.xlu0 %3001
        %v3003 = vsel %vm761, %v2998, %v3000
        %v3004 = vsel %vm761, %v3000, %v3002
        %3005 = vrot.lane.b32.xlu0 %v2958, 107
        %v3006 = vpop.permute.xlu0 %3005
        %3007 = vrot.lane.b32.xlu0 %v2959, 107
        %v3008 = vpop.permute.xlu0 %3007
        %3009 = vrot.lane.b32.xlu0 %v2960, 107
        %v3010 = vpop.permute.xlu0 %3009
        %v3011 = vsel %vm785, %v3006, %v3008
        %v3012 = vsel %vm785, %v3008, %v3010
        %3013 = vrot.lane.b32.xlu0 %v2961, 106
        %v3014 = vpop.permute.xlu0 %3013
        %3015 = vrot.lane.b32.xlu0 %v2962, 106
        %v3016 = vpop.permute.xlu0 %3015
        %3017 = vrot.lane.b32.xlu0 %v2963, 106
        %v3018 = vpop.permute.xlu0 %3017
        %v3019 = vsel %vm819, %v3014, %v3016
        %v3020 = vsel %vm819, %v3016, %v3018
        %v3023 = vunpack.c.l.b16 %v2946
        %v3024 = vunpack.c.h.b16 %v2946
        %v3025 = vunpack.c.l.b16 %v2947
        %v3026 = vunpack.c.h.b16 %v2947
        %v3027 = vpack.c.b16 %v3023, %v3023
        %v3028 = vpack.c.b16 %v3024, %v3024
        %v3029 = vpack.c.b16 %v3025, %v3025
        %v3030 = vpack.c.b16 %v3026, %v3026
        %3031 = vrot.lane.b32.xlu0 %v2972, 88
        %v3032 = vpop.permute.xlu0 %3031
        %3033 = vrot.lane.b32.xlu0 %v2973, 88
        %v3034 = vpop.permute.xlu0 %3033
        %3035 = vrot.lane.b32.xlu0 %v3027, 88
        %v3036 = vpop.permute.xlu0 %3035
        %3037 = vrot.lane.b32.xlu0 %v3028, 88
        %v3038 = vpop.permute.xlu0 %3037
        %3039 = vrot.lane.b32.xlu0 %v2975, 88
        %v3040 = vpop.permute.xlu0 %3039
        %3041 = vrot.lane.b32.xlu0 %v2976, 88
        %v3042 = vpop.permute.xlu0 %3041
        %3043 = vrot.lane.b32.xlu0 %v3029, 88
        %v3044 = vpop.permute.xlu0 %3043
        %3045 = vrot.lane.b32.xlu0 %v3030, 88
        %v3046 = vpop.permute.xlu0 %3045
        %v3047 = vsel %vm895, %v3032, %v3034
        %v3048 = vsel %vm895, %v3034, %v3036
        %v3049 = vsel %vm895, %v3036, %v3038
        %v3050 = vsel %vm895, %v3040, %v3042
        %v3051 = vsel %vm895, %v3042, %v3044
        %v3052 = vsel %vm895, %v3044, %v3046
        %v3053 = vpack.c.b16 %v3025, %v3023
        %v3054 = vpack.c.b16 %v3026, %v3024
        %v3055 = vrot.slane %v3053, 6
        %v3056 = vrot.slane %v3054, 6
        %3057 = vrot.lane.b32.xlu0 %v2994, 87
        %v3058 = vpop.permute.xlu0 %3057
        %3059 = vrot.lane.b32.xlu0 %v2995, 87
        %v3060 = vpop.permute.xlu0 %3059
        %3061 = vrot.lane.b32.xlu0 %v3055, 87
        %v3062 = vpop.permute.xlu0 %3061
        %3063 = vrot.lane.b32.xlu0 %v3056, 87
        %v3064 = vpop.permute.xlu0 %3063
        %v3065 = vsel %vm929, %v3058, %v3060
        %v3066 = vsel %vm929, %v3060, %v3062
        %v3067 = vsel %vm929, %v3062, %v3064
        %3068 = vrot.lane.b32.xlu0 %v2958, 86
        %v3069 = vpop.permute.xlu0 %3068
        %3070 = vrot.lane.b32.xlu0 %v2959, 86
        %v3071 = vpop.permute.xlu0 %3070
        %3072 = vrot.lane.b32.xlu0 %v3053, 86
        %v3073 = vpop.permute.xlu0 %3072
        %3074 = vrot.lane.b32.xlu0 %v3054, 86
        %v3075 = vpop.permute.xlu0 %3074
        %v3076 = vsel %vm949, %v3069, %v3071
        %v3077 = vsel %vm949, %v3071, %v3073
        %v3078 = vsel %vm949, %v3073, %v3075
        %v3081 = vsel %vm1082, %v2958, %v2970
        %v3084 = vsel %vm1082, %v2959, %v2971
        %v3087 = vsel %vm1082, %v2960, %v2969
        %v3089 = vsel %vm1120, %v2970, %v2990
        %v3091 = vsel %vm1120, %v2971, %v2991
        %v3093 = vsel %vm1120, %v2969, %v2983
        %v3096 = vsel %vm1155, %v2992, %v3003
        %v3099 = vsel %vm1155, %v2993, %v3004
        %v3102 = vsel %vm1155, %v2989, %v3002
        %v3105 = vsel %vm1082, %v3011, %v3019
        %v3108 = vsel %vm1082, %v3012, %v3020
        %v3111 = vsel %vm1082, %v3010, %v3018
        %v3113 = vsel %vm1120, %v3019, %v3047
        %v3115 = vsel %vm1120, %v3020, %v3048
        %v3117 = vsel %vm1120, %v3018, %v3049
        %v3120 = vsel %vm1155, %v3050, %v3065
        %v3123 = vsel %vm1155, %v3051, %v3066
        %v3126 = vsel %vm1155, %v3052, %v3067
        %s3127 = scalar_lea.vmem %s9, 32
        %v3128 = vld [vmem:[%s3127] sm:$0xff]
        %v3129 = vld [vmem:[%s3127 + $0x8] sm:$0xf]
        %s3130 = scalar_lea.vmem %s10, 32
        %v3131 = vld [vmem:[%s3130] sm:$0xff]
        %v3132 = vld [vmem:[%s3130 + $0x8] sm:$0xf]
        %3134 = vset.pattern.permute.xlu0 0
        %3135 = vperm.xlu0 %3134, %v3128
        %v3136 = vpop.permute.xlu0 %3135
        %3139 = vset.pattern.permute.xlu0 0
        %3140 = vperm.xlu0 %3139, %v3129
        %v3141 = vpop.permute.xlu0 %3140
        %v3145 = vunpack.c.l.b16 %v2940
        %v3146 = vunpack.c.l.b16 %v2941
        %v3147 = vpack.c.b16 %v3146, %v3145
        %3166 = vrot.lane.b32.xlu0 %v3081, 89
        %v3167 = vpop.permute.xlu0 %3166
        %3168 = vrot.lane.b32.xlu0 %v3084, 89
        %v3169 = vpop.permute.xlu0 %3168
        %3170 = vrot.lane.b32.xlu0 %v3087, 89
        %v3171 = vpop.permute.xlu0 %3170
        %3172 = vrot.lane.b32.xlu0 %v3089, 89
        %v3173 = vpop.permute.xlu0 %3172
        %3174 = vrot.lane.b32.xlu0 %v3091, 89
        %v3175 = vpop.permute.xlu0 %3174
        %3176 = vrot.lane.b32.xlu0 %v3093, 89
        %v3177 = vpop.permute.xlu0 %3176
        %3178 = vrot.lane.b32.xlu0 %v3096, 89
        %v3179 = vpop.permute.xlu0 %3178
        %3180 = vrot.lane.b32.xlu0 %v3099, 89
        %v3181 = vpop.permute.xlu0 %3180
        %3182 = vrot.lane.b32.xlu0 %v3102, 89
        %v3183 = vpop.permute.xlu0 %3182
        %3184 = vrot.lane.b32.xlu0 %v3105, 89
        %v3185 = vpop.permute.xlu0 %3184
        %3186 = vrot.lane.b32.xlu0 %v3108, 89
        %v3187 = vpop.permute.xlu0 %3186
        %3188 = vrot.lane.b32.xlu0 %v3111, 89
        %v3189 = vpop.permute.xlu0 %3188
        %3190 = vrot.lane.b32.xlu0 %v3113, 89
        %v3191 = vpop.permute.xlu0 %3190
        %3192 = vrot.lane.b32.xlu0 %v3115, 89
        %v3193 = vpop.permute.xlu0 %3192
        %3194 = vrot.lane.b32.xlu0 %v3117, 89
        %v3195 = vpop.permute.xlu0 %3194
        %3196 = vrot.lane.b32.xlu0 %v3120, 89
        %v3197 = vpop.permute.xlu0 %3196
        %3198 = vrot.lane.b32.xlu0 %v3123, 89
        %v3199 = vpop.permute.xlu0 %3198
        %3200 = vrot.lane.b32.xlu0 %v3126, 89
        %v3201 = vpop.permute.xlu0 %3200
        %3202 = vrot.lane.b32.xlu0 %v3076, 89
        %v3203 = vpop.permute.xlu0 %3202
        %3204 = vrot.lane.b32.xlu0 %v3077, 89
        %v3205 = vpop.permute.xlu0 %3204
        %3206 = vrot.lane.b32.xlu0 %v3078, 89
        %v3207 = vpop.permute.xlu0 %3206
        %v3208 = vsel %vm2368, %v3167, %v3169
        %v3209 = vsel %vm2368, %v3169, %v3171
        %v3210 = vsel %vm2368, %v3173, %v3175
        %v3211 = vsel %vm2368, %v3175, %v3177
        %v3212 = vsel %vm2368, %v3179, %v3181
        %v3213 = vsel %vm2368, %v3181, %v3183
        %v3214 = vsel %vm2368, %v3185, %v3187
        %v3215 = vsel %vm2368, %v3187, %v3189
        %v3216 = vsel %vm2368, %v3191, %v3193
        %v3217 = vsel %vm2368, %v3193, %v3195
        %v3218 = vsel %vm2368, %v3197, %v3199
        %v3219 = vsel %vm2368, %v3199, %v3201
        %v3220 = vsel %vm2368, %v3203, %v3205
        %v3221 = vsel %vm2368, %v3205, %v3207
        %v3241 = vsel %vm2401, %v3147, 0
        %v3244 = vsel %vm1082, %v3220, 0
        %v3247 = vsel %vm1082, %v3221, 0
        %v3250 = vsel %vm1082, %v3207, 0
        %3252 = vmatpush.bf16.msra.mxu0 0
        %3253 = vmatpush.bf16.msra.mxu0 %v3244
        %3254 = vmatpush.bf16.msra.mxu0 %v3218
        %3255 = vmatpush.bf16.msra.mxu0 %v3216
        %3256 = vmatpush.bf16.msra.mxu0 %v3214
        %3257 = vmatpush.bf16.msra.mxu0 %v3212
        %3258 = vmatpush.bf16.msra.mxu0 %v3210
        %3259 = vmatpush.bf16.msra.mxu0 %v3208
        %3260 = vmatmul.bf16.gmra.mxu0 %v3241
        %v3261 = vpop.f32.mrf.mxu0
        %v3262 = vadd.f32 %v3136, %v3261
        %v3263 = vpop.f32.mrf.mxu0
        %v3264 = vadd.f32 %v3141, %v3263
        %3265 = vdwg.mxu0
        %3266 = vmatpush.bf16.msra.mxu0 0
        %3267 = vmatpush.bf16.msra.mxu0 %v3247
        %3268 = vmatpush.bf16.msra.mxu0 %v3219
        %3269 = vmatpush.bf16.msra.mxu0 %v3217
        %3270 = vmatpush.bf16.msra.mxu0 %v3215
        %3271 = vmatpush.bf16.msra.mxu0 %v3213
        %3272 = vmatpush.bf16.msra.mxu0 %v3211
        %3273 = vmatpush.bf16.msra.mxu0 %v3209
        %3274 = vmatmul.bf16.gmra.mxu0 %v3241
        %v3275 = vpop.f32.mrf.mxu0
        %v3276 = vadd.f32 %v3136, %v3275
        %v3277 = vpop.f32.mrf.mxu0
        %v3278 = vadd.f32 %v3141, %v3277
        %3279 = vdwg.mxu0
        %3280 = vmatpush.bf16.msra.mxu0 0
        %3281 = vmatpush.bf16.msra.mxu0 %v3250
        %3282 = vmatpush.bf16.msra.mxu0 %v3201
        %3283 = vmatpush.bf16.msra.mxu0 %v3195
        %3284 = vmatpush.bf16.msra.mxu0 %v3189
        %3285 = vmatpush.bf16.msra.mxu0 %v3183
        %3286 = vmatpush.bf16.msra.mxu0 %v3177
        %3287 = vmatpush.bf16.msra.mxu0 %v3171
        %3288 = vmatmul.bf16.gmra.mxu0 %v3241
        %v3289 = vpop.f32.mrf.mxu0
        %v3290 = vadd.f32 %v3136, %v3289
        %v3291 = vpop.f32.mrf.mxu0
        %v3292 = vadd.f32 %v3141, %v3291
        %3293 = vdwg.mxu0
        %vm3294 = vcmp.gt.f32.partialorder %v3262, 0.0
        %vm3295 = vcmp.gt.f32.partialorder %v3276, 0.0
        %vm3296 = vcmp.gt.f32.partialorder %v3290, 0.0
        %vm3297 = vcmp.gt.f32.partialorder %v3264, 0.0
        %vm3298 = vcmp.gt.f32.partialorder %v3278, 0.0
        %vm3299 = vcmp.gt.f32.partialorder %v3292, 0.0
        %3301 = vset.pattern.permute.xlu0 0
        %3302 = vperm.xlu0 %3301, %v3131
        %v3303 = vpop.permute.xlu0 %3302
        %3306 = vset.pattern.permute.xlu0 0
        %3307 = vperm.xlu0 %3306, %v3132
        %v3308 = vpop.permute.xlu0 %3307
        %v3310 = vmul.f32 %v3303, %v3262
        %v3311 = vmul.f32 %v3303, %v3276
        %v3312 = vmul.f32 %v3303, %v3290
        %v3313 = vmul.f32 %v3308, %v3264
        %v3314 = vmul.f32 %v3308, %v3278
        %v3315 = vmul.f32 %v3308, %v3292
        %v3316 = vsel %vm3294, %v3262, %v3310
        %v3317 = vsel %vm3295, %v3276, %v3311
        %v3318 = vsel %vm3296, %v3290, %v3312
        %v3319 = vsel %vm3297, %v3264, %v3313
        %v3320 = vsel %vm3298, %v3278, %v3314
        %v3321 = vsel %vm3299, %v3292, %v3315
        %v3322 = vmul.f32 %v3316, %v2051
        %v3323 = vmul.f32 %v3317, %v2052
        %v3324 = vmul.f32 %v3318, %v2053
        %v3325 = vmul.f32 %v3319, %v2051
        %v3326 = vmul.f32 %v3320, %v2052
        %v3327 = vmul.f32 %v3321, %v2053
        %v3328 = vpack.c.bf16 %v3323, %v3322
        %v3329 = vpack.c.bf16 %v3324, %v3324
        %v3330 = vpack.c.bf16 %v3326, %v3325
        %v3331 = vpack.c.bf16 %v3327, %v3327
        %3336 = vrot.lane.b32.xlu0 %v3328, 60
        %v3337 = vpop.permute.xlu0 %3336
        %3338 = vrot.lane.b32.xlu0 %v3329, 60
        %v3339 = vpop.permute.xlu0 %3338
        %3340 = vrot.lane.b32.xlu0 %v3330, 60
        %v3341 = vpop.permute.xlu0 %3340
        %3342 = vrot.lane.b32.xlu0 %v3331, 60
        %v3343 = vpop.permute.xlu0 %3342
        %v3344 = vrot.slane %v3337, 4
        %v3345 = vrot.slane %v3341, 4
        %v3346 = vsel %vm2081, %v3344, %v3337
        %v3347 = vsel %vm2081, %v3344, %v3339
        %v3348 = vsel %vm2081, %v3345, %v3341
        %v3349 = vsel %vm2081, %v3345, %v3343
        %3354 = vst.msk [vmem:[#allocation2] sm:$0xff] %vm2092, %v3346
        %3355 = vst.msk [vmem:[#allocation2 + $0x8] sm:$0xf] %vm2094, %v3347
        %3356 = vst.msk [vmem:[#allocation2 + $0x10] sm:$0x33] %vm2098, %v3348
        %3357 = vst.msk [vmem:[#allocation2 + $0x18] sm:$0x3] %vm2100, %v3349
        %s3358 = scalar_lea.vmem %s8, 24
        %v3359 = vld [vmem:[%s3358] sm:$0xf]
        %v3360 = vld [vmem:[%s3358 + $0x4] sm:$0x3]
        %v3361 = vld [vmem:[#allocation2] sm:$0xff]
        %v3362 = vld [vmem:[#allocation2 + $0x8] sm:$0xf]
        %v3363 = vld [vmem:[#allocation2 + $0x10] sm:$0x33]
        %v3364 = vld [vmem:[#allocation2 + $0x18] sm:$0x3]
        %v3365 = vld [vmem:[#allocation2 + $0x8] sm:$0xff]
        %v3366 = vld [vmem:[#allocation2 + $0x18] sm:$0x33]
        %v3371 = vunpack.c.l.b16 %v3361
        %v3372 = vunpack.c.h.b16 %v3361
        %v3373 = vunpack.c.l.b16 %v3362
        %v3374 = vunpack.c.l.b16 %v3363
        %v3375 = vunpack.c.h.b16 %v3363
        %v3376 = vunpack.c.l.b16 %v3364
        %v3377 = vpack.c.b16 %v3374, %v3371
        %v3378 = vpack.c.b16 %v3375, %v3372
        %v3379 = vpack.c.b16 %v3376, %v3373
        %v3380 = vrot.slane %v3377, 2
        %v3381 = vrot.slane %v3378, 2
        %v3382 = vrot.slane %v3379, 2
        %3383 = vrot.lane.b32.xlu0 %v3380, 127
        %v3384 = vpop.permute.xlu0 %3383
        %3385 = vrot.lane.b32.xlu0 %v3381, 127
        %v3386 = vpop.permute.xlu0 %3385
        %3387 = vrot.lane.b32.xlu0 %v3382, 127
        %v3388 = vpop.permute.xlu0 %3387
        %v3389 = vsel %vm648, %v3384, %v3386
        %v3390 = vsel %vm648, %v3386, %v3388
        %v3391 = vpack.c.b16 %v3371, %v3371
        %v3392 = vpack.c.b16 %v3372, %v3372
        %v3393 = vpack.c.b16 %v3373, %v3373
        %v3394 = vpack.c.b16 %v3374, %v3374
        %v3395 = vpack.c.b16 %v3375, %v3375
        %v3396 = vpack.c.b16 %v3376, %v3376
        %3397 = vrot.lane.b32.xlu0 %v3391, 126
        %v3398 = vpop.permute.xlu0 %3397
        %3399 = vrot.lane.b32.xlu0 %v3392, 126
        %v3400 = vpop.permute.xlu0 %3399
        %3401 = vrot.lane.b32.xlu0 %v3393, 126
        %v3402 = vpop.permute.xlu0 %3401
        %3403 = vrot.lane.b32.xlu0 %v3394, 126
        %v3404 = vpop.permute.xlu0 %3403
        %3405 = vrot.lane.b32.xlu0 %v3395, 126
        %v3406 = vpop.permute.xlu0 %3405
        %3407 = vrot.lane.b32.xlu0 %v3396, 126
        %v3408 = vpop.permute.xlu0 %3407
        %v3409 = vsel %vm670, %v3398, %v3400
        %v3410 = vsel %vm670, %v3400, %v3402
        %v3411 = vsel %vm670, %v3404, %v3406
        %v3412 = vsel %vm670, %v3406, %v3408
        %v3413 = vrot.slane %v3377, 6
        %v3414 = vrot.slane %v3378, 6
        %v3415 = vrot.slane %v3379, 6
        %3416 = vrot.lane.b32.xlu0 %v3413, 108
        %v3417 = vpop.permute.xlu0 %3416
        %3418 = vrot.lane.b32.xlu0 %v3414, 108
        %v3419 = vpop.permute.xlu0 %3418
        %3420 = vrot.lane.b32.xlu0 %v3415, 108
        %v3421 = vpop.permute.xlu0 %3420
        %v3422 = vsel %vm761, %v3417, %v3419
        %v3423 = vsel %vm761, %v3419, %v3421
        %3424 = vrot.lane.b32.xlu0 %v3377, 107
        %v3425 = vpop.permute.xlu0 %3424
        %3426 = vrot.lane.b32.xlu0 %v3378, 107
        %v3427 = vpop.permute.xlu0 %3426
        %3428 = vrot.lane.b32.xlu0 %v3379, 107
        %v3429 = vpop.permute.xlu0 %3428
        %v3430 = vsel %vm785, %v3425, %v3427
        %v3431 = vsel %vm785, %v3427, %v3429
        %3432 = vrot.lane.b32.xlu0 %v3380, 106
        %v3433 = vpop.permute.xlu0 %3432
        %3434 = vrot.lane.b32.xlu0 %v3381, 106
        %v3435 = vpop.permute.xlu0 %3434
        %3436 = vrot.lane.b32.xlu0 %v3382, 106
        %v3437 = vpop.permute.xlu0 %3436
        %v3438 = vsel %vm819, %v3433, %v3435
        %v3439 = vsel %vm819, %v3435, %v3437
        %v3442 = vunpack.c.l.b16 %v3365
        %v3443 = vunpack.c.h.b16 %v3365
        %v3444 = vunpack.c.l.b16 %v3366
        %v3445 = vunpack.c.h.b16 %v3366
        %v3446 = vpack.c.b16 %v3442, %v3442
        %v3447 = vpack.c.b16 %v3443, %v3443
        %v3448 = vpack.c.b16 %v3444, %v3444
        %v3449 = vpack.c.b16 %v3445, %v3445
        %3450 = vrot.lane.b32.xlu0 %v3391, 88
        %v3451 = vpop.permute.xlu0 %3450
        %3452 = vrot.lane.b32.xlu0 %v3392, 88
        %v3453 = vpop.permute.xlu0 %3452
        %3454 = vrot.lane.b32.xlu0 %v3446, 88
        %v3455 = vpop.permute.xlu0 %3454
        %3456 = vrot.lane.b32.xlu0 %v3447, 88
        %v3457 = vpop.permute.xlu0 %3456
        %3458 = vrot.lane.b32.xlu0 %v3394, 88
        %v3459 = vpop.permute.xlu0 %3458
        %3460 = vrot.lane.b32.xlu0 %v3395, 88
        %v3461 = vpop.permute.xlu0 %3460
        %3462 = vrot.lane.b32.xlu0 %v3448, 88
        %v3463 = vpop.permute.xlu0 %3462
        %3464 = vrot.lane.b32.xlu0 %v3449, 88
        %v3465 = vpop.permute.xlu0 %3464
        %v3466 = vsel %vm895, %v3451, %v3453
        %v3467 = vsel %vm895, %v3453, %v3455
        %v3468 = vsel %vm895, %v3455, %v3457
        %v3469 = vsel %vm895, %v3459, %v3461
        %v3470 = vsel %vm895, %v3461, %v3463
        %v3471 = vsel %vm895, %v3463, %v3465
        %v3472 = vpack.c.b16 %v3444, %v3442
        %v3473 = vpack.c.b16 %v3445, %v3443
        %v3474 = vrot.slane %v3472, 6
        %v3475 = vrot.slane %v3473, 6
        %3476 = vrot.lane.b32.xlu0 %v3413, 87
        %v3477 = vpop.permute.xlu0 %3476
        %3478 = vrot.lane.b32.xlu0 %v3414, 87
        %v3479 = vpop.permute.xlu0 %3478
        %3480 = vrot.lane.b32.xlu0 %v3474, 87
        %v3481 = vpop.permute.xlu0 %3480
        %3482 = vrot.lane.b32.xlu0 %v3475, 87
        %v3483 = vpop.permute.xlu0 %3482
        %v3484 = vsel %vm929, %v3477, %v3479
        %v3485 = vsel %vm929, %v3479, %v3481
        %v3486 = vsel %vm929, %v3481, %v3483
        %3487 = vrot.lane.b32.xlu0 %v3377, 86
        %v3488 = vpop.permute.xlu0 %3487
        %3489 = vrot.lane.b32.xlu0 %v3378, 86
        %v3490 = vpop.permute.xlu0 %3489
        %3491 = vrot.lane.b32.xlu0 %v3472, 86
        %v3492 = vpop.permute.xlu0 %3491
        %3493 = vrot.lane.b32.xlu0 %v3473, 86
        %v3494 = vpop.permute.xlu0 %3493
        %v3495 = vsel %vm949, %v3488, %v3490
        %v3496 = vsel %vm949, %v3490, %v3492
        %v3497 = vsel %vm949, %v3492, %v3494
        %v3500 = vsel %vm1082, %v3377, %v3389
        %v3503 = vsel %vm1082, %v3378, %v3390
        %v3506 = vsel %vm1082, %v3379, %v3388
        %v3508 = vsel %vm1120, %v3389, %v3409
        %v3510 = vsel %vm1120, %v3390, %v3410
        %v3512 = vsel %vm1120, %v3388, %v3402
        %v3515 = vsel %vm1155, %v3411, %v3422
        %v3518 = vsel %vm1155, %v3412, %v3423
        %v3521 = vsel %vm1155, %v3408, %v3421
        %v3524 = vsel %vm1082, %v3430, %v3438
        %v3527 = vsel %vm1082, %v3431, %v3439
        %v3530 = vsel %vm1082, %v3429, %v3437
        %v3532 = vsel %vm1120, %v3438, %v3466
        %v3534 = vsel %vm1120, %v3439, %v3467
        %v3536 = vsel %vm1120, %v3437, %v3468
        %v3539 = vsel %vm1155, %v3469, %v3484
        %v3542 = vsel %vm1155, %v3470, %v3485
        %v3545 = vsel %vm1155, %v3471, %v3486
        %s3546 = scalar_lea.vmem %s9, 48
        %v3547 = vld [vmem:[%s3546] sm:$0xff]
        %v3548 = vld [vmem:[%s3546 + $0x8] sm:$0xf]
        %s3549 = scalar_lea.vmem %s10, 48
        %v3550 = vld [vmem:[%s3549] sm:$0xff]
        %v3551 = vld [vmem:[%s3549 + $0x8] sm:$0xf]
        %3553 = vset.pattern.permute.xlu0 0
        %3554 = vperm.xlu0 %3553, %v3547
        %v3555 = vpop.permute.xlu0 %3554
        %3558 = vset.pattern.permute.xlu0 0
        %3559 = vperm.xlu0 %3558, %v3548
        %v3560 = vpop.permute.xlu0 %3559
        %v3564 = vunpack.c.l.b16 %v3359
        %v3565 = vunpack.c.l.b16 %v3360
        %v3566 = vpack.c.b16 %v3565, %v3564
        %3585 = vrot.lane.b32.xlu0 %v3500, 89
        %v3586 = vpop.permute.xlu0 %3585
        %3587 = vrot.lane.b32.xlu0 %v3503, 89
        %v3588 = vpop.permute.xlu0 %3587
        %3589 = vrot.lane.b32.xlu0 %v3506, 89
        %v3590 = vpop.permute.xlu0 %3589
        %3591 = vrot.lane.b32.xlu0 %v3508, 89
        %v3592 = vpop.permute.xlu0 %3591
        %3593 = vrot.lane.b32.xlu0 %v3510, 89
        %v3594 = vpop.permute.xlu0 %3593
        %3595 = vrot.lane.b32.xlu0 %v3512, 89
        %v3596 = vpop.permute.xlu0 %3595
        %3597 = vrot.lane.b32.xlu0 %v3515, 89
        %v3598 = vpop.permute.xlu0 %3597
        %3599 = vrot.lane.b32.xlu0 %v3518, 89
        %v3600 = vpop.permute.xlu0 %3599
        %3601 = vrot.lane.b32.xlu0 %v3521, 89
        %v3602 = vpop.permute.xlu0 %3601
        %3603 = vrot.lane.b32.xlu0 %v3524, 89
        %v3604 = vpop.permute.xlu0 %3603
        %3605 = vrot.lane.b32.xlu0 %v3527, 89
        %v3606 = vpop.permute.xlu0 %3605
        %3607 = vrot.lane.b32.xlu0 %v3530, 89
        %v3608 = vpop.permute.xlu0 %3607
        %3609 = vrot.lane.b32.xlu0 %v3532, 89
        %v3610 = vpop.permute.xlu0 %3609
        %3611 = vrot.lane.b32.xlu0 %v3534, 89
        %v3612 = vpop.permute.xlu0 %3611
        %3613 = vrot.lane.b32.xlu0 %v3536, 89
        %v3614 = vpop.permute.xlu0 %3613
        %3615 = vrot.lane.b32.xlu0 %v3539, 89
        %v3616 = vpop.permute.xlu0 %3615
        %3617 = vrot.lane.b32.xlu0 %v3542, 89
        %v3618 = vpop.permute.xlu0 %3617
        %3619 = vrot.lane.b32.xlu0 %v3545, 89
        %v3620 = vpop.permute.xlu0 %3619
        %3621 = vrot.lane.b32.xlu0 %v3495, 89
        %v3622 = vpop.permute.xlu0 %3621
        %3623 = vrot.lane.b32.xlu0 %v3496, 89
        %v3624 = vpop.permute.xlu0 %3623
        %3625 = vrot.lane.b32.xlu0 %v3497, 89
        %v3626 = vpop.permute.xlu0 %3625
        %v3627 = vsel %vm2368, %v3586, %v3588
        %v3628 = vsel %vm2368, %v3588, %v3590
        %v3629 = vsel %vm2368, %v3592, %v3594
        %v3630 = vsel %vm2368, %v3594, %v3596
        %v3631 = vsel %vm2368, %v3598, %v3600
        %v3632 = vsel %vm2368, %v3600, %v3602
        %v3633 = vsel %vm2368, %v3604, %v3606
        %v3634 = vsel %vm2368, %v3606, %v3608
        %v3635 = vsel %vm2368, %v3610, %v3612
        %v3636 = vsel %vm2368, %v3612, %v3614
        %v3637 = vsel %vm2368, %v3616, %v3618
        %v3638 = vsel %vm2368, %v3618, %v3620
        %v3639 = vsel %vm2368, %v3622, %v3624
        %v3640 = vsel %vm2368, %v3624, %v3626
        %v3660 = vsel %vm2401, %v3566, 0
        %v3663 = vsel %vm1082, %v3639, 0
        %v3666 = vsel %vm1082, %v3640, 0
        %v3669 = vsel %vm1082, %v3626, 0
        %3671 = vmatpush.bf16.msra.mxu0 0
        %3672 = vmatpush.bf16.msra.mxu0 %v3663
        %3673 = vmatpush.bf16.msra.mxu0 %v3637
        %3674 = vmatpush.bf16.msra.mxu0 %v3635
        %3675 = vmatpush.bf16.msra.mxu0 %v3633
        %3676 = vmatpush.bf16.msra.mxu0 %v3631
        %3677 = vmatpush.bf16.msra.mxu0 %v3629
        %3678 = vmatpush.bf16.msra.mxu0 %v3627
        %3679 = vmatmul.bf16.gmra.mxu0 %v3660
        %v3680 = vpop.f32.mrf.mxu0
        %v3681 = vadd.f32 %v3555, %v3680
        %v3682 = vpop.f32.mrf.mxu0
        %v3683 = vadd.f32 %v3560, %v3682
        %3684 = vdwg.mxu0
        %3685 = vmatpush.bf16.msra.mxu0 0
        %3686 = vmatpush.bf16.msra.mxu0 %v3666
        %3687 = vmatpush.bf16.msra.mxu0 %v3638
        %3688 = vmatpush.bf16.msra.mxu0 %v3636
        %3689 = vmatpush.bf16.msra.mxu0 %v3634
        %3690 = vmatpush.bf16.msra.mxu0 %v3632
        %3691 = vmatpush.bf16.msra.mxu0 %v3630
        %3692 = vmatpush.bf16.msra.mxu0 %v3628
        %3693 = vmatmul.bf16.gmra.mxu0 %v3660
        %v3694 = vpop.f32.mrf.mxu0
        %v3695 = vadd.f32 %v3555, %v3694
        %v3696 = vpop.f32.mrf.mxu0
        %v3697 = vadd.f32 %v3560, %v3696
        %3698 = vdwg.mxu0
        %3699 = vmatpush.bf16.msra.mxu0 0
        %3700 = vmatpush.bf16.msra.mxu0 %v3669
        %3701 = vmatpush.bf16.msra.mxu0 %v3620
        %3702 = vmatpush.bf16.msra.mxu0 %v3614
        %3703 = vmatpush.bf16.msra.mxu0 %v3608
        %3704 = vmatpush.bf16.msra.mxu0 %v3602
        %3705 = vmatpush.bf16.msra.mxu0 %v3596
        %3706 = vmatpush.bf16.msra.mxu0 %v3590
        %3707 = vmatmul.bf16.gmra.mxu0 %v3660
        %v3708 = vpop.f32.mrf.mxu0
        %v3709 = vadd.f32 %v3555, %v3708
        %v3710 = vpop.f32.mrf.mxu0
        %v3711 = vadd.f32 %v3560, %v3710
        %3712 = vdwg.mxu0
        %vm3713 = vcmp.gt.f32.partialorder %v3681, 0.0
        %vm3714 = vcmp.gt.f32.partialorder %v3695, 0.0
        %vm3715 = vcmp.gt.f32.partialorder %v3709, 0.0
        %vm3716 = vcmp.gt.f32.partialorder %v3683, 0.0
        %vm3717 = vcmp.gt.f32.partialorder %v3697, 0.0
        %vm3718 = vcmp.gt.f32.partialorder %v3711, 0.0
        %3720 = vset.pattern.permute.xlu0 0
        %3721 = vperm.xlu0 %3720, %v3550
        %v3722 = vpop.permute.xlu0 %3721
        %3725 = vset.pattern.permute.xlu0 0
        %3726 = vperm.xlu0 %3725, %v3551
        %v3727 = vpop.permute.xlu0 %3726
        %v3729 = vmul.f32 %v3722, %v3681
        %v3730 = vmul.f32 %v3722, %v3695
        %v3731 = vmul.f32 %v3722, %v3709
        %v3732 = vmul.f32 %v3727, %v3683
        %v3733 = vmul.f32 %v3727, %v3697
        %v3734 = vmul.f32 %v3727, %v3711
        %v3735 = vsel %vm3713, %v3681, %v3729
        %v3736 = vsel %vm3714, %v3695, %v3730
        %v3737 = vsel %vm3715, %v3709, %v3731
        %v3738 = vsel %vm3716, %v3683, %v3732
        %v3739 = vsel %vm3717, %v3697, %v3733
        %v3740 = vsel %vm3718, %v3711, %v3734
        %v3741 = vld [vmem:[%s11] sm:$0xf]
        %v3742 = vld [vmem:[%s11 + $0x4] sm:$0xf]
        %v3743 = vld [vmem:[%s11 + $0x8] sm:$0xf]
        %v3744 = vld [vmem:[%s11 + $0xc] sm:$0xf]
        %v3745 = vld [vmem:[%s11 + $0x10] sm:$0xf]
        %v3746 = vld [vmem:[%s11 + $0x14] sm:$0xf]
        %v3747 = vld [vmem:[%s11 + $0x18] sm:$0xf]
        %v3748 = vpack.c.bf16 %v3738, %v3735
        %v3749 = vpack.c.bf16 %v3739, %v3736
        %v3750 = vpack.c.bf16 %v3740, %v3737
        %v3751 = vld [vmem:[%s12] sm:$0xff]
        %v3752 = vld [vmem:[%s12 + $0x8] sm:$0xff]
        %v3753 = vld [vmem:[%s12 + $0x10] sm:$0xff]
        %v3754 = vld [vmem:[%s12 + $0x18] sm:$0xff]
        %v3755 = vld [vmem:[%s12 + $0x20] sm:$0xff]
        %v3756 = vld [vmem:[%s12 + $0x28] sm:$0xff]
        %v3757 = vld [vmem:[%s12 + $0x30] sm:$0xff]
        %v3758 = vld [vmem:[%s13] sm:$0xff]
        %v3759 = vld [vmem:[%s13 + $0x8] sm:$0xff]
        %v3760 = vld [vmem:[%s13 + $0x10] sm:$0xff]
        %v3761 = vld [vmem:[%s13 + $0x18] sm:$0xff]
        %v3762 = vld [vmem:[%s13 + $0x20] sm:$0xff]
        %v3763 = vld [vmem:[%s13 + $0x28] sm:$0xff]
        %v3764 = vld [vmem:[%s13 + $0x30] sm:$0xff]
        %3766 = vset.pattern.permute.xlu0 0
        %3767 = vperm.xlu0 %3766, %v3751
        %v3768 = vpop.permute.xlu0 %3767
        %3771 = vset.pattern.permute.xlu0 0
        %3772 = vperm.xlu0 %3771, %v3752
        %v3773 = vpop.permute.xlu0 %3772
        %3776 = vset.pattern.permute.xlu0 0
        %3777 = vperm.xlu0 %3776, %v3753
        %v3778 = vpop.permute.xlu0 %3777
        %3781 = vset.pattern.permute.xlu0 0
        %3782 = vperm.xlu0 %3781, %v3754
        %v3783 = vpop.permute.xlu0 %3782
        %3786 = vset.pattern.permute.xlu0 0
        %3787 = vperm.xlu0 %3786, %v3755
        %v3788 = vpop.permute.xlu0 %3787
        %3791 = vset.pattern.permute.xlu0 0
        %3792 = vperm.xlu0 %3791, %v3756
        %v3793 = vpop.permute.xlu0 %3792
        %3796 = vset.pattern.permute.xlu0 0
        %3797 = vperm.xlu0 %3796, %v3757
        %v3798 = vpop.permute.xlu0 %3797
        %v3807 = vunpack.c.l.b16 %v3741
        %v3808 = vunpack.c.l.b16 %v3742
        %v3809 = vunpack.c.l.b16 %v3743
        %v3810 = vunpack.c.l.b16 %v3744
        %v3811 = vunpack.c.l.b16 %v3745
        %v3812 = vunpack.c.l.b16 %v3746
        %v3813 = vunpack.c.l.b16 %v3747
        %v3814 = vpack.c.b16 %v3808, %v3807
        %v3815 = vpack.c.b16 %v3810, %v3809
        %v3816 = vpack.c.b16 %v3812, %v3811
        %v3817 = vpack.c.b16 %v3813, %v3813
        %vm3818 = vcmask 97280
        %v3820 = vsel %vm3818, %v3814, 0
        %v3823 = vsel %vm3818, %v3815, 0
        %v3826 = vsel %vm3818, %v3816, 0
        %v3829 = vsel %vm3818, %v3817, 0
        %v3832 = vsel %vm1082, %v3748, 0
        %v3835 = vsel %vm1082, %v3749, 0
        %v3838 = vsel %vm1082, %v3750, 0
        %3840 = vmatpush.bf16.msra.mxu0 0
        %3841 = vmatpush.bf16.msra.mxu0 0
        %3842 = vmatpush.bf16.msra.mxu0 0
        %3843 = vmatpush.bf16.msra.mxu0 0
        %3844 = vmatpush.bf16.msra.mxu0 0
        %3845 = vmatpush.bf16.msra.mxu0 0
        %3846 = vmatpush.bf16.msra.mxu0 0
        %3847 = vmatpush.bf16.msra.mxu0 %v3832
        %3848 = vmatmul.bf16.gmra.mxu0 %v3820
        %v3849 = vpop.f32.mrf.mxu0
        %v3850 = vadd.f32 %v3768, %v3849
        %v3851 = vpop.f32.mrf.mxu0
        %v3852 = vadd.f32 %v3773, %v3851
        %3853 = vmatmul.bf16.gmra.mxu0 %v3823
        %v3854 = vpop.f32.mrf.mxu0
        %v3855 = vadd.f32 %v3778, %v3854
        %v3856 = vpop.f32.mrf.mxu0
        %v3857 = vadd.f32 %v3783, %v3856
        %3858 = vmatmul.bf16.gmra.mxu0 %v3826
        %v3859 = vpop.f32.mrf.mxu0
        %v3860 = vadd.f32 %v3788, %v3859
        %v3861 = vpop.f32.mrf.mxu0
        %v3862 = vadd.f32 %v3793, %v3861
        %3863 = vmatmul.bf16.gmra.mxu0 %v3829
        %v3864 = vpop.f32.mrf.mxu0
        %v3865 = vadd.f32 %v3798, %v3864
        %v3866 = vpop.f32.mrf.mxu0
        %3867 = vdwg.mxu0
        %3868 = vmatpush.bf16.msra.mxu0 0
        %3869 = vmatpush.bf16.msra.mxu0 0
        %3870 = vmatpush.bf16.msra.mxu0 0
        %3871 = vmatpush.bf16.msra.mxu0 0
        %3872 = vmatpush.bf16.msra.mxu0 0
        %3873 = vmatpush.bf16.msra.mxu0 0
        %3874 = vmatpush.bf16.msra.mxu0 0
        %3875 = vmatpush.bf16.msra.mxu0 %v3835
        %3876 = vmatmul.bf16.gmra.mxu0 %v3820
        %v3877 = vpop.f32.mrf.mxu0
        %v3878 = vadd.f32 %v3768, %v3877
        %v3879 = vpop.f32.mrf.mxu0
        %v3880 = vadd.f32 %v3773, %v3879
        %3881 = vmatmul.bf16.gmra.mxu0 %v3823
        %v3882 = vpop.f32.mrf.mxu0
        %v3883 = vadd.f32 %v3778, %v3882
        %v3884 = vpop.f32.mrf.mxu0
        %v3885 = vadd.f32 %v3783, %v3884
        %3886 = vmatmul.bf16.gmra.mxu0 %v3826
        %v3887 = vpop.f32.mrf.mxu0
        %v3888 = vadd.f32 %v3788, %v3887
        %v3889 = vpop.f32.mrf.mxu0
        %v3890 = vadd.f32 %v3793, %v3889
        %3891 = vmatmul.bf16.gmra.mxu0 %v3829
        %v3892 = vpop.f32.mrf.mxu0
        %v3893 = vadd.f32 %v3798, %v3892
        %v3894 = vpop.f32.mrf.mxu0
        %3895 = vdwg.mxu0
        %3896 = vmatpush.bf16.msra.mxu0 0
        %3897 = vmatpush.bf16.msra.mxu0 0
        %3898 = vmatpush.bf16.msra.mxu0 0
        %3899 = vmatpush.bf16.msra.mxu0 0
        %3900 = vmatpush.bf16.msra.mxu0 0
        %3901 = vmatpush.bf16.msra.mxu0 0
        %3902 = vmatpush.bf16.msra.mxu0 0
        %3903 = vmatpush.bf16.msra.mxu0 %v3838
        %3904 = vmatmul.bf16.gmra.mxu0 %v3820
        %v3905 = vpop.f32.mrf.mxu0
        %v3906 = vadd.f32 %v3768, %v3905
        %v3907 = vpop.f32.mrf.mxu0
        %v3908 = vadd.f32 %v3773, %v3907
        %3909 = vmatmul.bf16.gmra.mxu0 %v3823
        %v3910 = vpop.f32.mrf.mxu0
        %v3911 = vadd.f32 %v3778, %v3910
        %v3912 = vpop.f32.mrf.mxu0
        %v3913 = vadd.f32 %v3783, %v3912
        %3914 = vmatmul.bf16.gmra.mxu0 %v3826
        %v3915 = vpop.f32.mrf.mxu0
        %v3916 = vadd.f32 %v3788, %v3915
        %v3917 = vpop.f32.mrf.mxu0
        %v3918 = vadd.f32 %v3793, %v3917
        %3919 = vmatmul.bf16.gmra.mxu0 %v3829
        %v3920 = vpop.f32.mrf.mxu0
        %v3921 = vadd.f32 %v3798, %v3920
        %v3922 = vpop.f32.mrf.mxu0
        %3923 = vdwg.mxu0
        %vm3924 = vcmp.gt.f32.partialorder %v3850, 0.0
        %vm3925 = vcmp.gt.f32.partialorder %v3878, 0.0
        %vm3926 = vcmp.gt.f32.partialorder %v3906, 0.0
        %vm3927 = vcmp.gt.f32.partialorder %v3852, 0.0
        %vm3928 = vcmp.gt.f32.partialorder %v3880, 0.0
        %vm3929 = vcmp.gt.f32.partialorder %v3908, 0.0
        %vm3930 = vcmp.gt.f32.partialorder %v3855, 0.0
        %vm3931 = vcmp.gt.f32.partialorder %v3883, 0.0
        %vm3932 = vcmp.gt.f32.partialorder %v3911, 0.0
        %vm3933 = vcmp.gt.f32.partialorder %v3857, 0.0
        %vm3934 = vcmp.gt.f32.partialorder %v3885, 0.0
        %vm3935 = vcmp.gt.f32.partialorder %v3913, 0.0
        %vm3936 = vcmp.gt.f32.partialorder %v3860, 0.0
        %vm3937 = vcmp.gt.f32.partialorder %v3888, 0.0
        %vm3938 = vcmp.gt.f32.partialorder %v3916, 0.0
        %vm3939 = vcmp.gt.f32.partialorder %v3862, 0.0
        %vm3940 = vcmp.gt.f32.partialorder %v3890, 0.0
        %vm3941 = vcmp.gt.f32.partialorder %v3918, 0.0
        %vm3942 = vcmp.gt.f32.partialorder %v3865, 0.0
        %vm3943 = vcmp.gt.f32.partialorder %v3893, 0.0
        %vm3944 = vcmp.gt.f32.partialorder %v3921, 0.0
        %3946 = vset.pattern.permute.xlu0 0
        %3947 = vperm.xlu0 %3946, %v3758
        %v3948 = vpop.permute.xlu0 %3947
        %3951 = vset.pattern.permute.xlu0 0
        %3952 = vperm.xlu0 %3951, %v3759
        %v3953 = vpop.permute.xlu0 %3952
        %3956 = vset.pattern.permute.xlu0 0
        %3957 = vperm.xlu0 %3956, %v3760
        %v3958 = vpop.permute.xlu0 %3957
        %3961 = vset.pattern.permute.xlu0 0
        %3962 = vperm.xlu0 %3961, %v3761
        %v3963 = vpop.permute.xlu0 %3962
        %3966 = vset.pattern.permute.xlu0 0
        %3967 = vperm.xlu0 %3966, %v3762
        %v3968 = vpop.permute.xlu0 %3967
        %3971 = vset.pattern.permute.xlu0 0
        %3972 = vperm.xlu0 %3971, %v3763
        %v3973 = vpop.permute.xlu0 %3972
        %3976 = vset.pattern.permute.xlu0 0
        %3977 = vperm.xlu0 %3976, %v3764
        %v3978 = vpop.permute.xlu0 %3977
        %v3980 = vmul.f32 %v3948, %v3850
        %v3981 = vmul.f32 %v3948, %v3878
        %v3982 = vmul.f32 %v3948, %v3906
        %v3983 = vmul.f32 %v3953, %v3852
        %v3984 = vmul.f32 %v3953, %v3880
        %v3985 = vmul.f32 %v3953, %v3908
        %v3986 = vmul.f32 %v3958, %v3855
        %v3987 = vmul.f32 %v3958, %v3883
        %v3988 = vmul.f32 %v3958, %v3911
        %v3989 = vmul.f32 %v3963, %v3857
        %v3990 = vmul.f32 %v3963, %v3885
        %v3991 = vmul.f32 %v3963, %v3913
        %v3992 = vmul.f32 %v3968, %v3860
        %v3993 = vmul.f32 %v3968, %v3888
        %v3994 = vmul.f32 %v3968, %v3916
        %v3995 = vmul.f32 %v3973, %v3862
        %v3996 = vmul.f32 %v3973, %v3890
        %v3997 = vmul.f32 %v3973, %v3918
        %v3998 = vmul.f32 %v3978, %v3865
        %v3999 = vmul.f32 %v3978, %v3893
        %v4000 = vmul.f32 %v3978, %v3921
        %v4001 = vsel %vm3924, %v3850, %v3980
        %v4002 = vsel %vm3925, %v3878, %v3981
        %v4003 = vsel %vm3926, %v3906, %v3982
        %v4004 = vsel %vm3927, %v3852, %v3983
        %v4005 = vsel %vm3928, %v3880, %v3984
        %v4006 = vsel %vm3929, %v3908, %v3985
        %v4007 = vsel %vm3930, %v3855, %v3986
        %v4008 = vsel %vm3931, %v3883, %v3987
        %v4009 = vsel %vm3932, %v3911, %v3988
        %v4010 = vsel %vm3933, %v3857, %v3989
        %v4011 = vsel %vm3934, %v3885, %v3990
        %v4012 = vsel %vm3935, %v3913, %v3991
        %v4013 = vsel %vm3936, %v3860, %v3992
        %v4014 = vsel %vm3937, %v3888, %v3993
        %v4015 = vsel %vm3938, %v3916, %v3994
        %v4016 = vsel %vm3939, %v3862, %v3995
        %v4017 = vsel %vm3940, %v3890, %v3996
        %v4018 = vsel %vm3941, %v3918, %v3997
        %v4019 = vsel %vm3942, %v3865, %v3998
        %v4020 = vsel %vm3943, %v3893, %v3999
        %v4021 = vsel %vm3944, %v3921, %v4000
        %v4022 = vmul.f32 %v4001, %v2051
        %v4023 = vmul.f32 %v4002, %v2052
        %v4024 = vmul.f32 %v4003, %v2053
        %v4025 = vmul.f32 %v4004, %v2051
        %v4026 = vmul.f32 %v4005, %v2052
        %v4027 = vmul.f32 %v4006, %v2053
        %v4028 = vmul.f32 %v4007, %v2051
        %v4029 = vmul.f32 %v4008, %v2052
        %v4030 = vmul.f32 %v4009, %v2053
        %v4031 = vmul.f32 %v4010, %v2051
        %v4032 = vmul.f32 %v4011, %v2052
        %v4033 = vmul.f32 %v4012, %v2053
        %v4034 = vmul.f32 %v4013, %v2051
        %v4035 = vmul.f32 %v4014, %v2052
        %v4036 = vmul.f32 %v4015, %v2053
        %v4037 = vmul.f32 %v4016, %v2051
        %v4038 = vmul.f32 %v4017, %v2052
        %v4039 = vmul.f32 %v4018, %v2053
        %v4040 = vmul.f32 %v4019, %v2051
        %v4041 = vmul.f32 %v4020, %v2052
        %v4042 = vmul.f32 %v4021, %v2053
        %v4043 = vpack.c.bf16 %v4023, %v4022
        %v4044 = vpack.c.bf16 %v4024, %v4024
        %v4045 = vpack.c.bf16 %v4026, %v4025
        %v4046 = vpack.c.bf16 %v4027, %v4027
        %v4047 = vpack.c.bf16 %v4029, %v4028
        %v4048 = vpack.c.bf16 %v4030, %v4030
        %v4049 = vpack.c.bf16 %v4032, %v4031
        %v4050 = vpack.c.bf16 %v4033, %v4033
        %v4051 = vpack.c.bf16 %v4035, %v4034
        %v4052 = vpack.c.bf16 %v4036, %v4036
        %v4053 = vpack.c.bf16 %v4038, %v4037
        %v4054 = vpack.c.bf16 %v4039, %v4039
        %v4055 = vpack.c.bf16 %v4041, %v4040
        %v4056 = vpack.c.bf16 %v4042, %v4042
        %4071 = vrot.lane.b32.xlu0 %v4043, 60
        %v4072 = vpop.permute.xlu0 %4071
        %4073 = vrot.lane.b32.xlu0 %v4044, 60
        %v4074 = vpop.permute.xlu0 %4073
        %4075 = vrot.lane.b32.xlu0 %v4045, 60
        %v4076 = vpop.permute.xlu0 %4075
        %4077 = vrot.lane.b32.xlu0 %v4046, 60
        %v4078 = vpop.permute.xlu0 %4077
        %4079 = vrot.lane.b32.xlu0 %v4047, 60
        %v4080 = vpop.permute.xlu0 %4079
        %4081 = vrot.lane.b32.xlu0 %v4048, 60
        %v4082 = vpop.permute.xlu0 %4081
        %4083 = vrot.lane.b32.xlu0 %v4049, 60
        %v4084 = vpop.permute.xlu0 %4083
        %4085 = vrot.lane.b32.xlu0 %v4050, 60
        %v4086 = vpop.permute.xlu0 %4085
        %4087 = vrot.lane.b32.xlu0 %v4051, 60
        %v4088 = vpop.permute.xlu0 %4087
        %4089 = vrot.lane.b32.xlu0 %v4052, 60
        %v4090 = vpop.permute.xlu0 %4089
        %4091 = vrot.lane.b32.xlu0 %v4053, 60
        %v4092 = vpop.permute.xlu0 %4091
        %4093 = vrot.lane.b32.xlu0 %v4054, 60
        %v4094 = vpop.permute.xlu0 %4093
        %4095 = vrot.lane.b32.xlu0 %v4055, 60
        %v4096 = vpop.permute.xlu0 %4095
        %4097 = vrot.lane.b32.xlu0 %v4056, 60
        %v4098 = vpop.permute.xlu0 %4097
        %v4099 = vrot.slane %v4072, 4
        %v4100 = vrot.slane %v4076, 4
        %v4101 = vrot.slane %v4080, 4
        %v4102 = vrot.slane %v4084, 4
        %v4103 = vrot.slane %v4088, 4
        %v4104 = vrot.slane %v4092, 4
        %v4105 = vrot.slane %v4096, 4
        %v4106 = vsel %vm2081, %v4099, %v4072
        %v4107 = vsel %vm2081, %v4099, %v4074
        %v4108 = vsel %vm2081, %v4100, %v4076
        %v4109 = vsel %vm2081, %v4100, %v4078
        %v4110 = vsel %vm2081, %v4101, %v4080
        %v4111 = vsel %vm2081, %v4101, %v4082
        %v4112 = vsel %vm2081, %v4102, %v4084
        %v4113 = vsel %vm2081, %v4102, %v4086
        %v4114 = vsel %vm2081, %v4103, %v4088
        %v4115 = vsel %vm2081, %v4103, %v4090
        %v4116 = vsel %vm2081, %v4104, %v4092
        %v4117 = vsel %vm2081, %v4104, %v4094
        %v4118 = vsel %vm2081, %v4105, %v4096
        %v4119 = vsel %vm2081, %v4105, %v4098
        %4134 = vst.msk [vmem:[#allocation3] sm:$0xff] %vm2092, %v4106
        %4135 = vst.msk [vmem:[#allocation3 + $0x8] sm:$0xf] %vm2094, %v4107
        %4136 = vst.msk [vmem:[#allocation3 + $0x10] sm:$0xff] %vm2092, %v4108
        %4137 = vst.msk [vmem:[#allocation3 + $0x18] sm:$0xf] %vm2094, %v4109
        %4138 = vst.msk [vmem:[#allocation3 + $0x20] sm:$0xff] %vm2092, %v4110
        %4139 = vst.msk [vmem:[#allocation3 + $0x28] sm:$0xf] %vm2094, %v4111
        %4140 = vst.msk [vmem:[#allocation3 + $0x30] sm:$0xff] %vm2092, %v4112
        %4141 = vst.msk [vmem:[#allocation3 + $0x38] sm:$0xf] %vm2094, %v4113
        %4142 = vst.msk [vmem:[#allocation3 + $0x40] sm:$0xff] %vm2092, %v4114
        %4143 = vst.msk [vmem:[#allocation3 + $0x48] sm:$0xf] %vm2094, %v4115
        %4144 = vst.msk [vmem:[#allocation3 + $0x50] sm:$0xff] %vm2092, %v4116
        %4145 = vst.msk [vmem:[#allocation3 + $0x58] sm:$0xf] %vm2094, %v4117
        %4146 = vst.msk [vmem:[#allocation3 + $0x60] sm:$0xff] %vm2092, %v4118
        %4147 = vst.msk [vmem:[#allocation3 + $0x68] sm:$0xf] %vm2094, %v4119
        %v4148 = vld [vmem:[#allocation8] sm:$0xff]
        %v4149 = vld [vmem:[#allocation8 + $0x8] sm:$0xff]
        %v4150 = vld [vmem:[#allocation8 + $0x10] sm:$0xff]
        %v4151 = vld [vmem:[#allocation8 + $0x18] sm:$0xff]
        %v4152 = vld [vmem:[#allocation8 + $0x20] sm:$0xff]
        %v4153 = vld [vmem:[#allocation8 + $0x28] sm:$0xff]
        %v4154 = vld [vmem:[#allocation8 + $0x30] sm:$0xff]
        %v4155 = vld [vmem:[#allocation8 + $0x38] sm:$0xff]
        %v4156 = vld [vmem:[#allocation8 + $0x40] sm:$0xff]
        %v4157 = vld [vmem:[#allocation8 + $0x48] sm:$0xff]
        %v4158 = vld [vmem:[#allocation8 + $0x50] sm:$0xff]
        %v4159 = vld [vmem:[#allocation8 + $0x58] sm:$0xff]
        %v4160 = vld [vmem:[#allocation3] sm:$0xff]
        %v4161 = vld [vmem:[#allocation3 + $0x8] sm:$0xf]
        %v4162 = vld [vmem:[#allocation3 + $0x10] sm:$0xff]
        %v4163 = vld [vmem:[#allocation3 + $0x18] sm:$0xf]
        %v4164 = vld [vmem:[#allocation3 + $0x20] sm:$0xff]
        %v4165 = vld [vmem:[#allocation3 + $0x28] sm:$0xf]
        %v4166 = vld [vmem:[#allocation3 + $0x30] sm:$0xff]
        %v4167 = vld [vmem:[#allocation3 + $0x38] sm:$0xf]
        %v4168 = vld [vmem:[#allocation3 + $0x40] sm:$0xff]
        %v4169 = vld [vmem:[#allocation3 + $0x48] sm:$0xf]
        %v4170 = vld [vmem:[#allocation3 + $0x50] sm:$0xff]
        %v4171 = vld [vmem:[#allocation3 + $0x58] sm:$0xf]
        %v4172 = vld [vmem:[#allocation3 + $0x60] sm:$0xff]
        %v4173 = vld [vmem:[#allocation3 + $0x68] sm:$0xf]
        %v4174 = vld [vmem:[#allocation3 + $0x8] sm:$0xff]
        %v4175 = vld [vmem:[#allocation3 + $0x18] sm:$0xff]
        %v4176 = vld [vmem:[#allocation3 + $0x28] sm:$0xff]
        %v4177 = vld [vmem:[#allocation3 + $0x38] sm:$0xff]
        %v4178 = vld [vmem:[#allocation3 + $0x48] sm:$0xff]
        %v4179 = vld [vmem:[#allocation3 + $0x58] sm:$0xff]
        %v4180 = vld [vmem:[#allocation3 + $0x68] sm:$0xff]
        %v4195 = vunpack.c.l.b16 %v4160
        %v4196 = vunpack.c.h.b16 %v4160
        %v4197 = vunpack.c.l.b16 %v4161
        %v4198 = vunpack.c.l.b16 %v4162
        %v4199 = vunpack.c.h.b16 %v4162
        %v4200 = vunpack.c.l.b16 %v4163
        %v4201 = vunpack.c.l.b16 %v4164
        %v4202 = vunpack.c.h.b16 %v4164
        %v4203 = vunpack.c.l.b16 %v4165
        %v4204 = vunpack.c.l.b16 %v4166
        %v4205 = vunpack.c.h.b16 %v4166
        %v4206 = vunpack.c.l.b16 %v4167
        %v4207 = vunpack.c.l.b16 %v4168
        %v4208 = vunpack.c.h.b16 %v4168
        %v4209 = vunpack.c.l.b16 %v4169
        %v4210 = vunpack.c.l.b16 %v4170
        %v4211 = vunpack.c.h.b16 %v4170
        %v4212 = vunpack.c.l.b16 %v4171
        %v4213 = vunpack.c.l.b16 %v4172
        %v4214 = vunpack.c.h.b16 %v4172
        %v4215 = vunpack.c.l.b16 %v4173
        %v4216 = vpack.c.b16 %v4198, %v4195
        %v4217 = vpack.c.b16 %v4199, %v4196
        %v4218 = vpack.c.b16 %v4200, %v4197
        %v4219 = vpack.c.b16 %v4204, %v4201
        %v4220 = vpack.c.b16 %v4205, %v4202
        %v4221 = vpack.c.b16 %v4206, %v4203
        %v4222 = vpack.c.b16 %v4210, %v4207
        %v4223 = vpack.c.b16 %v4211, %v4208
        %v4224 = vpack.c.b16 %v4212, %v4209
        %v4225 = vpack.c.b16 %v4213, %v4213
        %v4226 = vpack.c.b16 %v4214, %v4214
        %v4227 = vpack.c.b16 %v4215, %v4215
        %v4228 = vpack.c.b16 %v4195, %v4195
        %v4229 = vpack.c.b16 %v4196, %v4196
        %v4230 = vpack.c.b16 %v4197, %v4197
        %v4231 = vpack.c.b16 %v4201, %v4198
        %v4232 = vpack.c.b16 %v4202, %v4199
        %v4233 = vpack.c.b16 %v4203, %v4200
        %v4234 = vpack.c.b16 %v4207, %v4204
        %v4235 = vpack.c.b16 %v4208, %v4205
        %v4236 = vpack.c.b16 %v4209, %v4206
        %v4237 = vpack.c.b16 %v4213, %v4210
        %v4238 = vpack.c.b16 %v4214, %v4211
        %v4239 = vpack.c.b16 %v4215, %v4212
        %4240 = vrot.lane.b32.xlu0 %v4228, 127
        %v4241 = vpop.permute.xlu0 %4240
        %4242 = vrot.lane.b32.xlu0 %v4229, 127
        %v4243 = vpop.permute.xlu0 %4242
        %4244 = vrot.lane.b32.xlu0 %v4230, 127
        %v4245 = vpop.permute.xlu0 %4244
        %4246 = vrot.lane.b32.xlu0 %v4231, 127
        %v4247 = vpop.permute.xlu0 %4246
        %4248 = vrot.lane.b32.xlu0 %v4232, 127
        %v4249 = vpop.permute.xlu0 %4248
        %4250 = vrot.lane.b32.xlu0 %v4233, 127
        %v4251 = vpop.permute.xlu0 %4250
        %4252 = vrot.lane.b32.xlu0 %v4234, 127
        %v4253 = vpop.permute.xlu0 %4252
        %4254 = vrot.lane.b32.xlu0 %v4235, 127
        %v4255 = vpop.permute.xlu0 %4254
        %4256 = vrot.lane.b32.xlu0 %v4236, 127
        %v4257 = vpop.permute.xlu0 %4256
        %4258 = vrot.lane.b32.xlu0 %v4237, 127
        %v4259 = vpop.permute.xlu0 %4258
        %4260 = vrot.lane.b32.xlu0 %v4238, 127
        %v4261 = vpop.permute.xlu0 %4260
        %4262 = vrot.lane.b32.xlu0 %v4239, 127
        %v4263 = vpop.permute.xlu0 %4262
        %v4264 = vsel %vm648, %v4241, %v4243
        %v4265 = vsel %vm648, %v4243, %v4245
        %v4266 = vsel %vm648, %v4247, %v4249
        %v4267 = vsel %vm648, %v4249, %v4251
        %v4268 = vsel %vm648, %v4253, %v4255
        %v4269 = vsel %vm648, %v4255, %v4257
        %v4270 = vsel %vm648, %v4259, %v4261
        %v4271 = vsel %vm648, %v4261, %v4263
        %4272 = vrot.lane.b32.xlu0 %v4216, 126
        %v4273 = vpop.permute.xlu0 %4272
        %4274 = vrot.lane.b32.xlu0 %v4217, 126
        %v4275 = vpop.permute.xlu0 %4274
        %4276 = vrot.lane.b32.xlu0 %v4218, 126
        %v4277 = vpop.permute.xlu0 %4276
        %4278 = vrot.lane.b32.xlu0 %v4219, 126
        %v4279 = vpop.permute.xlu0 %4278
        %4280 = vrot.lane.b32.xlu0 %v4220, 126
        %v4281 = vpop.permute.xlu0 %4280
        %4282 = vrot.lane.b32.xlu0 %v4221, 126
        %v4283 = vpop.permute.xlu0 %4282
        %4284 = vrot.lane.b32.xlu0 %v4222, 126
        %v4285 = vpop.permute.xlu0 %4284
        %4286 = vrot.lane.b32.xlu0 %v4223, 126
        %v4287 = vpop.permute.xlu0 %4286
        %4288 = vrot.lane.b32.xlu0 %v4224, 126
        %v4289 = vpop.permute.xlu0 %4288
        %4290 = vrot.lane.b32.xlu0 %v4225, 126
        %v4291 = vpop.permute.xlu0 %4290
        %4292 = vrot.lane.b32.xlu0 %v4226, 126
        %v4293 = vpop.permute.xlu0 %4292
        %4294 = vrot.lane.b32.xlu0 %v4227, 126
        %v4295 = vpop.permute.xlu0 %4294
        %v4296 = vsel %vm670, %v4273, %v4275
        %v4297 = vsel %vm670, %v4275, %v4277
        %v4298 = vsel %vm670, %v4279, %v4281
        %v4299 = vsel %vm670, %v4281, %v4283
        %v4300 = vsel %vm670, %v4285, %v4287
        %v4301 = vsel %vm670, %v4287, %v4289
        %v4302 = vsel %vm670, %v4291, %v4293
        %v4303 = vsel %vm670, %v4293, %v4295
        %4304 = vrot.lane.b32.xlu0 %v4228, 108
        %v4305 = vpop.permute.xlu0 %4304
        %4306 = vrot.lane.b32.xlu0 %v4229, 108
        %v4307 = vpop.permute.xlu0 %4306
        %4308 = vrot.lane.b32.xlu0 %v4230, 108
        %v4309 = vpop.permute.xlu0 %4308
        %4310 = vrot.lane.b32.xlu0 %v4231, 108
        %v4311 = vpop.permute.xlu0 %4310
        %4312 = vrot.lane.b32.xlu0 %v4232, 108
        %v4313 = vpop.permute.xlu0 %4312
        %4314 = vrot.lane.b32.xlu0 %v4233, 108
        %v4315 = vpop.permute.xlu0 %4314
        %4316 = vrot.lane.b32.xlu0 %v4234, 108
        %v4317 = vpop.permute.xlu0 %4316
        %4318 = vrot.lane.b32.xlu0 %v4235, 108
        %v4319 = vpop.permute.xlu0 %4318
        %4320 = vrot.lane.b32.xlu0 %v4236, 108
        %v4321 = vpop.permute.xlu0 %4320
        %4322 = vrot.lane.b32.xlu0 %v4237, 108
        %v4323 = vpop.permute.xlu0 %4322
        %4324 = vrot.lane.b32.xlu0 %v4238, 108
        %v4325 = vpop.permute.xlu0 %4324
        %4326 = vrot.lane.b32.xlu0 %v4239, 108
        %v4327 = vpop.permute.xlu0 %4326
        %v4328 = vsel %vm761, %v4305, %v4307
        %v4329 = vsel %vm761, %v4307, %v4309
        %v4330 = vsel %vm761, %v4311, %v4313
        %v4331 = vsel %vm761, %v4313, %v4315
        %v4332 = vsel %vm761, %v4317, %v4319
        %v4333 = vsel %vm761, %v4319, %v4321
        %v4334 = vsel %vm761, %v4323, %v4325
        %v4335 = vsel %vm761, %v4325, %v4327
        %4336 = vrot.lane.b32.xlu0 %v4216, 107
        %v4337 = vpop.permute.xlu0 %4336
        %4338 = vrot.lane.b32.xlu0 %v4217, 107
        %v4339 = vpop.permute.xlu0 %4338
        %4340 = vrot.lane.b32.xlu0 %v4218, 107
        %v4341 = vpop.permute.xlu0 %4340
        %4342 = vrot.lane.b32.xlu0 %v4219, 107
        %v4343 = vpop.permute.xlu0 %4342
        %4344 = vrot.lane.b32.xlu0 %v4220, 107
        %v4345 = vpop.permute.xlu0 %4344
        %4346 = vrot.lane.b32.xlu0 %v4221, 107
        %v4347 = vpop.permute.xlu0 %4346
        %4348 = vrot.lane.b32.xlu0 %v4222, 107
        %v4349 = vpop.permute.xlu0 %4348
        %4350 = vrot.lane.b32.xlu0 %v4223, 107
        %v4351 = vpop.permute.xlu0 %4350
        %4352 = vrot.lane.b32.xlu0 %v4224, 107
        %v4353 = vpop.permute.xlu0 %4352
        %4354 = vrot.lane.b32.xlu0 %v4225, 107
        %v4355 = vpop.permute.xlu0 %4354
        %4356 = vrot.lane.b32.xlu0 %v4226, 107
        %v4357 = vpop.permute.xlu0 %4356
        %4358 = vrot.lane.b32.xlu0 %v4227, 107
        %v4359 = vpop.permute.xlu0 %4358
        %v4360 = vsel %vm785, %v4337, %v4339
        %v4361 = vsel %vm785, %v4339, %v4341
        %v4362 = vsel %vm785, %v4343, %v4345
        %v4363 = vsel %vm785, %v4345, %v4347
        %v4364 = vsel %vm785, %v4349, %v4351
        %v4365 = vsel %vm785, %v4351, %v4353
        %v4366 = vsel %vm785, %v4355, %v4357
        %v4367 = vsel %vm785, %v4357, %v4359
        %4368 = vrot.lane.b32.xlu0 %v4228, 106
        %v4369 = vpop.permute.xlu0 %4368
        %4370 = vrot.lane.b32.xlu0 %v4229, 106
        %v4371 = vpop.permute.xlu0 %4370
        %4372 = vrot.lane.b32.xlu0 %v4230, 106
        %v4373 = vpop.permute.xlu0 %4372
        %4374 = vrot.lane.b32.xlu0 %v4231, 106
        %v4375 = vpop.permute.xlu0 %4374
        %4376 = vrot.lane.b32.xlu0 %v4232, 106
        %v4377 = vpop.permute.xlu0 %4376
        %4378 = vrot.lane.b32.xlu0 %v4233, 106
        %v4379 = vpop.permute.xlu0 %4378
        %4380 = vrot.lane.b32.xlu0 %v4234, 106
        %v4381 = vpop.permute.xlu0 %4380
        %4382 = vrot.lane.b32.xlu0 %v4235, 106
        %v4383 = vpop.permute.xlu0 %4382
        %4384 = vrot.lane.b32.xlu0 %v4236, 106
        %v4385 = vpop.permute.xlu0 %4384
        %4386 = vrot.lane.b32.xlu0 %v4237, 106
        %v4387 = vpop.permute.xlu0 %4386
        %4388 = vrot.lane.b32.xlu0 %v4238, 106
        %v4389 = vpop.permute.xlu0 %4388
        %4390 = vrot.lane.b32.xlu0 %v4239, 106
        %v4391 = vpop.permute.xlu0 %4390
        %v4392 = vsel %vm819, %v4369, %v4371
        %v4393 = vsel %vm819, %v4371, %v4373
        %v4394 = vsel %vm819, %v4375, %v4377
        %v4395 = vsel %vm819, %v4377, %v4379
        %v4396 = vsel %vm819, %v4381, %v4383
        %v4397 = vsel %vm819, %v4383, %v4385
        %v4398 = vsel %vm819, %v4387, %v4389
        %v4399 = vsel %vm819, %v4389, %v4391
        %v4407 = vunpack.c.l.b16 %v4174
        %v4408 = vunpack.c.h.b16 %v4174
        %v4409 = vunpack.c.l.b16 %v4175
        %v4410 = vunpack.c.h.b16 %v4175
        %v4411 = vunpack.c.l.b16 %v4176
        %v4412 = vunpack.c.h.b16 %v4176
        %v4413 = vunpack.c.l.b16 %v4177
        %v4414 = vunpack.c.h.b16 %v4177
        %v4415 = vunpack.c.l.b16 %v4178
        %v4416 = vunpack.c.h.b16 %v4178
        %v4417 = vunpack.c.l.b16 %v4179
        %v4418 = vunpack.c.h.b16 %v4179
        %v4419 = vunpack.c.l.b16 %v4180
        %v4420 = vunpack.c.h.b16 %v4180
        %v4421 = vpack.c.b16 %v4409, %v4407
        %v4422 = vpack.c.b16 %v4410, %v4408
        %v4423 = vpack.c.b16 %v4413, %v4411
        %v4424 = vpack.c.b16 %v4414, %v4412
        %v4425 = vpack.c.b16 %v4417, %v4415
        %v4426 = vpack.c.b16 %v4418, %v4416
        %v4427 = vpack.c.b16 %v4419, %v4419
        %v4428 = vpack.c.b16 %v4420, %v4420
        %4429 = vrot.lane.b32.xlu0 %v4216, 88
        %v4430 = vpop.permute.xlu0 %4429
        %4431 = vrot.lane.b32.xlu0 %v4217, 88
        %v4432 = vpop.permute.xlu0 %4431
        %4433 = vrot.lane.b32.xlu0 %v4421, 88
        %v4434 = vpop.permute.xlu0 %4433
        %4435 = vrot.lane.b32.xlu0 %v4422, 88
        %v4436 = vpop.permute.xlu0 %4435
        %4437 = vrot.lane.b32.xlu0 %v4219, 88
        %v4438 = vpop.permute.xlu0 %4437
        %4439 = vrot.lane.b32.xlu0 %v4220, 88
        %v4440 = vpop.permute.xlu0 %4439
        %4441 = vrot.lane.b32.xlu0 %v4423, 88
        %v4442 = vpop.permute.xlu0 %4441
        %4443 = vrot.lane.b32.xlu0 %v4424, 88
        %v4444 = vpop.permute.xlu0 %4443
        %4445 = vrot.lane.b32.xlu0 %v4222, 88
        %v4446 = vpop.permute.xlu0 %4445
        %4447 = vrot.lane.b32.xlu0 %v4223, 88
        %v4448 = vpop.permute.xlu0 %4447
        %4449 = vrot.lane.b32.xlu0 %v4425, 88
        %v4450 = vpop.permute.xlu0 %4449
        %4451 = vrot.lane.b32.xlu0 %v4426, 88
        %v4452 = vpop.permute.xlu0 %4451
        %4453 = vrot.lane.b32.xlu0 %v4225, 88
        %v4454 = vpop.permute.xlu0 %4453
        %4455 = vrot.lane.b32.xlu0 %v4226, 88
        %v4456 = vpop.permute.xlu0 %4455
        %4457 = vrot.lane.b32.xlu0 %v4427, 88
        %v4458 = vpop.permute.xlu0 %4457
        %4459 = vrot.lane.b32.xlu0 %v4428, 88
        %v4460 = vpop.permute.xlu0 %4459
        %v4461 = vsel %vm895, %v4430, %v4432
        %v4462 = vsel %vm895, %v4432, %v4434
        %v4463 = vsel %vm895, %v4434, %v4436
        %v4464 = vsel %vm895, %v4438, %v4440
        %v4465 = vsel %vm895, %v4440, %v4442
        %v4466 = vsel %vm895, %v4442, %v4444
        %v4467 = vsel %vm895, %v4446, %v4448
        %v4468 = vsel %vm895, %v4448, %v4450
        %v4469 = vsel %vm895, %v4450, %v4452
        %v4470 = vsel %vm895, %v4454, %v4456
        %v4471 = vsel %vm895, %v4456, %v4458
        %v4472 = vsel %vm895, %v4458, %v4460
        %v4473 = vpack.c.b16 %v4407, %v4407
        %v4474 = vpack.c.b16 %v4408, %v4408
        %v4475 = vpack.c.b16 %v4411, %v4409
        %v4476 = vpack.c.b16 %v4412, %v4410
        %v4477 = vpack.c.b16 %v4415, %v4413
        %v4478 = vpack.c.b16 %v4416, %v4414
        %v4479 = vpack.c.b16 %v4419, %v4417
        %v4480 = vpack.c.b16 %v4420, %v4418
        %4481 = vrot.lane.b32.xlu0 %v4228, 87
        %v4482 = vpop.permute.xlu0 %4481
        %4483 = vrot.lane.b32.xlu0 %v4229, 87
        %v4484 = vpop.permute.xlu0 %4483
        %4485 = vrot.lane.b32.xlu0 %v4473, 87
        %v4486 = vpop.permute.xlu0 %4485
        %4487 = vrot.lane.b32.xlu0 %v4474, 87
        %v4488 = vpop.permute.xlu0 %4487
        %4489 = vrot.lane.b32.xlu0 %v4231, 87
        %v4490 = vpop.permute.xlu0 %4489
        %4491 = vrot.lane.b32.xlu0 %v4232, 87
        %v4492 = vpop.permute.xlu0 %4491
        %4493 = vrot.lane.b32.xlu0 %v4475, 87
        %v4494 = vpop.permute.xlu0 %4493
        %4495 = vrot.lane.b32.xlu0 %v4476, 87
        %v4496 = vpop.permute.xlu0 %4495
        %4497 = vrot.lane.b32.xlu0 %v4234, 87
        %v4498 = vpop.permute.xlu0 %4497
        %4499 = vrot.lane.b32.xlu0 %v4235, 87
        %v4500 = vpop.permute.xlu0 %4499
        %4501 = vrot.lane.b32.xlu0 %v4477, 87
        %v4502 = vpop.permute.xlu0 %4501
        %4503 = vrot.lane.b32.xlu0 %v4478, 87
        %v4504 = vpop.permute.xlu0 %4503
        %4505 = vrot.lane.b32.xlu0 %v4237, 87
        %v4506 = vpop.permute.xlu0 %4505
        %4507 = vrot.lane.b32.xlu0 %v4238, 87
        %v4508 = vpop.permute.xlu0 %4507
        %4509 = vrot.lane.b32.xlu0 %v4479, 87
        %v4510 = vpop.permute.xlu0 %4509
        %4511 = vrot.lane.b32.xlu0 %v4480, 87
        %v4512 = vpop.permute.xlu0 %4511
        %v4513 = vsel %vm929, %v4482, %v4484
        %v4514 = vsel %vm929, %v4484, %v4486
        %v4515 = vsel %vm929, %v4486, %v4488
        %v4516 = vsel %vm929, %v4490, %v4492
        %v4517 = vsel %vm929, %v4492, %v4494
        %v4518 = vsel %vm929, %v4494, %v4496
        %v4519 = vsel %vm929, %v4498, %v4500
        %v4520 = vsel %vm929, %v4500, %v4502
        %v4521 = vsel %vm929, %v4502, %v4504
        %v4522 = vsel %vm929, %v4506, %v4508
        %v4523 = vsel %vm929, %v4508, %v4510
        %v4524 = vsel %vm929, %v4510, %v4512
        %4525 = vrot.lane.b32.xlu0 %v4216, 86
        %v4526 = vpop.permute.xlu0 %4525
        %4527 = vrot.lane.b32.xlu0 %v4217, 86
        %v4528 = vpop.permute.xlu0 %4527
        %4529 = vrot.lane.b32.xlu0 %v4421, 86
        %v4530 = vpop.permute.xlu0 %4529
        %4531 = vrot.lane.b32.xlu0 %v4422, 86
        %v4532 = vpop.permute.xlu0 %4531
        %4533 = vrot.lane.b32.xlu0 %v4219, 86
        %v4534 = vpop.permute.xlu0 %4533
        %4535 = vrot.lane.b32.xlu0 %v4220, 86
        %v4536 = vpop.permute.xlu0 %4535
        %4537 = vrot.lane.b32.xlu0 %v4423, 86
        %v4538 = vpop.permute.xlu0 %4537
        %4539 = vrot.lane.b32.xlu0 %v4424, 86
        %v4540 = vpop.permute.xlu0 %4539
        %4541 = vrot.lane.b32.xlu0 %v4222, 86
        %v4542 = vpop.permute.xlu0 %4541
        %4543 = vrot.lane.b32.xlu0 %v4223, 86
        %v4544 = vpop.permute.xlu0 %4543
        %4545 = vrot.lane.b32.xlu0 %v4425, 86
        %v4546 = vpop.permute.xlu0 %4545
        %4547 = vrot.lane.b32.xlu0 %v4426, 86
        %v4548 = vpop.permute.xlu0 %4547
        %4549 = vrot.lane.b32.xlu0 %v4225, 86
        %v4550 = vpop.permute.xlu0 %4549
        %4551 = vrot.lane.b32.xlu0 %v4226, 86
        %v4552 = vpop.permute.xlu0 %4551
        %4553 = vrot.lane.b32.xlu0 %v4427, 86
        %v4554 = vpop.permute.xlu0 %4553
        %4555 = vrot.lane.b32.xlu0 %v4428, 86
        %v4556 = vpop.permute.xlu0 %4555
        %v4557 = vsel %vm949, %v4526, %v4528
        %v4558 = vsel %vm949, %v4528, %v4530
        %v4559 = vsel %vm949, %v4530, %v4532
        %v4560 = vsel %vm949, %v4534, %v4536
        %v4561 = vsel %vm949, %v4536, %v4538
        %v4562 = vsel %vm949, %v4538, %v4540
        %v4563 = vsel %vm949, %v4542, %v4544
        %v4564 = vsel %vm949, %v4544, %v4546
        %v4565 = vsel %vm949, %v4546, %v4548
        %v4566 = vsel %vm949, %v4550, %v4552
        %v4567 = vsel %vm949, %v4552, %v4554
        %v4568 = vsel %vm949, %v4554, %v4556
        %v4571 = vsel %vm1120, %v4225, %v4264
        %v4574 = vsel %vm1120, %v4226, %v4265
        %v4577 = vsel %vm1120, %v4227, %v4245
        %v4580 = vsel %vm1120, %v4302, %v4328
        %v4583 = vsel %vm1120, %v4303, %v4329
        %v4586 = vsel %vm1120, %v4295, %v4309
        %v4589 = vsel %vm1120, %v4366, %v4392
        %v4592 = vsel %vm1120, %v4367, %v4393
        %v4595 = vsel %vm1120, %v4359, %v4373
        %v4598 = vsel %vm1120, %v4470, %v4513
        %v4601 = vsel %vm1120, %v4471, %v4514
        %v4604 = vsel %vm1120, %v4472, %v4515
        %v4605 = vld [vmem:[%s15] sm:$0xff]
        %v4606 = vld [vmem:[%s15 + $0x8] sm:$0xff]
        %v4607 = vld [vmem:[%s15 + $0x10] sm:$0xff]
        %v4608 = vld [vmem:[%s15 + $0x18] sm:$0xff]
        %v4609 = vld [vmem:[%s15 + $0x20] sm:$0xff]
        %v4610 = vld [vmem:[%s15 + $0x28] sm:$0xff]
        %4612 = vset.pattern.permute.xlu0 0
        %4613 = vperm.xlu0 %4612, %v4605
        %v4614 = vpop.permute.xlu0 %4613
        %4617 = vset.pattern.permute.xlu0 0
        %4618 = vperm.xlu0 %4617, %v4606
        %v4619 = vpop.permute.xlu0 %4618
        %4622 = vset.pattern.permute.xlu0 0
        %4623 = vperm.xlu0 %4622, %v4607
        %v4624 = vpop.permute.xlu0 %4623
        %4627 = vset.pattern.permute.xlu0 0
        %4628 = vperm.xlu0 %4627, %v4608
        %v4629 = vpop.permute.xlu0 %4628
        %4632 = vset.pattern.permute.xlu0 0
        %4633 = vperm.xlu0 %4632, %v4609
        %v4634 = vpop.permute.xlu0 %4633
        %4637 = vset.pattern.permute.xlu0 0
        %4638 = vperm.xlu0 %4637, %v4610
        %v4639 = vpop.permute.xlu0 %4638
        %v4653 = vunpack.c.l.b16 %v4148
        %v4654 = vunpack.c.h.b16 %v4148
        %v4655 = vunpack.c.l.b16 %v4149
        %v4656 = vunpack.c.h.b16 %v4149
        %v4657 = vunpack.c.l.b16 %v4150
        %v4658 = vunpack.c.h.b16 %v4150
        %v4659 = vunpack.c.l.b16 %v4151
        %v4660 = vunpack.c.h.b16 %v4151
        %v4661 = vunpack.c.l.b16 %v4152
        %v4662 = vunpack.c.h.b16 %v4152
        %v4663 = vunpack.c.l.b16 %v4153
        %v4664 = vunpack.c.h.b16 %v4153
        %v4665 = vunpack.c.l.b16 %v4154
        %v4666 = vunpack.c.h.b16 %v4154
        %v4667 = vunpack.c.l.b16 %v4155
        %v4668 = vunpack.c.h.b16 %v4155
        %v4669 = vunpack.c.l.b16 %v4156
        %v4670 = vunpack.c.h.b16 %v4156
        %v4671 = vunpack.c.l.b16 %v4157
        %v4672 = vunpack.c.h.b16 %v4157
        %v4673 = vunpack.c.l.b16 %v4158
        %v4674 = vunpack.c.h.b16 %v4158
        %v4675 = vunpack.c.l.b16 %v4159
        %v4676 = vunpack.c.h.b16 %v4159
        %v4677 = vpack.c.b16 %v4657, %v4653
        %v4678 = vpack.c.b16 %v4658, %v4654
        %v4679 = vpack.c.b16 %v4659, %v4655
        %v4680 = vpack.c.b16 %v4660, %v4656
        %v4681 = vpack.c.b16 %v4665, %v4661
        %v4682 = vpack.c.b16 %v4666, %v4662
        %v4683 = vpack.c.b16 %v4667, %v4663
        %v4684 = vpack.c.b16 %v4668, %v4664
        %v4685 = vpack.c.b16 %v4673, %v4669
        %v4686 = vpack.c.b16 %v4674, %v4670
        %v4687 = vpack.c.b16 %v4675, %v4671
        %v4688 = vpack.c.b16 %v4676, %v4672
        %4710 = vrot.lane.b32.xlu0 %v4216, 89
        %v4711 = vpop.permute.xlu0 %4710
        %4712 = vrot.lane.b32.xlu0 %v4217, 89
        %v4713 = vpop.permute.xlu0 %4712
        %4714 = vrot.lane.b32.xlu0 %v4218, 89
        %v4715 = vpop.permute.xlu0 %4714
        %4716 = vrot.lane.b32.xlu0 %v4219, 89
        %v4717 = vpop.permute.xlu0 %4716
        %4718 = vrot.lane.b32.xlu0 %v4220, 89
        %v4719 = vpop.permute.xlu0 %4718
        %4720 = vrot.lane.b32.xlu0 %v4221, 89
        %v4721 = vpop.permute.xlu0 %4720
        %4722 = vrot.lane.b32.xlu0 %v4222, 89
        %v4723 = vpop.permute.xlu0 %4722
        %4724 = vrot.lane.b32.xlu0 %v4223, 89
        %v4725 = vpop.permute.xlu0 %4724
        %4726 = vrot.lane.b32.xlu0 %v4224, 89
        %v4727 = vpop.permute.xlu0 %4726
        %4728 = vrot.lane.b32.xlu0 %v4571, 89
        %v4729 = vpop.permute.xlu0 %4728
        %4730 = vrot.lane.b32.xlu0 %v4574, 89
        %v4731 = vpop.permute.xlu0 %4730
        %4732 = vrot.lane.b32.xlu0 %v4577, 89
        %v4733 = vpop.permute.xlu0 %4732
        %4734 = vrot.lane.b32.xlu0 %v4266, 89
        %v4735 = vpop.permute.xlu0 %4734
        %4736 = vrot.lane.b32.xlu0 %v4267, 89
        %v4737 = vpop.permute.xlu0 %4736
        %4738 = vrot.lane.b32.xlu0 %v4251, 89
        %v4739 = vpop.permute.xlu0 %4738
        %4740 = vrot.lane.b32.xlu0 %v4268, 89
        %v4741 = vpop.permute.xlu0 %4740
        %4742 = vrot.lane.b32.xlu0 %v4269, 89
        %v4743 = vpop.permute.xlu0 %4742
        %4744 = vrot.lane.b32.xlu0 %v4257, 89
        %v4745 = vpop.permute.xlu0 %4744
        %4746 = vrot.lane.b32.xlu0 %v4270, 89
        %v4747 = vpop.permute.xlu0 %4746
        %4748 = vrot.lane.b32.xlu0 %v4271, 89
        %v4749 = vpop.permute.xlu0 %4748
        %4750 = vrot.lane.b32.xlu0 %v4263, 89
        %v4751 = vpop.permute.xlu0 %4750
        %4752 = vrot.lane.b32.xlu0 %v4296, 89
        %v4753 = vpop.permute.xlu0 %4752
        %4754 = vrot.lane.b32.xlu0 %v4297, 89
        %v4755 = vpop.permute.xlu0 %4754
        %4756 = vrot.lane.b32.xlu0 %v4277, 89
        %v4757 = vpop.permute.xlu0 %4756
        %4758 = vrot.lane.b32.xlu0 %v4298, 89
        %v4759 = vpop.permute.xlu0 %4758
        %4760 = vrot.lane.b32.xlu0 %v4299, 89
        %v4761 = vpop.permute.xlu0 %4760
        %4762 = vrot.lane.b32.xlu0 %v4283, 89
        %v4763 = vpop.permute.xlu0 %4762
        %4764 = vrot.lane.b32.xlu0 %v4300, 89
        %v4765 = vpop.permute.xlu0 %4764
        %4766 = vrot.lane.b32.xlu0 %v4301, 89
        %v4767 = vpop.permute.xlu0 %4766
        %4768 = vrot.lane.b32.xlu0 %v4289, 89
        %v4769 = vpop.permute.xlu0 %4768
        %4770 = vrot.lane.b32.xlu0 %v4580, 89
        %v4771 = vpop.permute.xlu0 %4770
        %4772 = vrot.lane.b32.xlu0 %v4583, 89
        %v4773 = vpop.permute.xlu0 %4772
        %4774 = vrot.lane.b32.xlu0 %v4586, 89
        %v4775 = vpop.permute.xlu0 %4774
        %4776 = vrot.lane.b32.xlu0 %v4330, 89
        %v4777 = vpop.permute.xlu0 %4776
        %4778 = vrot.lane.b32.xlu0 %v4331, 89
        %v4779 = vpop.permute.xlu0 %4778
        %4780 = vrot.lane.b32.xlu0 %v4315, 89
        %v4781 = vpop.permute.xlu0 %4780
        %4782 = vrot.lane.b32.xlu0 %v4332, 89
        %v4783 = vpop.permute.xlu0 %4782
        %4784 = vrot.lane.b32.xlu0 %v4333, 89
        %v4785 = vpop.permute.xlu0 %4784
        %4786 = vrot.lane.b32.xlu0 %v4321, 89
        %v4787 = vpop.permute.xlu0 %4786
        %4788 = vrot.lane.b32.xlu0 %v4334, 89
        %v4789 = vpop.permute.xlu0 %4788
        %4790 = vrot.lane.b32.xlu0 %v4335, 89
        %v4791 = vpop.permute.xlu0 %4790
        %4792 = vrot.lane.b32.xlu0 %v4327, 89
        %v4793 = vpop.permute.xlu0 %4792
        %4794 = vrot.lane.b32.xlu0 %v4360, 89
        %v4795 = vpop.permute.xlu0 %4794
        %4796 = vrot.lane.b32.xlu0 %v4361, 89
        %v4797 = vpop.permute.xlu0 %4796
        %4798 = vrot.lane.b32.xlu0 %v4341, 89
        %v4799 = vpop.permute.xlu0 %4798
        %4800 = vrot.lane.b32.xlu0 %v4362, 89
        %v4801 = vpop.permute.xlu0 %4800
        %4802 = vrot.lane.b32.xlu0 %v4363, 89
        %v4803 = vpop.permute.xlu0 %4802
        %4804 = vrot.lane.b32.xlu0 %v4347, 89
        %v4805 = vpop.permute.xlu0 %4804
        %4806 = vrot.lane.b32.xlu0 %v4364, 89
        %v4807 = vpop.permute.xlu0 %4806
        %4808 = vrot.lane.b32.xlu0 %v4365, 89
        %v4809 = vpop.permute.xlu0 %4808
        %4810 = vrot.lane.b32.xlu0 %v4353, 89
        %v4811 = vpop.permute.xlu0 %4810
        %4812 = vrot.lane.b32.xlu0 %v4589, 89
        %v4813 = vpop.permute.xlu0 %4812
        %4814 = vrot.lane.b32.xlu0 %v4592, 89
        %v4815 = vpop.permute.xlu0 %4814
        %4816 = vrot.lane.b32.xlu0 %v4595, 89
        %v4817 = vpop.permute.xlu0 %4816
        %4818 = vrot.lane.b32.xlu0 %v4394, 89
        %v4819 = vpop.permute.xlu0 %4818
        %4820 = vrot.lane.b32.xlu0 %v4395, 89
        %v4821 = vpop.permute.xlu0 %4820
        %4822 = vrot.lane.b32.xlu0 %v4379, 89
        %v4823 = vpop.permute.xlu0 %4822
        %4824 = vrot.lane.b32.xlu0 %v4396, 89
        %v4825 = vpop.permute.xlu0 %4824
        %4826 = vrot.lane.b32.xlu0 %v4397, 89
        %v4827 = vpop.permute.xlu0 %4826
        %4828 = vrot.lane.b32.xlu0 %v4385, 89
        %v4829 = vpop.permute.xlu0 %4828
        %4830 = vrot.lane.b32.xlu0 %v4398, 89
        %v4831 = vpop.permute.xlu0 %4830
        %4832 = vrot.lane.b32.xlu0 %v4399, 89
        %v4833 = vpop.permute.xlu0 %4832
        %4834 = vrot.lane.b32.xlu0 %v4391, 89
        %v4835 = vpop.permute.xlu0 %4834
        %4836 = vrot.lane.b32.xlu0 %v4461, 89
        %v4837 = vpop.permute.xlu0 %4836
        %4838 = vrot.lane.b32.xlu0 %v4462, 89
        %v4839 = vpop.permute.xlu0 %4838
        %4840 = vrot.lane.b32.xlu0 %v4463, 89
        %v4841 = vpop.permute.xlu0 %4840
        %4842 = vrot.lane.b32.xlu0 %v4464, 89
        %v4843 = vpop.permute.xlu0 %4842
        %4844 = vrot.lane.b32.xlu0 %v4465, 89
        %v4845 = vpop.permute.xlu0 %4844
        %4846 = vrot.lane.b32.xlu0 %v4466, 89
        %v4847 = vpop.permute.xlu0 %4846
        %4848 = vrot.lane.b32.xlu0 %v4467, 89
        %v4849 = vpop.permute.xlu0 %4848
        %4850 = vrot.lane.b32.xlu0 %v4468, 89
        %v4851 = vpop.permute.xlu0 %4850
        %4852 = vrot.lane.b32.xlu0 %v4469, 89
        %v4853 = vpop.permute.xlu0 %4852
        %4854 = vrot.lane.b32.xlu0 %v4598, 89
        %v4855 = vpop.permute.xlu0 %4854
        %4856 = vrot.lane.b32.xlu0 %v4601, 89
        %v4857 = vpop.permute.xlu0 %4856
        %4858 = vrot.lane.b32.xlu0 %v4604, 89
        %v4859 = vpop.permute.xlu0 %4858
        %4860 = vrot.lane.b32.xlu0 %v4516, 89
        %v4861 = vpop.permute.xlu0 %4860
        %4862 = vrot.lane.b32.xlu0 %v4517, 89
        %v4863 = vpop.permute.xlu0 %4862
        %4864 = vrot.lane.b32.xlu0 %v4518, 89
        %v4865 = vpop.permute.xlu0 %4864
        %4866 = vrot.lane.b32.xlu0 %v4519, 89
        %v4867 = vpop.permute.xlu0 %4866
        %4868 = vrot.lane.b32.xlu0 %v4520, 89
        %v4869 = vpop.permute.xlu0 %4868
        %4870 = vrot.lane.b32.xlu0 %v4521, 89
        %v4871 = vpop.permute.xlu0 %4870
        %4872 = vrot.lane.b32.xlu0 %v4522, 89
        %v4873 = vpop.permute.xlu0 %4872
        %4874 = vrot.lane.b32.xlu0 %v4523, 89
        %v4875 = vpop.permute.xlu0 %4874
        %4876 = vrot.lane.b32.xlu0 %v4524, 89
        %v4877 = vpop.permute.xlu0 %4876
        %4878 = vrot.lane.b32.xlu0 %v4557, 89
        %v4879 = vpop.permute.xlu0 %4878
        %4880 = vrot.lane.b32.xlu0 %v4558, 89
        %v4881 = vpop.permute.xlu0 %4880
        %4882 = vrot.lane.b32.xlu0 %v4559, 89
        %v4883 = vpop.permute.xlu0 %4882
        %4884 = vrot.lane.b32.xlu0 %v4560, 89
        %v4885 = vpop.permute.xlu0 %4884
        %4886 = vrot.lane.b32.xlu0 %v4561, 89
        %v4887 = vpop.permute.xlu0 %4886
        %4888 = vrot.lane.b32.xlu0 %v4562, 89
        %v4889 = vpop.permute.xlu0 %4888
        %4890 = vrot.lane.b32.xlu0 %v4563, 89
        %v4891 = vpop.permute.xlu0 %4890
        %4892 = vrot.lane.b32.xlu0 %v4564, 89
        %v4893 = vpop.permute.xlu0 %4892
        %4894 = vrot.lane.b32.xlu0 %v4565, 89
        %v4895 = vpop.permute.xlu0 %4894
        %4896 = vrot.lane.b32.xlu0 %v4566, 89
        %v4897 = vpop.permute.xlu0 %4896
        %4898 = vrot.lane.b32.xlu0 %v4567, 89
        %v4899 = vpop.permute.xlu0 %4898
        %4900 = vrot.lane.b32.xlu0 %v4568, 89
        %v4901 = vpop.permute.xlu0 %4900
        %v4902 = vsel %vm2368, %v4711, %v4713
        %v4903 = vsel %vm2368, %v4713, %v4715
        %v4904 = vsel %vm2368, %v4717, %v4719
        %v4905 = vsel %vm2368, %v4719, %v4721
        %v4906 = vsel %vm2368, %v4723, %v4725
        %v4907 = vsel %vm2368, %v4725, %v4727
        %v4908 = vsel %vm2368, %v4729, %v4731
        %v4909 = vsel %vm2368, %v4731, %v4733
        %v4910 = vsel %vm2368, %v4735, %v4737
        %v4911 = vsel %vm2368, %v4737, %v4739
        %v4912 = vsel %vm2368, %v4741, %v4743
        %v4913 = vsel %vm2368, %v4743, %v4745
        %v4914 = vsel %vm2368, %v4747, %v4749
        %v4915 = vsel %vm2368, %v4749, %v4751
        %v4916 = vsel %vm2368, %v4753, %v4755
        %v4917 = vsel %vm2368, %v4755, %v4757
        %v4918 = vsel %vm2368, %v4759, %v4761
        %v4919 = vsel %vm2368, %v4761, %v4763
        %v4920 = vsel %vm2368, %v4765, %v4767
        %v4921 = vsel %vm2368, %v4767, %v4769
        %v4922 = vsel %vm2368, %v4771, %v4773
        %v4923 = vsel %vm2368, %v4773, %v4775
        %v4924 = vsel %vm2368, %v4777, %v4779
        %v4925 = vsel %vm2368, %v4779, %v4781
        %v4926 = vsel %vm2368, %v4783, %v4785
        %v4927 = vsel %vm2368, %v4785, %v4787
        %v4928 = vsel %vm2368, %v4789, %v4791
        %v4929 = vsel %vm2368, %v4791, %v4793
        %v4930 = vsel %vm2368, %v4795, %v4797
        %v4931 = vsel %vm2368, %v4797, %v4799
        %v4932 = vsel %vm2368, %v4801, %v4803
        %v4933 = vsel %vm2368, %v4803, %v4805
        %v4934 = vsel %vm2368, %v4807, %v4809
        %v4935 = vsel %vm2368, %v4809, %v4811
        %v4936 = vsel %vm2368, %v4813, %v4815
        %v4937 = vsel %vm2368, %v4815, %v4817
        %v4938 = vsel %vm2368, %v4819, %v4821
        %v4939 = vsel %vm2368, %v4821, %v4823
        %v4940 = vsel %vm2368, %v4825, %v4827
        %v4941 = vsel %vm2368, %v4827, %v4829
        %v4942 = vsel %vm2368, %v4831, %v4833
        %v4943 = vsel %vm2368, %v4833, %v4835
        %v4944 = vsel %vm2368, %v4837, %v4839
        %v4945 = vsel %vm2368, %v4839, %v4841
        %v4946 = vsel %vm2368, %v4843, %v4845
        %v4947 = vsel %vm2368, %v4845, %v4847
        %v4948 = vsel %vm2368, %v4849, %v4851
        %v4949 = vsel %vm2368, %v4851, %v4853
        %v4950 = vsel %vm2368, %v4855, %v4857
        %v4951 = vsel %vm2368, %v4857, %v4859
        %v4952 = vsel %vm2368, %v4861, %v4863
        %v4953 = vsel %vm2368, %v4863, %v4865
        %v4954 = vsel %vm2368, %v4867, %v4869
        %v4955 = vsel %vm2368, %v4869, %v4871
        %v4956 = vsel %vm2368, %v4873, %v4875
        %v4957 = vsel %vm2368, %v4875, %v4877
        %v4958 = vsel %vm2368, %v4879, %v4881
        %v4959 = vsel %vm2368, %v4881, %v4883
        %v4960 = vsel %vm2368, %v4885, %v4887
        %v4961 = vsel %vm2368, %v4887, %v4889
        %v4962 = vsel %vm2368, %v4891, %v4893
        %v4963 = vsel %vm2368, %v4893, %v4895
        %v4964 = vsel %vm2368, %v4897, %v4899
        %v4965 = vsel %vm2368, %v4899, %v4901
        %vm5059 = vcmask 982016
        %v5061 = vsel %vm5059, %v4680, 0
        %v5064 = vsel %vm5059, %v4684, 0
        %v5067 = vsel %vm5059, %v4688, 0
        %v5070 = vsel %vm1120, %v4964, 0
        %v5073 = vsel %vm1120, %v4965, 0
        %v5076 = vsel %vm1120, %v4901, 0
        %5078 = vmatpush.bf16.msra.mxu0 %v4916
        %5079 = vmatpush.bf16.msra.mxu0 %v4914
        %5080 = vmatpush.bf16.msra.mxu0 %v4912
        %5081 = vmatpush.bf16.msra.mxu0 %v4910
        %5082 = vmatpush.bf16.msra.mxu0 %v4908
        %5083 = vmatpush.bf16.msra.mxu0 %v4906
        %5084 = vmatpush.bf16.msra.mxu0 %v4904
        %5085 = vmatpush.bf16.msra.mxu0 %v4902
        %5086 = vmatmul.bf16.gmra.mxu0 %v4677
        %v5087 = vpop.f32.mrf.mxu0
        %v5088 = vadd.f32 %v4614, %v5087
        %v5089 = vpop.f32.mrf.mxu0
        %v5090 = vadd.f32 %v4619, %v5089
        %5091 = vmatmul.bf16.gmra.mxu0 %v4681
        %v5092 = vpop.f32.mrf.mxu0
        %v5093 = vadd.f32 %v4624, %v5092
        %v5094 = vpop.f32.mrf.mxu0
        %v5095 = vadd.f32 %v4629, %v5094
        %5096 = vmatmul.bf16.gmra.mxu0 %v4685
        %v5097 = vpop.f32.mrf.mxu0
        %v5098 = vadd.f32 %v4634, %v5097
        %v5099 = vpop.f32.mrf.mxu0
        %v5100 = vadd.f32 %v4639, %v5099
        %5101 = vdwg.mxu0
        %5102 = vmatpush.bf16.msra.mxu0 %v4932
        %5103 = vmatpush.bf16.msra.mxu0 %v4930
        %5104 = vmatpush.bf16.msra.mxu0 %v4928
        %5105 = vmatpush.bf16.msra.mxu0 %v4926
        %5106 = vmatpush.bf16.msra.mxu0 %v4924
        %5107 = vmatpush.bf16.msra.mxu0 %v4922
        %5108 = vmatpush.bf16.msra.mxu0 %v4920
        %5109 = vmatpush.bf16.msra.mxu0 %v4918
        %5110 = vmatmul.bf16.gmra.mxu0 %v4678
        %v5111 = vpop.f32.mrf.mxu0
        %v5112 = vadd.f32 %v5088, %v5111
        %v5113 = vpop.f32.mrf.mxu0
        %v5114 = vadd.f32 %v5090, %v5113
        %5115 = vmatmul.bf16.gmra.mxu0 %v4682
        %v5116 = vpop.f32.mrf.mxu0
        %v5117 = vadd.f32 %v5093, %v5116
        %v5118 = vpop.f32.mrf.mxu0
        %v5119 = vadd.f32 %v5095, %v5118
        %5120 = vmatmul.bf16.gmra.mxu0 %v4686
        %v5121 = vpop.f32.mrf.mxu0
        %v5122 = vadd.f32 %v5098, %v5121
        %v5123 = vpop.f32.mrf.mxu0
        %v5124 = vadd.f32 %v5100, %v5123
        %5125 = vdwg.mxu0
        %5126 = vmatpush.bf16.msra.mxu0 %v4948
        %5127 = vmatpush.bf16.msra.mxu0 %v4946
        %5128 = vmatpush.bf16.msra.mxu0 %v4944
        %5129 = vmatpush.bf16.msra.mxu0 %v4942
        %5130 = vmatpush.bf16.msra.mxu0 %v4940
        %5131 = vmatpush.bf16.msra.mxu0 %v4938
        %5132 = vmatpush.bf16.msra.mxu0 %v4936
        %5133 = vmatpush.bf16.msra.mxu0 %v4934
        %5134 = vmatmul.bf16.gmra.mxu0 %v4679
        %v5135 = vpop.f32.mrf.mxu0
        %v5136 = vadd.f32 %v5112, %v5135
        %v5137 = vpop.f32.mrf.mxu0
        %v5138 = vadd.f32 %v5114, %v5137
        %5139 = vmatmul.bf16.gmra.mxu0 %v4683
        %v5140 = vpop.f32.mrf.mxu0
        %v5141 = vadd.f32 %v5117, %v5140
        %v5142 = vpop.f32.mrf.mxu0
        %v5143 = vadd.f32 %v5119, %v5142
        %5144 = vmatmul.bf16.gmra.mxu0 %v4687
        %v5145 = vpop.f32.mrf.mxu0
        %v5146 = vadd.f32 %v5122, %v5145
        %v5147 = vpop.f32.mrf.mxu0
        %v5148 = vadd.f32 %v5124, %v5147
        %5149 = vdwg.mxu0
        %5150 = vmatpush.bf16.msra.mxu0 %v5070
        %5151 = vmatpush.bf16.msra.mxu0 %v4962
        %5152 = vmatpush.bf16.msra.mxu0 %v4960
        %5153 = vmatpush.bf16.msra.mxu0 %v4958
        %5154 = vmatpush.bf16.msra.mxu0 %v4956
        %5155 = vmatpush.bf16.msra.mxu0 %v4954
        %5156 = vmatpush.bf16.msra.mxu0 %v4952
        %5157 = vmatpush.bf16.msra.mxu0 %v4950
        %5158 = vmatmul.bf16.gmra.mxu0 %v5061
        %v5159 = vpop.f32.mrf.mxu0
        %v5160 = vadd.f32 %v5136, %v5159
        %v5161 = vpop.f32.mrf.mxu0
        %v5162 = vadd.f32 %v5138, %v5161
        %5163 = vmatmul.bf16.gmra.mxu0 %v5064
        %v5164 = vpop.f32.mrf.mxu0
        %v5165 = vadd.f32 %v5141, %v5164
        %v5166 = vpop.f32.mrf.mxu0
        %v5167 = vadd.f32 %v5143, %v5166
        %5168 = vmatmul.bf16.gmra.mxu0 %v5067
        %v5169 = vpop.f32.mrf.mxu0
        %v5170 = vadd.f32 %v5146, %v5169
        %v5171 = vpop.f32.mrf.mxu0
        %v5172 = vadd.f32 %v5148, %v5171
        %5173 = vdwg.mxu0
        %5174 = vmatpush.bf16.msra.mxu0 %v4917
        %5175 = vmatpush.bf16.msra.mxu0 %v4915
        %5176 = vmatpush.bf16.msra.mxu0 %v4913
        %5177 = vmatpush.bf16.msra.mxu0 %v4911
        %5178 = vmatpush.bf16.msra.mxu0 %v4909
        %5179 = vmatpush.bf16.msra.mxu0 %v4907
        %5180 = vmatpush.bf16.msra.mxu0 %v4905
        %5181 = vmatpush.bf16.msra.mxu0 %v4903
        %5182 = vmatmul.bf16.gmra.mxu0 %v4677
        %v5183 = vpop.f32.mrf.mxu0
        %v5184 = vadd.f32 %v4614, %v5183
        %v5185 = vpop.f32.mrf.mxu0
        %v5186 = vadd.f32 %v4619, %v5185
        %5187 = vmatmul.bf16.gmra.mxu0 %v4681
        %v5188 = vpop.f32.mrf.mxu0
        %v5189 = vadd.f32 %v4624, %v5188
        %v5190 = vpop.f32.mrf.mxu0
        %v5191 = vadd.f32 %v4629, %v5190
        %5192 = vmatmul.bf16.gmra.mxu0 %v4685
        %v5193 = vpop.f32.mrf.mxu0
        %v5194 = vadd.f32 %v4634, %v5193
        %v5195 = vpop.f32.mrf.mxu0
        %v5196 = vadd.f32 %v4639, %v5195
        %5197 = vdwg.mxu0
        %5198 = vmatpush.bf16.msra.mxu0 %v4933
        %5199 = vmatpush.bf16.msra.mxu0 %v4931
        %5200 = vmatpush.bf16.msra.mxu0 %v4929
        %5201 = vmatpush.bf16.msra.mxu0 %v4927
        %5202 = vmatpush.bf16.msra.mxu0 %v4925
        %5203 = vmatpush.bf16.msra.mxu0 %v4923
        %5204 = vmatpush.bf16.msra.mxu0 %v4921
        %5205 = vmatpush.bf16.msra.mxu0 %v4919
        %5206 = vmatmul.bf16.gmra.mxu0 %v4678
        %v5207 = vpop.f32.mrf.mxu0
        %v5208 = vadd.f32 %v5184, %v5207
        %v5209 = vpop.f32.mrf.mxu0
        %v5210 = vadd.f32 %v5186, %v5209
        %5211 = vmatmul.bf16.gmra.mxu0 %v4682
        %v5212 = vpop.f32.mrf.mxu0
        %v5213 = vadd.f32 %v5189, %v5212
        %v5214 = vpop.f32.mrf.mxu0
        %v5215 = vadd.f32 %v5191, %v5214
        %5216 = vmatmul.bf16.gmra.mxu0 %v4686
        %v5217 = vpop.f32.mrf.mxu0
        %v5218 = vadd.f32 %v5194, %v5217
        %v5219 = vpop.f32.mrf.mxu0
        %v5220 = vadd.f32 %v5196, %v5219
        %5221 = vdwg.mxu0
        %5222 = vmatpush.bf16.msra.mxu0 %v4949
        %5223 = vmatpush.bf16.msra.mxu0 %v4947
        %5224 = vmatpush.bf16.msra.mxu0 %v4945
        %5225 = vmatpush.bf16.msra.mxu0 %v4943
        %5226 = vmatpush.bf16.msra.mxu0 %v4941
        %5227 = vmatpush.bf16.msra.mxu0 %v4939
        %5228 = vmatpush.bf16.msra.mxu0 %v4937
        %5229 = vmatpush.bf16.msra.mxu0 %v4935
        %5230 = vmatmul.bf16.gmra.mxu0 %v4679
        %v5231 = vpop.f32.mrf.mxu0
        %v5232 = vadd.f32 %v5208, %v5231
        %v5233 = vpop.f32.mrf.mxu0
        %v5234 = vadd.f32 %v5210, %v5233
        %5235 = vmatmul.bf16.gmra.mxu0 %v4683
        %v5236 = vpop.f32.mrf.mxu0
        %v5237 = vadd.f32 %v5213, %v5236
        %v5238 = vpop.f32.mrf.mxu0
        %v5239 = vadd.f32 %v5215, %v5238
        %5240 = vmatmul.bf16.gmra.mxu0 %v4687
        %v5241 = vpop.f32.mrf.mxu0
        %v5242 = vadd.f32 %v5218, %v5241
        %v5243 = vpop.f32.mrf.mxu0
        %v5244 = vadd.f32 %v5220, %v5243
        %5245 = vdwg.mxu0
        %5246 = vmatpush.bf16.msra.mxu0 %v5073
        %5247 = vmatpush.bf16.msra.mxu0 %v4963
        %5248 = vmatpush.bf16.msra.mxu0 %v4961
        %5249 = vmatpush.bf16.msra.mxu0 %v4959
        %5250 = vmatpush.bf16.msra.mxu0 %v4957
        %5251 = vmatpush.bf16.msra.mxu0 %v4955
        %5252 = vmatpush.bf16.msra.mxu0 %v4953
        %5253 = vmatpush.bf16.msra.mxu0 %v4951
        %5254 = vmatmul.bf16.gmra.mxu0 %v5061
        %v5255 = vpop.f32.mrf.mxu0
        %v5256 = vadd.f32 %v5232, %v5255
        %v5257 = vpop.f32.mrf.mxu0
        %v5258 = vadd.f32 %v5234, %v5257
        %5259 = vmatmul.bf16.gmra.mxu0 %v5064
        %v5260 = vpop.f32.mrf.mxu0
        %v5261 = vadd.f32 %v5237, %v5260
        %v5262 = vpop.f32.mrf.mxu0
        %v5263 = vadd.f32 %v5239, %v5262
        %5264 = vmatmul.bf16.gmra.mxu0 %v5067
        %v5265 = vpop.f32.mrf.mxu0
        %v5266 = vadd.f32 %v5242, %v5265
        %v5267 = vpop.f32.mrf.mxu0
        %v5268 = vadd.f32 %v5244, %v5267
        %5269 = vdwg.mxu0
        %5270 = vmatpush.bf16.msra.mxu0 %v4757
        %5271 = vmatpush.bf16.msra.mxu0 %v4751
        %5272 = vmatpush.bf16.msra.mxu0 %v4745
        %5273 = vmatpush.bf16.msra.mxu0 %v4739
        %5274 = vmatpush.bf16.msra.mxu0 %v4733
        %5275 = vmatpush.bf16.msra.mxu0 %v4727
        %5276 = vmatpush.bf16.msra.mxu0 %v4721
        %5277 = vmatpush.bf16.msra.mxu0 %v4715
        %5278 = vmatmul.bf16.gmra.mxu0 %v4677
        %v5279 = vpop.f32.mrf.mxu0
        %v5280 = vadd.f32 %v4614, %v5279
        %v5281 = vpop.f32.mrf.mxu0
        %v5282 = vadd.f32 %v4619, %v5281
        %5283 = vmatmul.bf16.gmra.mxu0 %v4681
        %v5284 = vpop.f32.mrf.mxu0
        %v5285 = vadd.f32 %v4624, %v5284
        %v5286 = vpop.f32.mrf.mxu0
        %v5287 = vadd.f32 %v4629, %v5286
        %5288 = vmatmul.bf16.gmra.mxu0 %v4685
        %v5289 = vpop.f32.mrf.mxu0
        %v5290 = vadd.f32 %v4634, %v5289
        %v5291 = vpop.f32.mrf.mxu0
        %v5292 = vadd.f32 %v4639, %v5291
        %5293 = vdwg.mxu0
        %5294 = vmatpush.bf16.msra.mxu0 %v4805
        %5295 = vmatpush.bf16.msra.mxu0 %v4799
        %5296 = vmatpush.bf16.msra.mxu0 %v4793
        %5297 = vmatpush.bf16.msra.mxu0 %v4787
        %5298 = vmatpush.bf16.msra.mxu0 %v4781
        %5299 = vmatpush.bf16.msra.mxu0 %v4775
        %5300 = vmatpush.bf16.msra.mxu0 %v4769
        %5301 = vmatpush.bf16.msra.mxu0 %v4763
        %5302 = vmatmul.bf16.gmra.mxu0 %v4678
        %v5303 = vpop.f32.mrf.mxu0
        %v5304 = vadd.f32 %v5280, %v5303
        %v5305 = vpop.f32.mrf.mxu0
        %v5306 = vadd.f32 %v5282, %v5305
        %5307 = vmatmul.bf16.gmra.mxu0 %v4682
        %v5308 = vpop.f32.mrf.mxu0
        %v5309 = vadd.f32 %v5285, %v5308
        %v5310 = vpop.f32.mrf.mxu0
        %v5311 = vadd.f32 %v5287, %v5310
        %5312 = vmatmul.bf16.gmra.mxu0 %v4686
        %v5313 = vpop.f32.mrf.mxu0
        %v5314 = vadd.f32 %v5290, %v5313
        %v5315 = vpop.f32.mrf.mxu0
        %v5316 = vadd.f32 %v5292, %v5315
        %5317 = vdwg.mxu0
        %5318 = vmatpush.bf16.msra.mxu0 %v4853
        %5319 = vmatpush.bf16.msra.mxu0 %v4847
        %5320 = vmatpush.bf16.msra.mxu0 %v4841
        %5321 = vmatpush.bf16.msra.mxu0 %v4835
        %5322 = vmatpush.bf16.msra.mxu0 %v4829
        %5323 = vmatpush.bf16.msra.mxu0 %v4823
        %5324 = vmatpush.bf16.msra.mxu0 %v4817
        %5325 = vmatpush.bf16.msra.mxu0 %v4811
        %5326 = vmatmul.bf16.gmra.mxu0 %v4679
        %v5327 = vpop.f32.mrf.mxu0
        %v5328 = vadd.f32 %v5304, %v5327
        %v5329 = vpop.f32.mrf.mxu0
        %v5330 = vadd.f32 %v5306, %v5329
        %5331 = vmatmul.bf16.gmra.mxu0 %v4683
        %v5332 = vpop.f32.mrf.mxu0
        %v5333 = vadd.f32 %v5309, %v5332
        %v5334 = vpop.f32.mrf.mxu0
        %v5335 = vadd.f32 %v5311, %v5334
        %5336 = vmatmul.bf16.gmra.mxu0 %v4687
        %v5337 = vpop.f32.mrf.mxu0
        %v5338 = vadd.f32 %v5314, %v5337
        %v5339 = vpop.f32.mrf.mxu0
        %v5340 = vadd.f32 %v5316, %v5339
        %5341 = vdwg.mxu0
        %5342 = vmatpush.bf16.msra.mxu0 %v5076
        %5343 = vmatpush.bf16.msra.mxu0 %v4895
        %5344 = vmatpush.bf16.msra.mxu0 %v4889
        %5345 = vmatpush.bf16.msra.mxu0 %v4883
        %5346 = vmatpush.bf16.msra.mxu0 %v4877
        %5347 = vmatpush.bf16.msra.mxu0 %v4871
        %5348 = vmatpush.bf16.msra.mxu0 %v4865
        %5349 = vmatpush.bf16.msra.mxu0 %v4859
        %5350 = vmatmul.bf16.gmra.mxu0 %v5061
        %v5351 = vpop.f32.mrf.mxu0
        %v5352 = vadd.f32 %v5328, %v5351
        %v5353 = vpop.f32.mrf.mxu0
        %v5354 = vadd.f32 %v5330, %v5353
        %5355 = vmatmul.bf16.gmra.mxu0 %v5064
        %v5356 = vpop.f32.mrf.mxu0
        %v5357 = vadd.f32 %v5333, %v5356
        %v5358 = vpop.f32.mrf.mxu0
        %v5359 = vadd.f32 %v5335, %v5358
        %5360 = vmatmul.bf16.gmra.mxu0 %v5067
        %v5361 = vpop.f32.mrf.mxu0
        %v5362 = vadd.f32 %v5338, %v5361
        %v5363 = vpop.f32.mrf.mxu0
        %v5364 = vadd.f32 %v5340, %v5363
        %5365 = vdwg.mxu0
        %5366 = vst [vmem:[%s571] sm:$0xff] %v5160
        %5367 = vst [vmem:[%s571 + $0x8] sm:$0xff] %v5256
        %vm5368 = vcmask 523264
        %5369 = vst.msk [vmem:[%s571 + $0x10] sm:$0xff] %vm5368, %v5352
        %5370 = vst [vmem:[%s571 + $0x18] sm:$0xff] %v5162
        %5371 = vst [vmem:[%s571 + $0x20] sm:$0xff] %v5258
        %5372 = vst.msk [vmem:[%s571 + $0x28] sm:$0xff] %vm5368, %v5354
        %5373 = vst [vmem:[%s571 + $0x30] sm:$0xff] %v5165
        %5374 = vst [vmem:[%s571 + $0x38] sm:$0xff] %v5261
        %5375 = vst.msk [vmem:[%s571 + $0x40] sm:$0xff] %vm5368, %v5357
        %5376 = vst [vmem:[%s571 + $0x48] sm:$0xff] %v5167
        %5377 = vst [vmem:[%s571 + $0x50] sm:$0xff] %v5263
        %5378 = vst.msk [vmem:[%s571 + $0x58] sm:$0xff] %vm5368, %v5359
        %5379 = vst [vmem:[%s571 + $0x60] sm:$0xff] %v5170
        %5380 = vst [vmem:[%s571 + $0x68] sm:$0xff] %v5266
        %5381 = vst.msk [vmem:[%s571 + $0x70] sm:$0xff] %vm5368, %v5362
        %5382 = vst [vmem:[%s571 + $0x78] sm:$0xff] %v5172
        %5383 = vst [vmem:[%s571 + $0x80] sm:$0xff] %v5268
        %5384 = vst.msk [vmem:[%s571 + $0x88] sm:$0xff] %vm5368, %v5364
        %p5385 = scmp.lt.s32.totalorder %s29, 1
        %s5386 = scalar_select %p5385, %s29, 1
        %s5387 = smul.addr %s5386, 18
        %s5388 = smul.addr %s5387, 8
        %s5389 = scalar_lea.vmem %s16, %s5388
        // Predicated region
        $region97: #{fsrcnn_forward.1} parent=83 // pred_check
          %p5390 = pneg %p388
        $region98: #{fsrcnn_forward.1} parent=83 // pred_check_branch
          %5392 = sbr.rel (%p5390) target = $region100
        $region99: #{fsrcnn_forward.1} parent=83 // pred_region
          _
        $region100: #{fsrcnn_forward.1} parent=83 // pred_fallthru
          _
      $region84: #{fsrcnn_forward.1} parent=5 // pred_fallthru
        _
      %p5393 = scmp.le.s32.totalorder 2, %s24
      // Predicated region
      $region101: #{fsrcnn_forward.1} parent=5 // pred_check
        %p5394 = pneg %p5393
      $region102: #{fsrcnn_forward.1} parent=5 // pred_check_branch
        %5396 = sbr.rel (%p5394) target = $region104
      $region103: #{fsrcnn_forward.1} parent=5 // pred_region
        %s5397 = ssub.s32 %s24, 2
        // Predicated region
        $region105: #{fsrcnn_forward.1} parent=103 // pred_check
          %p5398 = pneg %p394
        $region106: #{fsrcnn_forward.1} parent=103 // pred_check_branch
          %5400 = sbr.rel (%p5398) target = $region108
        $region107: #{fsrcnn_forward.1} parent=103 // pred_region
          %p5401 = scmp.lt.s32.totalorder %s30, 1
          %s5402 = scalar_select %p5401, %s30, 1
          %s5403 = smul.addr %s5402, 18
          %s5404 = smul.addr %s5403, 8
          %s5405 = scalar_lea.vmem %s16, %s5404
        $region108: #{fsrcnn_forward.1} parent=103 // pred_fallthru
          _
      $region104: #{fsrcnn_forward.1} parent=5 // pred_fallthru
        _
    $region6: #{fsrcnn_forward.1} parent=1 // loop_footer
      %s28 = sadd.s32 1, %s24
    $region7: #{fsrcnn_forward.1} parent=1 // loop_footer_branch
      %23 = sbr.rel target = $region3
    $region8: #{fsrcnn_forward.1} parent=1 // loop_exit
      _
    %5406 = vsyncpa [#allocation5], 1
    %s5407 = scalar_lea.sflag [#allocation5], 1
    %5408 = vsyncpa %s5407, 1
    %5409 = vsyncpa [#allocation7], 1

</llo_original>
